<compile_context>
chip_gen: v7x
topology: tpu7x:2x2x1
jax: 0.10.0
libtpu: 0.0.40
codegen_flags: <defaults>
</compile_context>

<pallas_src>
import jax
import jax.numpy as jnp
from jax import lax
from jax.experimental import pallas as pl
from jax.experimental.pallas import tpu as pltpu

# ---------------- config (small, consistent with the module) ----------------
VOCAB = 49408          # hardcoded in nn.Embedding(49408, width)
CTX = 77               # positional_embedding is (77, width)
TPAD = 80              # 77 padded to a sublane multiple; pad rows are inert
WIDTH = 32
LAYERS = 2
HEADS = 4
HEAD_DIM = WIDTH // HEADS
MLP = int(WIDTH * 4.0)
STYLE_DIM = 64
BATCH = 2
LN_EPS = 1e-5

BD = BATCH * WIDTH          # 64: batch folded into the lane axis
QKV_W = 5 * BD              # columns: q | k | v | k_swapped | v_swapped
VEC_W = max(QKV_W, BATCH * MLP)   # 320-lane bias / LN-affine slab

assert TPAD % 8 == 0 and WIDTH % HEADS == 0
assert BATCH == 2   # 2-way attention over batch -> sigmoid softmax + lane swap
                    # folded into the packed QKV weights (general path omitted)


# ------------------------------ Pallas kernel --------------------------------
def fused_encoder_kernel(eot_ref,     # [BATCH] int32 (SMEM, scalar prefetch)
                         x_ref,       # [TPAD, BD]   token emb (lane-folded)
                         pos_ref,     # [TPAD, BD]   pos emb (tiled, padded)
                         wqkv_ref,    # [L, BD, 5*BD]
                         wo_ref,      # [L, BD, BD]
                         wfc_ref,     # [L, BD, BATCH*MLP]
                         wpr_ref,     # [L, BATCH*MLP, BD]
                         vecs_ref,    # [L, 8, VEC_W] biases / LN affine
                         mseg_ref,    # [BD, BD] per-batch-segment mean matrix
                         hsum_ref,    # [BD, BD] per-head segmented-sum matrix
                         lnf_ref,     # [2, WIDTH] ln_final (w, b)
                         proj_ref,    # [WIDTH, STYLE_DIM]
                         o_ref):      # [BATCH, STYLE_DIM]
    D = WIDTH
    mseg = mseg_ref[...]
    hsum = hsum_ref[...]

    def seg_ln(v, w, b):
        # LayerNorm over each batch's D-lane segment: one MXU dot gives both
        # the segment mean and E[x^2] (stacked along sublanes).
        sums = jnp.dot(jnp.concatenate([v, v * v], axis=0), mseg,
                       preferred_element_type=jnp.float32)
        mu, ex2 = sums[:TPAD], sums[TPAD:]
        var = ex2 - mu * mu
        return (v - mu) * lax.rsqrt(var + LN_EPS) * w + b

    x = x_ref[...] + pos_ref[...]                    # [TPAD, BD] f32

    for l in range(LAYERS):                          # unrolled (LAYERS == 2)
        vecs = vecs_ref[l]                           # [8, VEC_W]
        ln1_w, ln1_b = vecs[0, :BD], vecs[1, :BD]
        b_qkv = vecs[2, :QKV_W]
        b_o = vecs[3, :BD]
        ln2_w, ln2_b = vecs[4, :BD], vecs[5, :BD]
        b_fc = vecs[6, :BATCH * MLP]
        b_pr = vecs[7, :BD]

        # --- pre-LN multi-head self-attention over the batch axis ---
        xn = seg_ln(x, ln1_w, ln1_b)
        qkv = jnp.dot(xn, wqkv_ref[l],
                      preferred_element_type=jnp.float32) + b_qkv
        q = qkv[:, 0 * BD:1 * BD]       # 1/sqrt(head_dim) folded at pack time
        k = qkv[:, 1 * BD:2 * BD]       # own-batch keys
        v = qkv[:, 2 * BD:3 * BD]       # own-batch values
        k_sw = qkv[:, 3 * BD:4 * BD]    # other batch's keys (swap in weights)
        v_sw = qkv[:, 4 * BD:5 * BD]    # other batch's values
        # per-head scores for (own, other) keys: one segmented-sum matmul
        prods = jnp.concatenate([q * k, q * k_sw], axis=0)       # [2*TPAD, BD]
        scores = jnp.dot(prods, hsum, preferred_element_type=jnp.float32)
        # softmax over exactly 2 keys == sigmoid of the score difference
        p_own = 1.0 / (1.0 + jnp.exp(scores[TPAD:] - scores[:TPAD]))
        attn = p_own * v + (1.0 - p_own) * v_sw                  # [TPAD, BD]
        x = x + jnp.dot(attn, wo_ref[l],
                        preferred_element_type=jnp.float32) + b_o

        # --- pre-LN MLP: Linear -> exact GELU -> Linear ---
        xn2 = seg_ln(x, ln2_w, ln2_b)
        h = jnp.dot(xn2, wfc_ref[l],
                    preferred_element_type=jnp.float32) + b_fc
        h = 0.5 * h * (1.0 + lax.erf(h * (2.0 ** -0.5)))          # exact GELU
        x = x + jnp.dot(h, wpr_ref[l],
                        preferred_element_type=jnp.float32) + b_pr

    # --- EOT pooling as a one-hot matmul (no scratch, no dynamic slices) ---
    t_iota = lax.broadcasted_iota(jnp.int32, (BATCH, TPAD), 1)
    b_iota = lax.broadcasted_iota(jnp.int32, (BATCH, TPAD), 0)
    onehot = jnp.zeros((BATCH, TPAD), jnp.float32)
    for b in range(BATCH):
        onehot = onehot + jnp.where((b_iota == b) & (t_iota == eot_ref[b]),
                                    1.0, 0.0)
    pooled_bd = jnp.dot(onehot, x,
                        preferred_element_type=jnp.float32)      # [BATCH, BD]
    # row b keeps its own batch's D-lane segment
    row = lax.broadcasted_iota(jnp.int32, (BATCH, D), 0)
    pooled = pooled_bd[:, :D]
    for b in range(1, BATCH):
        pooled = jnp.where(row == b, pooled_bd[:, b * D:(b + 1) * D], pooled)
    # ln_final + text projection
    mu = jnp.mean(pooled, axis=-1, keepdims=True)
    var = jnp.mean(jnp.square(pooled - mu), axis=-1, keepdims=True)
    pooled = (pooled - mu) * lax.rsqrt(var + LN_EPS) * lnf_ref[0, :] \
        + lnf_ref[1, :]
    o_ref[...] = jnp.dot(pooled, proj_ref[...],
                         preferred_element_type=jnp.float32)


# ----------------------------- pallas_call wrapper ----------------------------
def _full_spec(arr):
    nd = arr.ndim
    return pl.BlockSpec(arr.shape, lambda i, *_: (0,) * nd)


@jax.jit
def text_encoder_forward(text, packed):
    B, T = text.shape
    assert B == BATCH and T == CTX
    # Only the data-dependent 49408-row gather, the lane fold and the argmax
    # stay in XLA; everything else runs inside the fused kernel.
    x = jnp.take(packed['token_embedding'], text, axis=0)         # [B, CTX, D]
    x = jnp.transpose(x, (1, 0, 2)).reshape(CTX, BD)              # [CTX, BD]
    x = jnp.pad(x, ((0, TPAD - CTX), (0, 0)))                     # [TPAD, BD]
    eot = jnp.argmax(text, axis=-1).astype(jnp.int32)             # [B]

    tensors = (x, packed['pos'], packed['wqkv'], packed['wo'], packed['wfc'],
               packed['wpr'], packed['vecs'], packed['mseg'],
               packed['head_sum'], packed['ln_final'],
               packed['text_projection'])
    return pl.pallas_call(
        fused_encoder_kernel,
        out_shape=jax.ShapeDtypeStruct((B, STYLE_DIM), jnp.float32),
        grid_spec=pltpu.PrefetchScalarGridSpec(
            num_scalar_prefetch=1,
            grid=(1,),
            in_specs=[_full_spec(a) for a in tensors],
            out_specs=pl.BlockSpec((B, STYLE_DIM), lambda i, *_: (0, 0)),
        ),
        compiler_params=pltpu.CompilerParams(
            dimension_semantics=("arbitrary",)),
        cost_estimate=pl.CostEstimate(flops=24_000_000,
                                      transcendentals=80_000,
                                      bytes_accessed=600_000),
    )(eot, *tensors)


# ------------------------- parameter packing for the kernel -------------------
def pack_params(params):
    D = WIDTH
    scale = 1.0 / (HEAD_DIM ** 0.5)

    def bdiag(m):      # [in, out] -> 2x block-diagonal [2*in, 2*out]
        z = jnp.zeros_like(m)
        return jnp.concatenate([jnp.concatenate([m, z], axis=1),
                                jnp.concatenate([z, m], axis=1)], axis=0)

    def adiag(m):      # [in, out] -> anti-block-diagonal (cross-batch swap)
        z = jnp.zeros_like(m)
        return jnp.concatenate([jnp.concatenate([z, m], axis=1),
                                jnp.concatenate([m, z], axis=1)], axis=0)

    def tile2(v):
        v = v.reshape(-1)
        return jnp.concatenate([v, v], axis=0)

    def padw(v):
        v = v.reshape(-1)
        return jnp.pad(v, (0, VEC_W - v.shape[0]))

    wqkv, wo, wfc, wpr, vecs = [], [], [], [], []
    for lp in params['layers']:
        wq_t = lp['wq'].T * scale        # fold 1/sqrt(head_dim) into wq
        wk_t, wv_t = lp['wk'].T, lp['wv'].T
        wqkv.append(jnp.concatenate(
            [bdiag(wq_t), bdiag(wk_t), bdiag(wv_t),
             adiag(wk_t), adiag(wv_t)], axis=1))                  # [BD, 5*BD]
        wo.append(bdiag(lp['wo'].T))                              # [BD, BD]
        wfc.append(bdiag(lp['wfc'].T))                            # [BD, B*MLP]
        wpr.append(bdiag(lp['wpr'].T))                            # [B*MLP, BD]
        b_qkv = jnp.concatenate([tile2(lp['bq'][0] * scale),
                                 tile2(lp['bk'][0]), tile2(lp['bv'][0]),
                                 tile2(lp['bk'][0]), tile2(lp['bv'][0])])
        vecs.append(jnp.stack([
            padw(tile2(lp['ln1_w'][0])), padw(tile2(lp['ln1_b'][0])),
            padw(b_qkv),
            padw(tile2(lp['bo'][0])),
            padw(tile2(lp['ln2_w'][0])), padw(tile2(lp['ln2_b'][0])),
            padw(tile2(lp['bfc'][0])), padw(tile2(lp['bpr'][0])),
        ]))                                                       # [8, VEC_W]

    seg = jnp.arange(BD) // D
    mseg = (seg[:, None] == seg[None, :]).astype(jnp.float32) / D
    head = jnp.arange(BD) // HEAD_DIM
    head_sum = (head[:, None] == head[None, :]).astype(jnp.float32)

    pos = jnp.tile(params['positional_embedding'], (1, BATCH))    # [CTX, BD]
    pos = jnp.pad(pos, ((0, TPAD - CTX), (0, 0)))                 # [TPAD, BD]

    return {
        'token_embedding': params['token_embedding'],
        'pos': pos,
        'wqkv': jnp.stack(wqkv),                                  # [L, BD, 320]
        'wo': jnp.stack(wo),                                      # [L, BD, BD]
        'wfc': jnp.stack(wfc),                                    # [L, BD, 256]
        'wpr': jnp.stack(wpr),                                    # [L, 256, BD]
        'vecs': jnp.stack(vecs),                                  # [L, 8, 320]
        'mseg': mseg,                                             # [BD, BD]
        'head_sum': head_sum,                                     # [BD, BD]
        'ln_final': jnp.concatenate([params['ln_final_w'],
                                     params['ln_final_b']], axis=0),  # [2, D]
        'text_projection': params['text_projection'],             # [D, STYLE]
    }


# ----------------------------- deterministic init -----------------------------
def _normal(key, shape, std):
    return std * jax.random.normal(key, shape, dtype=jnp.float32)


def init_params(key):
    proj_std = (WIDTH ** -0.5) * ((2 * LAYERS) ** -0.5)
    attn_std = WIDTH ** -0.5
    fc_std = (2 * WIDTH) ** -0.5

    key, k_tok, k_pos, k_proj = jax.random.split(key, 4)
    params = {
        'token_embedding': _normal(k_tok, (VOCAB, WIDTH), 0.02),
        'positional_embedding': _normal(k_pos, (CTX, WIDTH), 0.01),
        'ln_final_w': jnp.ones((1, WIDTH), jnp.float32),
        'ln_final_b': jnp.zeros((1, WIDTH), jnp.float32),
        'text_projection': _normal(k_proj, (WIDTH, STYLE_DIM), WIDTH ** -0.5),
        'layers': [],
    }
    for _ in range(LAYERS):
        key, ka, ko, kf, kp = jax.random.split(key, 5)
        in_proj = _normal(ka, (3 * WIDTH, WIDTH), attn_std)
        lp = {
            'ln1_w': jnp.ones((1, WIDTH), jnp.float32),
            'ln1_b': jnp.zeros((1, WIDTH), jnp.float32),
            'wq': in_proj[:WIDTH],
            'wk': in_proj[WIDTH:2 * WIDTH],
            'wv': in_proj[2 * WIDTH:],
            'bq': jnp.zeros((1, WIDTH), jnp.float32),
            'bk': jnp.zeros((1, WIDTH), jnp.float32),
            'bv': jnp.zeros((1, WIDTH), jnp.float32),
            'wo': _normal(ko, (WIDTH, WIDTH), proj_std),
            'bo': jnp.zeros((1, WIDTH), jnp.float32),
            'ln2_w': jnp.ones((1, WIDTH), jnp.float32),
            'ln2_b': jnp.zeros((1, WIDTH), jnp.float32),
            'wfc': _normal(kf, (MLP, WIDTH), fc_std),
            'bfc': jnp.zeros((1, MLP), jnp.float32),
            'wpr': _normal(kp, (WIDTH, MLP), proj_std),
            'bpr': jnp.zeros((1, WIDTH), jnp.float32),
        }
        params['layers'].append(lp)
    return params


# ------------------------------ pure-JAX reference ----------------------------
def _ref_ln(v, w, b):
    mu = v.mean(-1, keepdims=True)
    var = ((v - mu) ** 2).mean(-1, keepdims=True)
    return (v - mu) / jnp.sqrt(var + LN_EPS) * w[0] + b[0]


def _ref_resblock(x, p):
    L, N, D = x.shape
    Hd = D // HEADS
    xn = _ref_ln(x, p['ln1_w'], p['ln1_b'])
    q = (xn @ p['wq'].T + p['bq'][0]).reshape(L, N, HEADS, Hd)
    k = (xn @ p['wk'].T + p['bk'][0]).reshape(L, N, HEADS, Hd)
    v = (xn @ p['wv'].T + p['bv'][0]).reshape(L, N, HEADS, Hd)
    s = jnp.einsum('bnhd,bmhd->bhnm', q, k) / jnp.sqrt(jnp.float32(Hd))
    pm = jax.nn.softmax(s, axis=-1)
    a = jnp.einsum('bhnm,bmhd->bnhd', pm, v).reshape(L, N, D)
    x = x + (a @ p['wo'].T + p['bo'][0])
    xn2 = _ref_ln(x, p['ln2_w'], p['ln2_b'])
    h = xn2 @ p['wfc'].T + p['bfc'][0]
    h = 0.5 * h * (1.0 + lax.erf(h / jnp.sqrt(2.0)))
    return x + (h @ p['wpr'].T + p['bpr'][0])


def reference_forward(text, params):
    x = jnp.take(params['token_embedding'], text, axis=0)
    x = x + params['positional_embedding'][None]
    x = jnp.transpose(x, (1, 0, 2))
    for lp in params['layers']:
        x = _ref_resblock(x, lp)
    x = jnp.transpose(x, (1, 0, 2))
    x = _ref_ln(x, params['ln_final_w'], params['ln_final_b'])
    eot = jnp.argmax(text, axis=-1)
    pooled = x[jnp.arange(text.shape[0]), eot]
    return pooled @ params['text_projection']


# ----------------------------------- main -------------------------------------
if __name__ == "__main__":
    root = jax.random.PRNGKey(0)
    k_params, k_text = jax.random.split(root)
    params = init_params(k_params)
    packed = pack_params(params)
    text = jax.random.randint(k_text, (BATCH, CTX), 0, VOCAB, dtype=jnp.int32)

    out = text_encoder_forward(text, packed)             # [BATCH, STYLE_DIM]
    jax.block_until_ready(out)

    ref = reference_forward(text, params)
    assert out.shape == (BATCH, STYLE_DIM), out.shape
    assert jnp.allclose(out, ref, atol=2e-3, rtol=2e-3), (
        float(jnp.max(jnp.abs(out - ref))))

    print("KERNEL_OK")
</pallas_src>

<mosaic_0001>
module attributes {stable_mosaic.version = 11 : i64} {
  func.func @fused_encoder_kernel(%arg0: i32, %arg1: memref<2xi32, #tpu.memory_space<smem>>, %arg2: memref<80x64xf32, #tpu.memory_space<vmem>>, %arg3: memref<80x64xf32, #tpu.memory_space<vmem>>, %arg4: memref<2x64x320xf32, #tpu.memory_space<vmem>>, %arg5: memref<2x64x64xf32, #tpu.memory_space<vmem>>, %arg6: memref<2x64x256xf32, #tpu.memory_space<vmem>>, %arg7: memref<2x256x64xf32, #tpu.memory_space<vmem>>, %arg8: memref<2x8x320xf32, #tpu.memory_space<vmem>>, %arg9: memref<64x64xf32, #tpu.memory_space<vmem>>, %arg10: memref<64x64xf32, #tpu.memory_space<vmem>>, %arg11: memref<2x32xf32, #tpu.memory_space<vmem>>, %arg12: memref<32x64xf32, #tpu.memory_space<vmem>>, %arg13: memref<2x64xf32, #tpu.memory_space<vmem>>) attributes {dimension_semantics = [#tpu.dimension_semantics<arbitrary>], iteration_bounds = array<i64: 1>, scalar_prefetch = 1 : i64, scratch_operands = 0 : i64, tpu.core_type = #tpu.core_type<tc>, window_params = [{pipeline_mode = #tpu.pipeline_mode<synchronous>, transform_indices = @transform_0, window_bounds = array<i64: 80, 64>}, {pipeline_mode = #tpu.pipeline_mode<synchronous>, transform_indices = @transform_1, window_bounds = array<i64: 80, 64>}, {pipeline_mode = #tpu.pipeline_mode<synchronous>, transform_indices = @transform_2, window_bounds = array<i64: 2, 64, 320>}, {pipeline_mode = #tpu.pipeline_mode<synchronous>, transform_indices = @transform_3, window_bounds = array<i64: 2, 64, 64>}, {pipeline_mode = #tpu.pipeline_mode<synchronous>, transform_indices = @transform_4, window_bounds = array<i64: 2, 64, 256>}, {pipeline_mode = #tpu.pipeline_mode<synchronous>, transform_indices = @transform_5, window_bounds = array<i64: 2, 256, 64>}, {pipeline_mode = #tpu.pipeline_mode<synchronous>, transform_indices = @transform_6, window_bounds = array<i64: 2, 8, 320>}, {pipeline_mode = #tpu.pipeline_mode<synchronous>, transform_indices = @transform_7, window_bounds = array<i64: 64, 64>}, {pipeline_mode = #tpu.pipeline_mode<synchronous>, transform_indices = @transform_8, window_bounds = array<i64: 64, 64>}, {pipeline_mode = #tpu.pipeline_mode<synchronous>, transform_indices = @transform_9, window_bounds = array<i64: 2, 32>}, {pipeline_mode = #tpu.pipeline_mode<synchronous>, transform_indices = @transform_10, window_bounds = array<i64: 32, 64>}, {pipeline_mode = #tpu.pipeline_mode<synchronous>, transform_indices = @transform_11, window_bounds = array<i64: 2, 64>}]} {
    %c0 = arith.constant 0 : index
    %c0_0 = arith.constant 0 : index
    %0 = vector.load %arg9[%c0, %c0_0] : memref<64x64xf32, #tpu.memory_space<vmem>>, vector<64x64xf32>
    %c0_1 = arith.constant 0 : index
    %c0_2 = arith.constant 0 : index
    %1 = vector.load %arg10[%c0_1, %c0_2] : memref<64x64xf32, #tpu.memory_space<vmem>>, vector<64x64xf32>
    %c0_3 = arith.constant 0 : index
    %c0_4 = arith.constant 0 : index
    %2 = vector.load %arg2[%c0_3, %c0_4] : memref<80x64xf32, #tpu.memory_space<vmem>>, vector<80x64xf32>
    %c0_5 = arith.constant 0 : index
    %c0_6 = arith.constant 0 : index
    %3 = vector.load %arg3[%c0_5, %c0_6] : memref<80x64xf32, #tpu.memory_space<vmem>>, vector<80x64xf32>
    %4 = arith.addf %2, %3 : vector<80x64xf32>
    %c0_7 = arith.constant 0 : index
    %c0_8 = arith.constant 0 : index
    %c0_9 = arith.constant 0 : index
    %5 = vector.load %arg8[%c0_7, %c0_8, %c0_9] : memref<2x8x320xf32, #tpu.memory_space<vmem>>, vector<1x8x320xf32>
    %6 = vector.shape_cast %5 : vector<1x8x320xf32> to vector<8x320xf32>
    %7 = vector.extract_strided_slice %6 {offsets = [0, 0], sizes = [1, 64], strides = [1, 1]} : vector<8x320xf32> to vector<1x64xf32>
    %8 = vector.shape_cast %7 : vector<1x64xf32> to vector<64xf32>
    %9 = vector.extract_strided_slice %6 {offsets = [1, 0], sizes = [1, 64], strides = [1, 1]} : vector<8x320xf32> to vector<1x64xf32>
    %10 = vector.shape_cast %9 : vector<1x64xf32> to vector<64xf32>
    %11 = vector.extract_strided_slice %6 {offsets = [2, 0], sizes = [1, 320], strides = [1, 1]} : vector<8x320xf32> to vector<1x320xf32>
    %12 = vector.shape_cast %11 : vector<1x320xf32> to vector<320xf32>
    %13 = vector.extract_strided_slice %6 {offsets = [3, 0], sizes = [1, 64], strides = [1, 1]} : vector<8x320xf32> to vector<1x64xf32>
    %14 = vector.shape_cast %13 : vector<1x64xf32> to vector<64xf32>
    %15 = vector.extract_strided_slice %6 {offsets = [4, 0], sizes = [1, 64], strides = [1, 1]} : vector<8x320xf32> to vector<1x64xf32>
    %16 = vector.shape_cast %15 : vector<1x64xf32> to vector<64xf32>
    %17 = vector.extract_strided_slice %6 {offsets = [5, 0], sizes = [1, 64], strides = [1, 1]} : vector<8x320xf32> to vector<1x64xf32>
    %18 = vector.shape_cast %17 : vector<1x64xf32> to vector<64xf32>
    %19 = vector.extract_strided_slice %6 {offsets = [6, 0], sizes = [1, 256], strides = [1, 1]} : vector<8x320xf32> to vector<1x256xf32>
    %20 = vector.shape_cast %19 : vector<1x256xf32> to vector<256xf32>
    %21 = vector.extract_strided_slice %6 {offsets = [7, 0], sizes = [1, 64], strides = [1, 1]} : vector<8x320xf32> to vector<1x64xf32>
    %22 = vector.shape_cast %21 : vector<1x64xf32> to vector<64xf32>
    %23 = arith.mulf %4, %4 : vector<80x64xf32>
    %24 = tpu.concatenate %4, %23 in 0 : vector<80x64xf32>, vector<80x64xf32> -> vector<160x64xf32>
    %cst = arith.constant dense<0.000000e+00> : vector<160x64xf32>
    %25 = tpu.matmul %24, %0, %cst {dimension_numbers = #tpu.dot_dimension_numbers<[1], [0], [0], [1], [0, 0, 1, 1], [], []>} : vector<160x64xf32>, vector<64x64xf32>, vector<160x64xf32> -> vector<160x64xf32>
    %26 = vector.extract_strided_slice %25 {offsets = [0, 0], sizes = [80, 64], strides = [1, 1]} : vector<160x64xf32> to vector<80x64xf32>
    %27 = vector.extract_strided_slice %25 {offsets = [80, 0], sizes = [80, 64], strides = [1, 1]} : vector<160x64xf32> to vector<80x64xf32>
    %28 = arith.mulf %26, %26 : vector<80x64xf32>
    %29 = arith.subf %27, %28 : vector<80x64xf32>
    %30 = arith.subf %4, %26 : vector<80x64xf32>
    %cst_10 = arith.constant 9.99999974E-6 : f32
    %31 = vector.broadcast %cst_10 : f32 to vector<80x64xf32>
    %32 = arith.addf %29, %31 : vector<80x64xf32>
    %33 = math.rsqrt %32 : vector<80x64xf32>
    %34 = arith.mulf %30, %33 : vector<80x64xf32>
    %35 = vector.shape_cast %8 : vector<64xf32> to vector<1x64xf32>
    %36 = vector.broadcast %35 : vector<1x64xf32> to vector<80x64xf32>
    %37 = arith.mulf %34, %36 : vector<80x64xf32>
    %38 = vector.shape_cast %10 : vector<64xf32> to vector<1x64xf32>
    %39 = vector.broadcast %38 : vector<1x64xf32> to vector<80x64xf32>
    %40 = arith.addf %37, %39 : vector<80x64xf32>
    %c0_11 = arith.constant 0 : index
    %c0_12 = arith.constant 0 : index
    %c0_13 = arith.constant 0 : index
    %41 = vector.load %arg4[%c0_11, %c0_12, %c0_13] : memref<2x64x320xf32, #tpu.memory_space<vmem>>, vector<1x64x320xf32>
    %42 = vector.shape_cast %41 : vector<1x64x320xf32> to vector<64x320xf32>
    %cst_14 = arith.constant dense<0.000000e+00> : vector<80x320xf32>
    %43 = tpu.matmul %40, %42, %cst_14 {dimension_numbers = #tpu.dot_dimension_numbers<[1], [0], [0], [1], [0, 0, 1, 1], [], []>} : vector<80x64xf32>, vector<64x320xf32>, vector<80x320xf32> -> vector<80x320xf32>
    %44 = vector.shape_cast %12 : vector<320xf32> to vector<1x320xf32>
    %45 = vector.broadcast %44 : vector<1x320xf32> to vector<80x320xf32>
    %46 = arith.addf %43, %45 : vector<80x320xf32>
    %47 = vector.extract_strided_slice %46 {offsets = [0, 0], sizes = [80, 64], strides = [1, 1]} : vector<80x320xf32> to vector<80x64xf32>
    %48 = vector.extract_strided_slice %46 {offsets = [0, 64], sizes = [80, 64], strides = [1, 1]} : vector<80x320xf32> to vector<80x64xf32>
    %49 = vector.extract_strided_slice %46 {offsets = [0, 128], sizes = [80, 64], strides = [1, 1]} : vector<80x320xf32> to vector<80x64xf32>
    %50 = vector.extract_strided_slice %46 {offsets = [0, 192], sizes = [80, 64], strides = [1, 1]} : vector<80x320xf32> to vector<80x64xf32>
    %51 = vector.extract_strided_slice %46 {offsets = [0, 256], sizes = [80, 64], strides = [1, 1]} : vector<80x320xf32> to vector<80x64xf32>
    %52 = arith.mulf %47, %48 : vector<80x64xf32>
    %53 = arith.mulf %47, %50 : vector<80x64xf32>
    %54 = tpu.concatenate %52, %53 in 0 : vector<80x64xf32>, vector<80x64xf32> -> vector<160x64xf32>
    %cst_15 = arith.constant dense<0.000000e+00> : vector<160x64xf32>
    %55 = tpu.matmul %54, %1, %cst_15 {dimension_numbers = #tpu.dot_dimension_numbers<[1], [0], [0], [1], [0, 0, 1, 1], [], []>} : vector<160x64xf32>, vector<64x64xf32>, vector<160x64xf32> -> vector<160x64xf32>
    %56 = vector.extract_strided_slice %55 {offsets = [80, 0], sizes = [80, 64], strides = [1, 1]} : vector<160x64xf32> to vector<80x64xf32>
    %57 = vector.extract_strided_slice %55 {offsets = [0, 0], sizes = [80, 64], strides = [1, 1]} : vector<160x64xf32> to vector<80x64xf32>
    %58 = arith.subf %56, %57 : vector<80x64xf32>
    %59 = math.exp %58 : vector<80x64xf32>
    %cst_16 = arith.constant 1.000000e+00 : f32
    %60 = vector.broadcast %cst_16 : f32 to vector<80x64xf32>
    %61 = arith.addf %60, %59 : vector<80x64xf32>
    %cst_17 = arith.constant 1.000000e+00 : f32
    %62 = vector.broadcast %cst_17 : f32 to vector<80x64xf32>
    %63 = arith.divf %62, %61 : vector<80x64xf32>
    %64 = arith.mulf %63, %49 : vector<80x64xf32>
    %cst_18 = arith.constant 1.000000e+00 : f32
    %65 = vector.broadcast %cst_18 : f32 to vector<80x64xf32>
    %66 = arith.subf %65, %63 : vector<80x64xf32>
    %67 = arith.mulf %66, %51 : vector<80x64xf32>
    %68 = arith.addf %64, %67 : vector<80x64xf32>
    %c0_19 = arith.constant 0 : index
    %c0_20 = arith.constant 0 : index
    %c0_21 = arith.constant 0 : index
    %69 = vector.load %arg5[%c0_19, %c0_20, %c0_21] : memref<2x64x64xf32, #tpu.memory_space<vmem>>, vector<1x64x64xf32>
    %70 = vector.shape_cast %69 : vector<1x64x64xf32> to vector<64x64xf32>
    %cst_22 = arith.constant dense<0.000000e+00> : vector<80x64xf32>
    %71 = tpu.matmul %68, %70, %cst_22 {dimension_numbers = #tpu.dot_dimension_numbers<[1], [0], [0], [1], [0, 0, 1, 1], [], []>} : vector<80x64xf32>, vector<64x64xf32>, vector<80x64xf32> -> vector<80x64xf32>
    %72 = arith.addf %4, %71 : vector<80x64xf32>
    %73 = vector.shape_cast %14 : vector<64xf32> to vector<1x64xf32>
    %74 = vector.broadcast %73 : vector<1x64xf32> to vector<80x64xf32>
    %75 = arith.addf %72, %74 : vector<80x64xf32>
    %76 = arith.mulf %75, %75 : vector<80x64xf32>
    %77 = tpu.concatenate %75, %76 in 0 : vector<80x64xf32>, vector<80x64xf32> -> vector<160x64xf32>
    %cst_23 = arith.constant dense<0.000000e+00> : vector<160x64xf32>
    %78 = tpu.matmul %77, %0, %cst_23 {dimension_numbers = #tpu.dot_dimension_numbers<[1], [0], [0], [1], [0, 0, 1, 1], [], []>} : vector<160x64xf32>, vector<64x64xf32>, vector<160x64xf32> -> vector<160x64xf32>
    %79 = vector.extract_strided_slice %78 {offsets = [0, 0], sizes = [80, 64], strides = [1, 1]} : vector<160x64xf32> to vector<80x64xf32>
    %80 = vector.extract_strided_slice %78 {offsets = [80, 0], sizes = [80, 64], strides = [1, 1]} : vector<160x64xf32> to vector<80x64xf32>
    %81 = arith.mulf %79, %79 : vector<80x64xf32>
    %82 = arith.subf %80, %81 : vector<80x64xf32>
    %83 = arith.subf %75, %79 : vector<80x64xf32>
    %cst_24 = arith.constant 9.99999974E-6 : f32
    %84 = vector.broadcast %cst_24 : f32 to vector<80x64xf32>
    %85 = arith.addf %82, %84 : vector<80x64xf32>
    %86 = math.rsqrt %85 : vector<80x64xf32>
    %87 = arith.mulf %83, %86 : vector<80x64xf32>
    %88 = vector.shape_cast %16 : vector<64xf32> to vector<1x64xf32>
    %89 = vector.broadcast %88 : vector<1x64xf32> to vector<80x64xf32>
    %90 = arith.mulf %87, %89 : vector<80x64xf32>
    %91 = vector.shape_cast %18 : vector<64xf32> to vector<1x64xf32>
    %92 = vector.broadcast %91 : vector<1x64xf32> to vector<80x64xf32>
    %93 = arith.addf %90, %92 : vector<80x64xf32>
    %c0_25 = arith.constant 0 : index
    %c0_26 = arith.constant 0 : index
    %c0_27 = arith.constant 0 : index
    %94 = vector.load %arg6[%c0_25, %c0_26, %c0_27] : memref<2x64x256xf32, #tpu.memory_space<vmem>>, vector<1x64x256xf32>
    %95 = vector.shape_cast %94 : vector<1x64x256xf32> to vector<64x256xf32>
    %cst_28 = arith.constant dense<0.000000e+00> : vector<80x256xf32>
    %96 = tpu.matmul %93, %95, %cst_28 {dimension_numbers = #tpu.dot_dimension_numbers<[1], [0], [0], [1], [0, 0, 1, 1], [], []>} : vector<80x64xf32>, vector<64x256xf32>, vector<80x256xf32> -> vector<80x256xf32>
    %97 = vector.shape_cast %20 : vector<256xf32> to vector<1x256xf32>
    %98 = vector.broadcast %97 : vector<1x256xf32> to vector<80x256xf32>
    %99 = arith.addf %96, %98 : vector<80x256xf32>
    %cst_29 = arith.constant 5.000000e-01 : f32
    %100 = vector.broadcast %cst_29 : f32 to vector<80x256xf32>
    %101 = arith.mulf %100, %99 : vector<80x256xf32>
    %cst_30 = arith.constant 0.707106769 : f32
    %102 = vector.broadcast %cst_30 : f32 to vector<80x256xf32>
    %103 = arith.mulf %99, %102 : vector<80x256xf32>
    %104 = math.erf %103 : vector<80x256xf32>
    %cst_31 = arith.constant 1.000000e+00 : f32
    %105 = vector.broadcast %cst_31 : f32 to vector<80x256xf32>
    %106 = arith.addf %105, %104 : vector<80x256xf32>
    %107 = arith.mulf %101, %106 : vector<80x256xf32>
    %c0_32 = arith.constant 0 : index
    %c0_33 = arith.constant 0 : index
    %c0_34 = arith.constant 0 : index
    %108 = vector.load %arg7[%c0_32, %c0_33, %c0_34] : memref<2x256x64xf32, #tpu.memory_space<vmem>>, vector<1x256x64xf32>
    %109 = vector.shape_cast %108 : vector<1x256x64xf32> to vector<256x64xf32>
    %cst_35 = arith.constant dense<0.000000e+00> : vector<80x64xf32>
    %110 = tpu.matmul %107, %109, %cst_35 {dimension_numbers = #tpu.dot_dimension_numbers<[1], [0], [0], [1], [0, 0, 1, 1], [], []>} : vector<80x256xf32>, vector<256x64xf32>, vector<80x64xf32> -> vector<80x64xf32>
    %111 = arith.addf %75, %110 : vector<80x64xf32>
    %112 = vector.shape_cast %22 : vector<64xf32> to vector<1x64xf32>
    %113 = vector.broadcast %112 : vector<1x64xf32> to vector<80x64xf32>
    %114 = arith.addf %111, %113 : vector<80x64xf32>
    %c1 = arith.constant 1 : index
    %c0_36 = arith.constant 0 : index
    %c0_37 = arith.constant 0 : index
    %115 = vector.load %arg8[%c1, %c0_36, %c0_37] : memref<2x8x320xf32, #tpu.memory_space<vmem>>, vector<1x8x320xf32>
    %116 = vector.shape_cast %115 : vector<1x8x320xf32> to vector<8x320xf32>
    %117 = vector.extract_strided_slice %116 {offsets = [0, 0], sizes = [1, 64], strides = [1, 1]} : vector<8x320xf32> to vector<1x64xf32>
    %118 = vector.shape_cast %117 : vector<1x64xf32> to vector<64xf32>
    %119 = vector.extract_strided_slice %116 {offsets = [1, 0], sizes = [1, 64], strides = [1, 1]} : vector<8x320xf32> to vector<1x64xf32>
    %120 = vector.shape_cast %119 : vector<1x64xf32> to vector<64xf32>
    %121 = vector.extract_strided_slice %116 {offsets = [2, 0], sizes = [1, 320], strides = [1, 1]} : vector<8x320xf32> to vector<1x320xf32>
    %122 = vector.shape_cast %121 : vector<1x320xf32> to vector<320xf32>
    %123 = vector.extract_strided_slice %116 {offsets = [3, 0], sizes = [1, 64], strides = [1, 1]} : vector<8x320xf32> to vector<1x64xf32>
    %124 = vector.shape_cast %123 : vector<1x64xf32> to vector<64xf32>
    %125 = vector.extract_strided_slice %116 {offsets = [4, 0], sizes = [1, 64], strides = [1, 1]} : vector<8x320xf32> to vector<1x64xf32>
    %126 = vector.shape_cast %125 : vector<1x64xf32> to vector<64xf32>
    %127 = vector.extract_strided_slice %116 {offsets = [5, 0], sizes = [1, 64], strides = [1, 1]} : vector<8x320xf32> to vector<1x64xf32>
    %128 = vector.shape_cast %127 : vector<1x64xf32> to vector<64xf32>
    %129 = vector.extract_strided_slice %116 {offsets = [6, 0], sizes = [1, 256], strides = [1, 1]} : vector<8x320xf32> to vector<1x256xf32>
    %130 = vector.shape_cast %129 : vector<1x256xf32> to vector<256xf32>
    %131 = vector.extract_strided_slice %116 {offsets = [7, 0], sizes = [1, 64], strides = [1, 1]} : vector<8x320xf32> to vector<1x64xf32>
    %132 = vector.shape_cast %131 : vector<1x64xf32> to vector<64xf32>
    %133 = arith.mulf %114, %114 : vector<80x64xf32>
    %134 = tpu.concatenate %114, %133 in 0 : vector<80x64xf32>, vector<80x64xf32> -> vector<160x64xf32>
    %cst_38 = arith.constant dense<0.000000e+00> : vector<160x64xf32>
    %135 = tpu.matmul %134, %0, %cst_38 {dimension_numbers = #tpu.dot_dimension_numbers<[1], [0], [0], [1], [0, 0, 1, 1], [], []>} : vector<160x64xf32>, vector<64x64xf32>, vector<160x64xf32> -> vector<160x64xf32>
    %136 = vector.extract_strided_slice %135 {offsets = [0, 0], sizes = [80, 64], strides = [1, 1]} : vector<160x64xf32> to vector<80x64xf32>
    %137 = vector.extract_strided_slice %135 {offsets = [80, 0], sizes = [80, 64], strides = [1, 1]} : vector<160x64xf32> to vector<80x64xf32>
    %138 = arith.mulf %136, %136 : vector<80x64xf32>
    %139 = arith.subf %137, %138 : vector<80x64xf32>
    %140 = arith.subf %114, %136 : vector<80x64xf32>
    %cst_39 = arith.constant 9.99999974E-6 : f32
    %141 = vector.broadcast %cst_39 : f32 to vector<80x64xf32>
    %142 = arith.addf %139, %141 : vector<80x64xf32>
    %143 = math.rsqrt %142 : vector<80x64xf32>
    %144 = arith.mulf %140, %143 : vector<80x64xf32>
    %145 = vector.shape_cast %118 : vector<64xf32> to vector<1x64xf32>
    %146 = vector.broadcast %145 : vector<1x64xf32> to vector<80x64xf32>
    %147 = arith.mulf %144, %146 : vector<80x64xf32>
    %148 = vector.shape_cast %120 : vector<64xf32> to vector<1x64xf32>
    %149 = vector.broadcast %148 : vector<1x64xf32> to vector<80x64xf32>
    %150 = arith.addf %147, %149 : vector<80x64xf32>
    %c1_40 = arith.constant 1 : index
    %c0_41 = arith.constant 0 : index
    %c0_42 = arith.constant 0 : index
    %151 = vector.load %arg4[%c1_40, %c0_41, %c0_42] : memref<2x64x320xf32, #tpu.memory_space<vmem>>, vector<1x64x320xf32>
    %152 = vector.shape_cast %151 : vector<1x64x320xf32> to vector<64x320xf32>
    %cst_43 = arith.constant dense<0.000000e+00> : vector<80x320xf32>
    %153 = tpu.matmul %150, %152, %cst_43 {dimension_numbers = #tpu.dot_dimension_numbers<[1], [0], [0], [1], [0, 0, 1, 1], [], []>} : vector<80x64xf32>, vector<64x320xf32>, vector<80x320xf32> -> vector<80x320xf32>
    %154 = vector.shape_cast %122 : vector<320xf32> to vector<1x320xf32>
    %155 = vector.broadcast %154 : vector<1x320xf32> to vector<80x320xf32>
    %156 = arith.addf %153, %155 : vector<80x320xf32>
    %157 = vector.extract_strided_slice %156 {offsets = [0, 0], sizes = [80, 64], strides = [1, 1]} : vector<80x320xf32> to vector<80x64xf32>
    %158 = vector.extract_strided_slice %156 {offsets = [0, 64], sizes = [80, 64], strides = [1, 1]} : vector<80x320xf32> to vector<80x64xf32>
    %159 = vector.extract_strided_slice %156 {offsets = [0, 128], sizes = [80, 64], strides = [1, 1]} : vector<80x320xf32> to vector<80x64xf32>
    %160 = vector.extract_strided_slice %156 {offsets = [0, 192], sizes = [80, 64], strides = [1, 1]} : vector<80x320xf32> to vector<80x64xf32>
    %161 = vector.extract_strided_slice %156 {offsets = [0, 256], sizes = [80, 64], strides = [1, 1]} : vector<80x320xf32> to vector<80x64xf32>
    %162 = arith.mulf %157, %158 : vector<80x64xf32>
    %163 = arith.mulf %157, %160 : vector<80x64xf32>
    %164 = tpu.concatenate %162, %163 in 0 : vector<80x64xf32>, vector<80x64xf32> -> vector<160x64xf32>
    %cst_44 = arith.constant dense<0.000000e+00> : vector<160x64xf32>
    %165 = tpu.matmul %164, %1, %cst_44 {dimension_numbers = #tpu.dot_dimension_numbers<[1], [0], [0], [1], [0, 0, 1, 1], [], []>} : vector<160x64xf32>, vector<64x64xf32>, vector<160x64xf32> -> vector<160x64xf32>
    %166 = vector.extract_strided_slice %165 {offsets = [80, 0], sizes = [80, 64], strides = [1, 1]} : vector<160x64xf32> to vector<80x64xf32>
    %167 = vector.extract_strided_slice %165 {offsets = [0, 0], sizes = [80, 64], strides = [1, 1]} : vector<160x64xf32> to vector<80x64xf32>
    %168 = arith.subf %166, %167 : vector<80x64xf32>
    %169 = math.exp %168 : vector<80x64xf32>
    %cst_45 = arith.constant 1.000000e+00 : f32
    %170 = vector.broadcast %cst_45 : f32 to vector<80x64xf32>
    %171 = arith.addf %170, %169 : vector<80x64xf32>
    %cst_46 = arith.constant 1.000000e+00 : f32
    %172 = vector.broadcast %cst_46 : f32 to vector<80x64xf32>
    %173 = arith.divf %172, %171 : vector<80x64xf32>
    %174 = arith.mulf %173, %159 : vector<80x64xf32>
    %cst_47 = arith.constant 1.000000e+00 : f32
    %175 = vector.broadcast %cst_47 : f32 to vector<80x64xf32>
    %176 = arith.subf %175, %173 : vector<80x64xf32>
    %177 = arith.mulf %176, %161 : vector<80x64xf32>
    %178 = arith.addf %174, %177 : vector<80x64xf32>
    %c1_48 = arith.constant 1 : index
    %c0_49 = arith.constant 0 : index
    %c0_50 = arith.constant 0 : index
    %179 = vector.load %arg5[%c1_48, %c0_49, %c0_50] : memref<2x64x64xf32, #tpu.memory_space<vmem>>, vector<1x64x64xf32>
    %180 = vector.shape_cast %179 : vector<1x64x64xf32> to vector<64x64xf32>
    %cst_51 = arith.constant dense<0.000000e+00> : vector<80x64xf32>
    %181 = tpu.matmul %178, %180, %cst_51 {dimension_numbers = #tpu.dot_dimension_numbers<[1], [0], [0], [1], [0, 0, 1, 1], [], []>} : vector<80x64xf32>, vector<64x64xf32>, vector<80x64xf32> -> vector<80x64xf32>
    %182 = arith.addf %114, %181 : vector<80x64xf32>
    %183 = vector.shape_cast %124 : vector<64xf32> to vector<1x64xf32>
    %184 = vector.broadcast %183 : vector<1x64xf32> to vector<80x64xf32>
    %185 = arith.addf %182, %184 : vector<80x64xf32>
    %186 = arith.mulf %185, %185 : vector<80x64xf32>
    %187 = tpu.concatenate %185, %186 in 0 : vector<80x64xf32>, vector<80x64xf32> -> vector<160x64xf32>
    %cst_52 = arith.constant dense<0.000000e+00> : vector<160x64xf32>
    %188 = tpu.matmul %187, %0, %cst_52 {dimension_numbers = #tpu.dot_dimension_numbers<[1], [0], [0], [1], [0, 0, 1, 1], [], []>} : vector<160x64xf32>, vector<64x64xf32>, vector<160x64xf32> -> vector<160x64xf32>
    %189 = vector.extract_strided_slice %188 {offsets = [0, 0], sizes = [80, 64], strides = [1, 1]} : vector<160x64xf32> to vector<80x64xf32>
    %190 = vector.extract_strided_slice %188 {offsets = [80, 0], sizes = [80, 64], strides = [1, 1]} : vector<160x64xf32> to vector<80x64xf32>
    %191 = arith.mulf %189, %189 : vector<80x64xf32>
    %192 = arith.subf %190, %191 : vector<80x64xf32>
    %193 = arith.subf %185, %189 : vector<80x64xf32>
    %cst_53 = arith.constant 9.99999974E-6 : f32
    %194 = vector.broadcast %cst_53 : f32 to vector<80x64xf32>
    %195 = arith.addf %192, %194 : vector<80x64xf32>
    %196 = math.rsqrt %195 : vector<80x64xf32>
    %197 = arith.mulf %193, %196 : vector<80x64xf32>
    %198 = vector.shape_cast %126 : vector<64xf32> to vector<1x64xf32>
    %199 = vector.broadcast %198 : vector<1x64xf32> to vector<80x64xf32>
    %200 = arith.mulf %197, %199 : vector<80x64xf32>
    %201 = vector.shape_cast %128 : vector<64xf32> to vector<1x64xf32>
    %202 = vector.broadcast %201 : vector<1x64xf32> to vector<80x64xf32>
    %203 = arith.addf %200, %202 : vector<80x64xf32>
    %c1_54 = arith.constant 1 : index
    %c0_55 = arith.constant 0 : index
    %c0_56 = arith.constant 0 : index
    %204 = vector.load %arg6[%c1_54, %c0_55, %c0_56] : memref<2x64x256xf32, #tpu.memory_space<vmem>>, vector<1x64x256xf32>
    %205 = vector.shape_cast %204 : vector<1x64x256xf32> to vector<64x256xf32>
    %cst_57 = arith.constant dense<0.000000e+00> : vector<80x256xf32>
    %206 = tpu.matmul %203, %205, %cst_57 {dimension_numbers = #tpu.dot_dimension_numbers<[1], [0], [0], [1], [0, 0, 1, 1], [], []>} : vector<80x64xf32>, vector<64x256xf32>, vector<80x256xf32> -> vector<80x256xf32>
    %207 = vector.shape_cast %130 : vector<256xf32> to vector<1x256xf32>
    %208 = vector.broadcast %207 : vector<1x256xf32> to vector<80x256xf32>
    %209 = arith.addf %206, %208 : vector<80x256xf32>
    %cst_58 = arith.constant 5.000000e-01 : f32
    %210 = vector.broadcast %cst_58 : f32 to vector<80x256xf32>
    %211 = arith.mulf %210, %209 : vector<80x256xf32>
    %cst_59 = arith.constant 0.707106769 : f32
    %212 = vector.broadcast %cst_59 : f32 to vector<80x256xf32>
    %213 = arith.mulf %209, %212 : vector<80x256xf32>
    %214 = math.erf %213 : vector<80x256xf32>
    %cst_60 = arith.constant 1.000000e+00 : f32
    %215 = vector.broadcast %cst_60 : f32 to vector<80x256xf32>
    %216 = arith.addf %215, %214 : vector<80x256xf32>
    %217 = arith.mulf %211, %216 : vector<80x256xf32>
    %c1_61 = arith.constant 1 : index
    %c0_62 = arith.constant 0 : index
    %c0_63 = arith.constant 0 : index
    %218 = vector.load %arg7[%c1_61, %c0_62, %c0_63] : memref<2x256x64xf32, #tpu.memory_space<vmem>>, vector<1x256x64xf32>
    %219 = vector.shape_cast %218 : vector<1x256x64xf32> to vector<256x64xf32>
    %cst_64 = arith.constant dense<0.000000e+00> : vector<80x64xf32>
    %220 = tpu.matmul %217, %219, %cst_64 {dimension_numbers = #tpu.dot_dimension_numbers<[1], [0], [0], [1], [0, 0, 1, 1], [], []>} : vector<80x256xf32>, vector<256x64xf32>, vector<80x64xf32> -> vector<80x64xf32>
    %221 = arith.addf %185, %220 : vector<80x64xf32>
    %222 = vector.shape_cast %132 : vector<64xf32> to vector<1x64xf32>
    %223 = vector.broadcast %222 : vector<1x64xf32> to vector<80x64xf32>
    %224 = arith.addf %221, %223 : vector<80x64xf32>
    %225 = tpu.iota {dimensions = array<i32: 1>} : vector<2x80xi32>
    %226 = tpu.iota {dimensions = array<i32: 0>} : vector<2x80xi32>
    %cst_65 = arith.constant 0.000000e+00 : f32
    %227 = vector.broadcast %cst_65 : f32 to vector<2x80xf32>
    %c0_i32 = arith.constant 0 : i32
    %228 = vector.broadcast %c0_i32 : i32 to vector<2x80xi32>
    %229 = arith.cmpi eq, %226, %228 : vector<2x80xi32>
    %c0_66 = arith.constant 0 : index
    %230 = memref.load %arg1[%c0_66] : memref<2xi32, #tpu.memory_space<smem>>
    %231 = vector.broadcast %230 : i32 to vector<2x80xi32>
    %232 = arith.cmpi eq, %225, %231 : vector<2x80xi32>
    %233 = arith.andi %229, %232 : vector<2x80xi1>
    %cst_67 = arith.constant 1.000000e+00 : f32
    %cst_68 = arith.constant 0.000000e+00 : f32
    %234 = vector.broadcast %cst_67 : f32 to vector<2x80xf32>
    %235 = vector.broadcast %cst_68 : f32 to vector<2x80xf32>
    %236 = arith.select %233, %234, %235 : vector<2x80xi1>, vector<2x80xf32>
    %237 = arith.addf %227, %236 : vector<2x80xf32>
    %c1_i32 = arith.constant 1 : i32
    %238 = vector.broadcast %c1_i32 : i32 to vector<2x80xi32>
    %239 = arith.cmpi eq, %226, %238 : vector<2x80xi32>
    %c1_69 = arith.constant 1 : index
    %240 = memref.load %arg1[%c1_69] : memref<2xi32, #tpu.memory_space<smem>>
    %241 = vector.broadcast %240 : i32 to vector<2x80xi32>
    %242 = arith.cmpi eq, %225, %241 : vector<2x80xi32>
    %243 = arith.andi %239, %242 : vector<2x80xi1>
    %cst_70 = arith.constant 1.000000e+00 : f32
    %cst_71 = arith.constant 0.000000e+00 : f32
    %244 = vector.broadcast %cst_70 : f32 to vector<2x80xf32>
    %245 = vector.broadcast %cst_71 : f32 to vector<2x80xf32>
    %246 = arith.select %243, %244, %245 : vector<2x80xi1>, vector<2x80xf32>
    %247 = arith.addf %237, %246 : vector<2x80xf32>
    %cst_72 = arith.constant dense<0.000000e+00> : vector<2x64xf32>
    %248 = tpu.matmul %247, %224, %cst_72 {dimension_numbers = #tpu.dot_dimension_numbers<[1], [0], [0], [1], [0, 0, 1, 1], [], []>} : vector<2x80xf32>, vector<80x64xf32>, vector<2x64xf32> -> vector<2x64xf32>
    %249 = tpu.iota {dimensions = array<i32: 0>} : vector<2x32xi32>
    %250 = vector.extract_strided_slice %248 {offsets = [0, 0], sizes = [2, 32], strides = [1, 1]} : vector<2x64xf32> to vector<2x32xf32>
    %c1_i32_73 = arith.constant 1 : i32
    %251 = vector.broadcast %c1_i32_73 : i32 to vector<2x32xi32>
    %252 = arith.cmpi eq, %249, %251 : vector<2x32xi32>
    %253 = vector.extract_strided_slice %248 {offsets = [0, 32], sizes = [2, 32], strides = [1, 1]} : vector<2x64xf32> to vector<2x32xf32>
    %254 = arith.select %252, %253, %250 : vector<2x32xi1>, vector<2x32xf32>
    %cst_74 = arith.constant dense<0.000000e+00> : vector<2xf32>
    %255 = vector.multi_reduction <add>, %254, %cst_74 [1] : vector<2x32xf32> to vector<2xf32>
    %256 = vector.shape_cast %255 : vector<2xf32> to vector<2x1xf32>
    %cst_75 = arith.constant 3.200000e+01 : f32
    %257 = vector.broadcast %cst_75 : f32 to vector<2x1xf32>
    %258 = arith.divf %256, %257 : vector<2x1xf32>
    %259 = vector.broadcast %258 : vector<2x1xf32> to vector<2x32xf32>
    %260 = arith.subf %254, %259 : vector<2x32xf32>
    %261 = arith.mulf %260, %260 : vector<2x32xf32>
    %cst_76 = arith.constant dense<0.000000e+00> : vector<2xf32>
    %262 = vector.multi_reduction <add>, %261, %cst_76 [1] : vector<2x32xf32> to vector<2xf32>
    %263 = vector.shape_cast %262 : vector<2xf32> to vector<2x1xf32>
    %cst_77 = arith.constant 3.200000e+01 : f32
    %264 = vector.broadcast %cst_77 : f32 to vector<2x1xf32>
    %265 = arith.divf %263, %264 : vector<2x1xf32>
    %266 = vector.broadcast %258 : vector<2x1xf32> to vector<2x32xf32>
    %267 = arith.subf %254, %266 : vector<2x32xf32>
    %cst_78 = arith.constant 9.99999974E-6 : f32
    %268 = vector.broadcast %cst_78 : f32 to vector<2x1xf32>
    %269 = arith.addf %265, %268 : vector<2x1xf32>
    %270 = math.rsqrt %269 : vector<2x1xf32>
    %271 = vector.broadcast %270 : vector<2x1xf32> to vector<2x32xf32>
    %272 = arith.mulf %267, %271 : vector<2x32xf32>
    %c0_79 = arith.constant 0 : index
    %c0_80 = arith.constant 0 : index
    %273 = vector.load %arg11[%c0_79, %c0_80] : memref<2x32xf32, #tpu.memory_space<vmem>>, vector<1x32xf32>
    %274 = vector.shape_cast %273 : vector<1x32xf32> to vector<32xf32>
    %275 = vector.shape_cast %274 : vector<32xf32> to vector<1x32xf32>
    %276 = vector.broadcast %275 : vector<1x32xf32> to vector<2x32xf32>
    %277 = arith.mulf %272, %276 : vector<2x32xf32>
    %c1_81 = arith.constant 1 : index
    %c0_82 = arith.constant 0 : index
    %278 = vector.load %arg11[%c1_81, %c0_82] : memref<2x32xf32, #tpu.memory_space<vmem>>, vector<1x32xf32>
    %279 = vector.shape_cast %278 : vector<1x32xf32> to vector<32xf32>
    %280 = vector.shape_cast %279 : vector<32xf32> to vector<1x32xf32>
    %281 = vector.broadcast %280 : vector<1x32xf32> to vector<2x32xf32>
    %282 = arith.addf %277, %281 : vector<2x32xf32>
    %c0_83 = arith.constant 0 : index
    %c0_84 = arith.constant 0 : index
    %283 = vector.load %arg12[%c0_83, %c0_84] : memref<32x64xf32, #tpu.memory_space<vmem>>, vector<32x64xf32>
    %cst_85 = arith.constant dense<0.000000e+00> : vector<2x64xf32>
    %284 = tpu.matmul %282, %283, %cst_85 {dimension_numbers = #tpu.dot_dimension_numbers<[1], [0], [0], [1], [0, 0, 1, 1], [], []>} : vector<2x32xf32>, vector<32x64xf32>, vector<2x64xf32> -> vector<2x64xf32>
    %c0_86 = arith.constant 0 : index
    %c0_87 = arith.constant 0 : index
    %285 = vector.load %arg13[%c0_86, %c0_87] : memref<2x64xf32, #tpu.memory_space<vmem>>, vector<2x64xf32>
    tpu.vector_store %arg13[%c0_86, %c0_87], %284 {strides = array<i32>} : memref<2x64xf32, #tpu.memory_space<vmem>>, vector<2x64xf32>,
    return
  }
  func.func @transform_0(%arg0: i32, %arg1: memref<2xi32, #tpu.memory_space<smem>>) -> (i32, i32) {
    %c0_i32 = arith.constant 0 : i32
    %c0_i32_0 = arith.constant 0 : i32
    %c0_i32_1 = arith.constant 0 : i32
    return %c0_i32, %c0_i32_0 : i32, i32
  }
  func.func @transform_1(%arg0: i32, %arg1: memref<2xi32, #tpu.memory_space<smem>>) -> (i32, i32) {
    %c0_i32 = arith.constant 0 : i32
    %c0_i32_0 = arith.constant 0 : i32
    %c0_i32_1 = arith.constant 0 : i32
    return %c0_i32, %c0_i32_0 : i32, i32
  }
  func.func @transform_2(%arg0: i32, %arg1: memref<2xi32, #tpu.memory_space<smem>>) -> (i32, i32, i32) {
    %c0_i32 = arith.constant 0 : i32
    %c0_i32_0 = arith.constant 0 : i32
    %c0_i32_1 = arith.constant 0 : i32
    %c0_i32_2 = arith.constant 0 : i32
    return %c0_i32, %c0_i32_0, %c0_i32_1 : i32, i32, i32
  }
  func.func @transform_3(%arg0: i32, %arg1: memref<2xi32, #tpu.memory_space<smem>>) -> (i32, i32, i32) {
    %c0_i32 = arith.constant 0 : i32
    %c0_i32_0 = arith.constant 0 : i32
    %c0_i32_1 = arith.constant 0 : i32
    %c0_i32_2 = arith.constant 0 : i32
    return %c0_i32, %c0_i32_0, %c0_i32_1 : i32, i32, i32
  }
  func.func @transform_4(%arg0: i32, %arg1: memref<2xi32, #tpu.memory_space<smem>>) -> (i32, i32, i32) {
    %c0_i32 = arith.constant 0 : i32
    %c0_i32_0 = arith.constant 0 : i32
    %c0_i32_1 = arith.constant 0 : i32
    %c0_i32_2 = arith.constant 0 : i32
    return %c0_i32, %c0_i32_0, %c0_i32_1 : i32, i32, i32
  }
  func.func @transform_5(%arg0: i32, %arg1: memref<2xi32, #tpu.memory_space<smem>>) -> (i32, i32, i32) {
    %c0_i32 = arith.constant 0 : i32
    %c0_i32_0 = arith.constant 0 : i32
    %c0_i32_1 = arith.constant 0 : i32
    %c0_i32_2 = arith.constant 0 : i32
    return %c0_i32, %c0_i32_0, %c0_i32_1 : i32, i32, i32
  }
  func.func @transform_6(%arg0: i32, %arg1: memref<2xi32, #tpu.memory_space<smem>>) -> (i32, i32, i32) {
    %c0_i32 = arith.constant 0 : i32
    %c0_i32_0 = arith.constant 0 : i32
    %c0_i32_1 = arith.constant 0 : i32
    %c0_i32_2 = arith.constant 0 : i32
    return %c0_i32, %c0_i32_0, %c0_i32_1 : i32, i32, i32
  }
  func.func @transform_7(%arg0: i32, %arg1: memref<2xi32, #tpu.memory_space<smem>>) -> (i32, i32) {
    %c0_i32 = arith.constant 0 : i32
    %c0_i32_0 = arith.constant 0 : i32
    %c0_i32_1 = arith.constant 0 : i32
    return %c0_i32, %c0_i32_0 : i32, i32
  }
  func.func @transform_8(%arg0: i32, %arg1: memref<2xi32, #tpu.memory_space<smem>>) -> (i32, i32) {
    %c0_i32 = arith.constant 0 : i32
    %c0_i32_0 = arith.constant 0 : i32
    %c0_i32_1 = arith.constant 0 : i32
    return %c0_i32, %c0_i32_0 : i32, i32
  }
  func.func @transform_9(%arg0: i32, %arg1: memref<2xi32, #tpu.memory_space<smem>>) -> (i32, i32) {
    %c0_i32 = arith.constant 0 : i32
    %c0_i32_0 = arith.constant 0 : i32
    %c0_i32_1 = arith.constant 0 : i32
    return %c0_i32, %c0_i32_0 : i32, i32
  }
  func.func @transform_10(%arg0: i32, %arg1: memref<2xi32, #tpu.memory_space<smem>>) -> (i32, i32) {
    %c0_i32 = arith.constant 0 : i32
    %c0_i32_0 = arith.constant 0 : i32
    %c0_i32_1 = arith.constant 0 : i32
    return %c0_i32, %c0_i32_0 : i32, i32
  }
  func.func @transform_11(%arg0: i32, %arg1: memref<2xi32, #tpu.memory_space<smem>>) -> (i32, i32) {
    %c0_i32 = arith.constant 0 : i32
    %c0_i32_0 = arith.constant 0 : i32
    %c0_i32_1 = arith.constant 0 : i32
    return %c0_i32, %c0_i32_0 : i32, i32
  }
}

</mosaic_0001>

<llo_original>
// kernel: text_encoder_forward.1
$region0: #{text_encoder_forward.1}
  #allocation0 [shape = 'u32[]', space=smem, size = 0x4, offset = 0x4, fixed_abs, tag = 'smem constant byte address 0x4 - core index']
  #allocation1 [shape = 'u32[144,128]{1,0:T(1,128)}', space=vmem, size = 0x12000, scoped, tag = 'internal scratch']
  #allocation2 [shape = 's32[1]{0}', space=sflag, size = 0x4, scoped, tag = 'scoped memory for text_encoder_forward.1']
  #allocation3 [shape = 'u8[512]{0}', space=smem, size = 0x200, scoped, tag = 'prefetched SMEM operand 0']
  %s0 = inlined_call_operand.vmem [shape: s32[2], index: 0, kind: input, shape index: {}]
  %s1 = inlined_call_operand.vmem [shape: f32[80,64], index: 1, kind: input, shape index: {}]
  %s2 = inlined_call_operand.vmem [shape: f32[80,64], index: 2, kind: input, shape index: {}]
  %s3 = inlined_call_operand.vmem [shape: f32[2,64,320], index: 3, kind: input, shape index: {}]
  %s4 = inlined_call_operand.vmem [shape: f32[2,64,64], index: 4, kind: input, shape index: {}]
  %s5 = inlined_call_operand.vmem [shape: f32[2,64,256], index: 5, kind: input, shape index: {}]
  %s6 = inlined_call_operand.vmem [shape: f32[2,256,64], index: 6, kind: input, shape index: {}]
  %s7 = inlined_call_operand.vmem [shape: f32[2,8,320], index: 7, kind: input, shape index: {}]
  %s8 = inlined_call_operand.vmem [shape: f32[64,64], index: 8, kind: input, shape index: {}]
  %s9 = inlined_call_operand.vmem [shape: f32[64,64], index: 9, kind: input, shape index: {}]
  %s10 = inlined_call_operand.vmem [shape: f32[2,32], index: 10, kind: input, shape index: {}]
  %s11 = inlined_call_operand.vmem [shape: f32[32,64], index: 11, kind: input, shape index: {}]
  %s12 = inlined_call_operand.hbm [shape: f32[2,64], index: 12, kind: output, shape index: {}]
  %s13 = sld [smem:[#allocation0]]
  $region54: #{text_encoder_forward.1} parent=0
    _
  %s15 = ssub.s32 1, %s13
  %s16 = scalar_select 0, %s15, %s13
  %s17 = sshll.u32 %s0, 4
  %s18 = int_to_ptr.vmem [resolvable:$true] %s17
  %20 = dma.vmem_to_smem %s18, 16, [#allocation3], [#allocation2]
  %21 = dma.done [#allocation2], 16
  %22 = sfence
  $region1: #{text_encoder_forward.1} parent=0
    #allocation4 [shape = 'u8[1024]{0}', space=vmem, size = 0x400, scoped, tag = 'output window, operand 0, single buffered']
    #allocation5 [shape = 's32[1]{0}', space=sflag, size = 0x4, scoped, tag = 'scoped memory for text_encoder_forward.1']
    %23 = vsyncpa [#allocation5], 0
    // Predicated region
    $region2: #{text_encoder_forward.1} parent=1 // pred_check
      _
    $region3: #{text_encoder_forward.1} parent=1 // pred_check_branch
      %25 = sbr.rel (0) target = $region5
    $region4: #{text_encoder_forward.1} parent=1 // pred_region
      _
    $region5: #{text_encoder_forward.1} parent=1 // pred_fallthru
      _
    // Predicated region
    $region6: #{text_encoder_forward.1} parent=1 // pred_check
      _
    $region7: #{text_encoder_forward.1} parent=1 // pred_check_branch
      %27 = sbr.rel (0) target = $region9
    $region8: #{text_encoder_forward.1} parent=1 // pred_region
      _
    $region9: #{text_encoder_forward.1} parent=1 // pred_fallthru
      _
    // Predicated region
    $region10: #{text_encoder_forward.1} parent=1 // pred_check
      _
    $region11: #{text_encoder_forward.1} parent=1 // pred_check_branch
      %29 = sbr.rel (0) target = $region13
    $region12: #{text_encoder_forward.1} parent=1 // pred_region
      _
    $region13: #{text_encoder_forward.1} parent=1 // pred_fallthru
      _
    // Predicated region
    $region14: #{text_encoder_forward.1} parent=1 // pred_check
      _
    $region15: #{text_encoder_forward.1} parent=1 // pred_check_branch
      %31 = sbr.rel (0) target = $region17
    $region16: #{text_encoder_forward.1} parent=1 // pred_region
      _
    $region17: #{text_encoder_forward.1} parent=1 // pred_fallthru
      _
    // Predicated region
    $region18: #{text_encoder_forward.1} parent=1 // pred_check
      _
    $region19: #{text_encoder_forward.1} parent=1 // pred_check_branch
      %33 = sbr.rel (0) target = $region21
    $region20: #{text_encoder_forward.1} parent=1 // pred_region
      _
    $region21: #{text_encoder_forward.1} parent=1 // pred_fallthru
      _
    // Predicated region
    $region22: #{text_encoder_forward.1} parent=1 // pred_check
      _
    $region23: #{text_encoder_forward.1} parent=1 // pred_check_branch
      %35 = sbr.rel (0) target = $region25
    $region24: #{text_encoder_forward.1} parent=1 // pred_region
      _
    $region25: #{text_encoder_forward.1} parent=1 // pred_fallthru
      _
    // Predicated region
    $region26: #{text_encoder_forward.1} parent=1 // pred_check
      _
    $region27: #{text_encoder_forward.1} parent=1 // pred_check_branch
      %37 = sbr.rel (0) target = $region29
    $region28: #{text_encoder_forward.1} parent=1 // pred_region
      _
    $region29: #{text_encoder_forward.1} parent=1 // pred_fallthru
      _
    // Predicated region
    $region30: #{text_encoder_forward.1} parent=1 // pred_check
      _
    $region31: #{text_encoder_forward.1} parent=1 // pred_check_branch
      %39 = sbr.rel (0) target = $region33
    $region32: #{text_encoder_forward.1} parent=1 // pred_region
      _
    $region33: #{text_encoder_forward.1} parent=1 // pred_fallthru
      _
    // Predicated region
    $region34: #{text_encoder_forward.1} parent=1 // pred_check
      _
    $region35: #{text_encoder_forward.1} parent=1 // pred_check_branch
      %41 = sbr.rel (0) target = $region37
    $region36: #{text_encoder_forward.1} parent=1 // pred_region
      _
    $region37: #{text_encoder_forward.1} parent=1 // pred_fallthru
      _
    // Predicated region
    $region38: #{text_encoder_forward.1} parent=1 // pred_check
      _
    $region39: #{text_encoder_forward.1} parent=1 // pred_check_branch
      %43 = sbr.rel (0) target = $region41
    $region40: #{text_encoder_forward.1} parent=1 // pred_region
      _
    $region41: #{text_encoder_forward.1} parent=1 // pred_fallthru
      _
    // Predicated region
    $region42: #{text_encoder_forward.1} parent=1 // pred_check
      _
    $region43: #{text_encoder_forward.1} parent=1 // pred_check_branch
      %45 = sbr.rel (0) target = $region45
    $region44: #{text_encoder_forward.1} parent=1 // pred_region
      _
    $region45: #{text_encoder_forward.1} parent=1 // pred_fallthru
      _
    %v46 = vld [vmem:[%s8] sm:$0xff]
    %v47 = vld [vmem:[%s8 + $0x8] sm:$0xff]
    %v48 = vld [vmem:[%s8 + $0x10] sm:$0xff]
    %v49 = vld [vmem:[%s8 + $0x18] sm:$0xff]
    %v50 = vld [vmem:[%s8 + $0x20] sm:$0xff]
    %v51 = vld [vmem:[%s8 + $0x28] sm:$0xff]
    %v52 = vld [vmem:[%s8 + $0x30] sm:$0xff]
    %v53 = vld [vmem:[%s8 + $0x38] sm:$0xff]
    %v54 = vld [vmem:[%s9] sm:$0xff]
    %v55 = vld [vmem:[%s9 + $0x8] sm:$0xff]
    %v56 = vld [vmem:[%s9 + $0x10] sm:$0xff]
    %v57 = vld [vmem:[%s9 + $0x18] sm:$0xff]
    %v58 = vld [vmem:[%s9 + $0x20] sm:$0xff]
    %v59 = vld [vmem:[%s9 + $0x28] sm:$0xff]
    %v60 = vld [vmem:[%s9 + $0x30] sm:$0xff]
    %v61 = vld [vmem:[%s9 + $0x38] sm:$0xff]
    %v62 = vld [vmem:[%s1] sm:$0xff]
    %v63 = vld [vmem:[%s1 + $0x8] sm:$0xff]
    %v64 = vld [vmem:[%s1 + $0x10] sm:$0xff]
    %v65 = vld [vmem:[%s1 + $0x18] sm:$0xff]
    %v66 = vld [vmem:[%s1 + $0x20] sm:$0xff]
    %v67 = vld [vmem:[%s1 + $0x28] sm:$0xff]
    %v68 = vld [vmem:[%s1 + $0x30] sm:$0xff]
    %v69 = vld [vmem:[%s1 + $0x38] sm:$0xff]
    %v70 = vld [vmem:[%s1 + $0x40] sm:$0xff]
    %v71 = vld [vmem:[%s1 + $0x48] sm:$0xff]
    %v72 = vld [vmem:[%s2] sm:$0xff]
    %v73 = vld [vmem:[%s2 + $0x8] sm:$0xff]
    %v74 = vld [vmem:[%s2 + $0x10] sm:$0xff]
    %v75 = vld [vmem:[%s2 + $0x18] sm:$0xff]
    %v76 = vld [vmem:[%s2 + $0x20] sm:$0xff]
    %v77 = vld [vmem:[%s2 + $0x28] sm:$0xff]
    %v78 = vld [vmem:[%s2 + $0x30] sm:$0xff]
    %v79 = vld [vmem:[%s2 + $0x38] sm:$0xff]
    %v80 = vld [vmem:[%s2 + $0x40] sm:$0xff]
    %v81 = vld [vmem:[%s2 + $0x48] sm:$0xff]
    %v82 = vadd.f32 %v62, %v72
    %v83 = vadd.f32 %v63, %v73
    %v84 = vadd.f32 %v64, %v74
    %v85 = vadd.f32 %v65, %v75
    %v86 = vadd.f32 %v66, %v76
    %v87 = vadd.f32 %v67, %v77
    %v88 = vadd.f32 %v68, %v78
    %v89 = vadd.f32 %v69, %v79
    %v90 = vadd.f32 %v70, %v80
    %v91 = vadd.f32 %v71, %v81
    %v92 = vld [vmem:[%s7] sm:$0xff]
    %v93 = vld [vmem:[%s7 + $0x8] sm:$0xff]
    %v94 = vld [vmem:[%s7 + $0x10] sm:$0xff]
    %v95 = vmul.f32 %v82, %v82
    %v96 = vmul.f32 %v83, %v83
    %v97 = vmul.f32 %v84, %v84
    %v98 = vmul.f32 %v85, %v85
    %v99 = vmul.f32 %v86, %v86
    %v100 = vmul.f32 %v87, %v87
    %v101 = vmul.f32 %v88, %v88
    %v102 = vmul.f32 %v89, %v89
    %v103 = vmul.f32 %v90, %v90
    %v104 = vmul.f32 %v91, %v91
    %vm105 = vcmask 523264
    %v107 = vsel %vm105, %v82, 0
    %v110 = vsel %vm105, %v83, 0
    %v113 = vsel %vm105, %v84, 0
    %v116 = vsel %vm105, %v85, 0
    %v119 = vsel %vm105, %v86, 0
    %v122 = vsel %vm105, %v87, 0
    %v125 = vsel %vm105, %v88, 0
    %v128 = vsel %vm105, %v89, 0
    %v131 = vsel %vm105, %v90, 0
    %v134 = vsel %vm105, %v91, 0
    %v137 = vsel %vm105, %v95, 0
    %v140 = vsel %vm105, %v96, 0
    %v143 = vsel %vm105, %v97, 0
    %v146 = vsel %vm105, %v98, 0
    %v149 = vsel %vm105, %v99, 0
    %v152 = vsel %vm105, %v100, 0
    %v155 = vsel %vm105, %v101, 0
    %v158 = vsel %vm105, %v102, 0
    %v161 = vsel %vm105, %v103, 0
    %v164 = vsel %vm105, %v104, 0
    %166 = vmatprep.subr.mxu0 0.0
    %167 = vmatpush1.msra.mxu0 %v46
    %168 = vmatprep.subr.mxu0 0.0
    %169 = vmatpush1.msra.mxu0 %v47
    %170 = vmatprep.subr.mxu0 0.0
    %171 = vmatpush1.msra.mxu0 %v48
    %172 = vmatprep.subr.mxu0 0.0
    %173 = vmatpush1.msra.mxu0 %v49
    %174 = vmatprep.subr.mxu0 0.0
    %175 = vmatpush1.msra.mxu0 %v50
    %176 = vmatprep.subr.mxu0 0.0
    %177 = vmatpush1.msra.mxu0 %v51
    %178 = vmatprep.subr.mxu0 0.0
    %179 = vmatpush1.msra.mxu0 %v52
    %180 = vmatprep.subr.mxu0 0.0
    %181 = vmatpush1.msra.mxu0 %v53
    %182 = vmatprep.subr.mxu0 0.0
    %183 = vmatpush1.msra.mxu0 0.0
    %184 = vmatprep.subr.mxu0 0.0
    %185 = vmatpush1.msra.mxu0 0.0
    %186 = vmatprep.subr.mxu0 0.0
    %187 = vmatpush1.msra.mxu0 0.0
    %188 = vmatprep.subr.mxu0 0.0
    %189 = vmatpush1.msra.mxu0 0.0
    %190 = vmatprep.subr.mxu0 0.0
    %191 = vmatpush1.msra.mxu0 0.0
    %192 = vmatprep.subr.mxu0 0.0
    %193 = vmatpush1.msra.mxu0 0.0
    %194 = vmatprep.subr.mxu0 0.0
    %195 = vmatpush1.msra.mxu0 0.0
    %196 = vmatprep.subr.mxu0 0.0
    %197 = vmatpush1.msra.mxu0 0.0
    %198 = vmatprep.subr.mxu0 0.0
    %199 = vmatpush1.msra.mxu0 0.0
    %200 = vmatprep.subr.mxu0 0.0
    %201 = vmatpush1.msra.mxu0 0.0
    %202 = vmatprep.subr.mxu0 0.0
    %203 = vmatpush1.msra.mxu0 0.0
    %204 = vmatprep.subr.mxu0 0.0
    %205 = vmatpush1.msra.mxu0 0.0
    %206 = vmatprep.subr.mxu0 0.0
    %207 = vmatpush1.msra.mxu0 0.0
    %208 = vmatprep.subr.mxu0 0.0
    %209 = vmatpush1.msra.mxu0 0.0
    %210 = vmatprep.subr.mxu0 0.0
    %211 = vmatpush1.msra.mxu0 0.0
    %212 = vmatprep.subr.mxu0 0.0
    %213 = vmatpush1.msra.mxu0 0.0
    %214 = vmatprep.subr.mxu0 0.0
    %215 = vmatpush1.msra.mxu0 0.0
    %216 = vmatprep.subr.mxu0 0.0
    %217 = vmatpush1.msra.mxu0 0.0
    %218 = vmatprep.subr.mxu0 0.0
    %219 = vmatpush1.msra.mxu0 0.0
    %220 = vmatprep.subr.mxu0 0.0
    %221 = vmatpush1.msra.mxu0 0.0
    %222 = vmatprep.subr.mxu0 0.0
    %223 = vmatpush1.msra.mxu0 0.0
    %224 = vmatprep.subr.mxu0 0.0
    %225 = vmatpush1.msra.mxu0 0.0
    %226 = vmatprep.subr.mxu0 0.0
    %227 = vmatpush1.msra.mxu0 0.0
    %228 = vmatprep.subr.mxu0 0.0
    %229 = vmatpush1.msra.mxu0 0.0
    %230 = vmatprep.mubr.f32.mxu0 0.0
    %231 = vmatmul.mubr.f32.gmra.mrb[0].mxu0 %v107
    %v232 = vpop.f32.mrb[0].mxu0
    %v233 = vadd.f32 0.0, %v232
    %v234 = vpop.f32.mrb[0].mxu0
    %235 = vmatprep.mubr.f32.mxu0 0.0
    %236 = vmatmul.mubr.f32.gmra.mrb[0].mxu0 %v110
    %v237 = vpop.f32.mrb[0].mxu0
    %v238 = vadd.f32 0.0, %v237
    %v239 = vpop.f32.mrb[0].mxu0
    %240 = vmatprep.mubr.f32.mxu0 0.0
    %241 = vmatmul.mubr.f32.gmra.mrb[0].mxu0 %v113
    %v242 = vpop.f32.mrb[0].mxu0
    %v243 = vadd.f32 0.0, %v242
    %v244 = vpop.f32.mrb[0].mxu0
    %245 = vmatprep.mubr.f32.mxu0 0.0
    %246 = vmatmul.mubr.f32.gmra.mrb[0].mxu0 %v116
    %v247 = vpop.f32.mrb[0].mxu0
    %v248 = vadd.f32 0.0, %v247
    %v249 = vpop.f32.mrb[0].mxu0
    %250 = vmatprep.mubr.f32.mxu0 0.0
    %251 = vmatmul.mubr.f32.gmra.mrb[0].mxu0 %v119
    %v252 = vpop.f32.mrb[0].mxu0
    %v253 = vadd.f32 0.0, %v252
    %v254 = vpop.f32.mrb[0].mxu0
    %255 = vmatprep.mubr.f32.mxu0 0.0
    %256 = vmatmul.mubr.f32.gmra.mrb[0].mxu0 %v122
    %v257 = vpop.f32.mrb[0].mxu0
    %v258 = vadd.f32 0.0, %v257
    %v259 = vpop.f32.mrb[0].mxu0
    %260 = vmatprep.mubr.f32.mxu0 0.0
    %261 = vmatmul.mubr.f32.gmra.mrb[0].mxu0 %v125
    %v262 = vpop.f32.mrb[0].mxu0
    %v263 = vadd.f32 0.0, %v262
    %v264 = vpop.f32.mrb[0].mxu0
    %265 = vmatprep.mubr.f32.mxu0 0.0
    %266 = vmatmul.mubr.f32.gmra.mrb[0].mxu0 %v128
    %v267 = vpop.f32.mrb[0].mxu0
    %v268 = vadd.f32 0.0, %v267
    %v269 = vpop.f32.mrb[0].mxu0
    %270 = vmatprep.mubr.f32.mxu0 0.0
    %271 = vmatmul.mubr.f32.gmra.mrb[0].mxu0 %v131
    %v272 = vpop.f32.mrb[0].mxu0
    %v273 = vadd.f32 0.0, %v272
    %v274 = vpop.f32.mrb[0].mxu0
    %275 = vmatprep.mubr.f32.mxu0 0.0
    %276 = vmatmul.mubr.f32.gmra.mrb[0].mxu0 %v134
    %v277 = vpop.f32.mrb[0].mxu0
    %v278 = vadd.f32 0.0, %v277
    %v279 = vpop.f32.mrb[0].mxu0
    %280 = vmatprep.mubr.f32.mxu0 0.0
    %281 = vmatmul.mubr.f32.gmra.mrb[0].mxu0 %v137
    %v282 = vpop.f32.mrb[0].mxu0
    %v283 = vadd.f32 0.0, %v282
    %v284 = vpop.f32.mrb[0].mxu0
    %285 = vmatprep.mubr.f32.mxu0 0.0
    %286 = vmatmul.mubr.f32.gmra.mrb[0].mxu0 %v140
    %v287 = vpop.f32.mrb[0].mxu0
    %v288 = vadd.f32 0.0, %v287
    %v289 = vpop.f32.mrb[0].mxu0
    %290 = vmatprep.mubr.f32.mxu0 0.0
    %291 = vmatmul.mubr.f32.gmra.mrb[0].mxu0 %v143
    %v292 = vpop.f32.mrb[0].mxu0
    %v293 = vadd.f32 0.0, %v292
    %v294 = vpop.f32.mrb[0].mxu0
    %295 = vmatprep.mubr.f32.mxu0 0.0
    %296 = vmatmul.mubr.f32.gmra.mrb[0].mxu0 %v146
    %v297 = vpop.f32.mrb[0].mxu0
    %v298 = vadd.f32 0.0, %v297
    %v299 = vpop.f32.mrb[0].mxu0
    %300 = vmatprep.mubr.f32.mxu0 0.0
    %301 = vmatmul.mubr.f32.gmra.mrb[0].mxu0 %v149
    %v302 = vpop.f32.mrb[0].mxu0
    %v303 = vadd.f32 0.0, %v302
    %v304 = vpop.f32.mrb[0].mxu0
    %305 = vmatprep.mubr.f32.mxu0 0.0
    %306 = vmatmul.mubr.f32.gmra.mrb[0].mxu0 %v152
    %v307 = vpop.f32.mrb[0].mxu0
    %v308 = vadd.f32 0.0, %v307
    %v309 = vpop.f32.mrb[0].mxu0
    %310 = vmatprep.mubr.f32.mxu0 0.0
    %311 = vmatmul.mubr.f32.gmra.mrb[0].mxu0 %v155
    %v312 = vpop.f32.mrb[0].mxu0
    %v313 = vadd.f32 0.0, %v312
    %v314 = vpop.f32.mrb[0].mxu0
    %315 = vmatprep.mubr.f32.mxu0 0.0
    %316 = vmatmul.mubr.f32.gmra.mrb[0].mxu0 %v158
    %v317 = vpop.f32.mrb[0].mxu0
    %v318 = vadd.f32 0.0, %v317
    %v319 = vpop.f32.mrb[0].mxu0
    %320 = vmatprep.mubr.f32.mxu0 0.0
    %321 = vmatmul.mubr.f32.gmra.mrb[0].mxu0 %v161
    %v322 = vpop.f32.mrb[0].mxu0
    %v323 = vadd.f32 0.0, %v322
    %v324 = vpop.f32.mrb[0].mxu0
    %325 = vmatprep.mubr.f32.mxu0 0.0
    %326 = vmatmul.mubr.f32.gmra.mrb[0].mxu0 %v164
    %v327 = vpop.f32.mrb[0].mxu0
    %v328 = vadd.f32 0.0, %v327
    %v329 = vpop.f32.mrb[0].mxu0
    %330 = vdwg.mxu0
    %v331 = vmul.f32 %v233, %v233
    %v332 = vmul.f32 %v238, %v238
    %v333 = vmul.f32 %v243, %v243
    %v334 = vmul.f32 %v248, %v248
    %v335 = vmul.f32 %v253, %v253
    %v336 = vmul.f32 %v258, %v258
    %v337 = vmul.f32 %v263, %v263
    %v338 = vmul.f32 %v268, %v268
    %v339 = vmul.f32 %v273, %v273
    %v340 = vmul.f32 %v278, %v278
    %v341 = vsub.f32 %v283, %v331
    %v342 = vsub.f32 %v288, %v332
    %v343 = vsub.f32 %v293, %v333
    %v344 = vsub.f32 %v298, %v334
    %v345 = vsub.f32 %v303, %v335
    %v346 = vsub.f32 %v308, %v336
    %v347 = vsub.f32 %v313, %v337
    %v348 = vsub.f32 %v318, %v338
    %v349 = vsub.f32 %v323, %v339
    %v350 = vsub.f32 %v328, %v340
    %v351 = vsub.f32 %v82, %v233
    %v352 = vsub.f32 %v83, %v238
    %v353 = vsub.f32 %v84, %v243
    %v354 = vsub.f32 %v85, %v248
    %v355 = vsub.f32 %v86, %v253
    %v356 = vsub.f32 %v87, %v258
    %v357 = vsub.f32 %v88, %v263
    %v358 = vsub.f32 %v89, %v268
    %v359 = vsub.f32 %v90, %v273
    %v360 = vsub.f32 %v91, %v278
    %v361 = vadd.f32 %v341, 1e-05
    %v362 = vadd.f32 %v342, 1e-05
    %v363 = vadd.f32 %v343, 1e-05
    %v364 = vadd.f32 %v344, 1e-05
    %v365 = vadd.f32 %v345, 1e-05
    %v366 = vadd.f32 %v346, 1e-05
    %v367 = vadd.f32 %v347, 1e-05
    %v368 = vadd.f32 %v348, 1e-05
    %v369 = vadd.f32 %v349, 1e-05
    %v370 = vadd.f32 %v350, 1e-05
    %v371 = vrsqrt.pop %v361
    %v372 = vrsqrt.pop %v362
    %v373 = vrsqrt.pop %v363
    %v374 = vrsqrt.pop %v364
    %v375 = vrsqrt.pop %v365
    %v376 = vrsqrt.pop %v366
    %v377 = vrsqrt.pop %v367
    %v378 = vrsqrt.pop %v368
    %v379 = vrsqrt.pop %v369
    %v380 = vrsqrt.pop %v370
    %v381 = vmul.f32 %v351, %v371
    %v382 = vmul.f32 %v352, %v372
    %v383 = vmul.f32 %v353, %v373
    %v384 = vmul.f32 %v354, %v374
    %v385 = vmul.f32 %v355, %v375
    %v386 = vmul.f32 %v356, %v376
    %v387 = vmul.f32 %v357, %v377
    %v388 = vmul.f32 %v358, %v378
    %v389 = vmul.f32 %v359, %v379
    %v390 = vmul.f32 %v360, %v380
    %v391 = vlaneseq
    %v392 = vshrl.u32 %v391, 7
    %v393 = vsub.s32 0, %v392
    %v394 = vrot.slane %v92, %v393
    %v395 = vmul.f32 %v381, %v394
    %v396 = vmul.f32 %v382, %v394
    %v397 = vmul.f32 %v383, %v394
    %v398 = vmul.f32 %v384, %v394
    %v399 = vmul.f32 %v385, %v394
    %v400 = vmul.f32 %v386, %v394
    %v401 = vmul.f32 %v387, %v394
    %v402 = vmul.f32 %v388, %v394
    %v403 = vmul.f32 %v389, %v394
    %v404 = vmul.f32 %v390, %v394
    %v405 = vlaneseq
    %v406 = vshrl.u32 %v405, 7
    %v407 = vsub.s32 1, %v406
    %v408 = vrot.slane %v92, %v407
    %v409 = vadd.f32 %v395, %v408
    %v410 = vadd.f32 %v396, %v408
    %v411 = vadd.f32 %v397, %v408
    %v412 = vadd.f32 %v398, %v408
    %v413 = vadd.f32 %v399, %v408
    %v414 = vadd.f32 %v400, %v408
    %v415 = vadd.f32 %v401, %v408
    %v416 = vadd.f32 %v402, %v408
    %v417 = vadd.f32 %v403, %v408
    %v418 = vadd.f32 %v404, %v408
    %v419 = vld [vmem:[%s3] sm:$0xff]
    %v420 = vld [vmem:[%s3 + $0x8] sm:$0xff]
    %v421 = vld [vmem:[%s3 + $0x10] sm:$0xff]
    %v422 = vld [vmem:[%s3 + $0x18] sm:$0xff]
    %v423 = vld [vmem:[%s3 + $0x20] sm:$0xff]
    %v424 = vld [vmem:[%s3 + $0x28] sm:$0xff]
    %v425 = vld [vmem:[%s3 + $0x30] sm:$0xff]
    %v426 = vld [vmem:[%s3 + $0x38] sm:$0xff]
    %v427 = vld [vmem:[%s3 + $0x40] sm:$0xff]
    %v428 = vld [vmem:[%s3 + $0x48] sm:$0xff]
    %v429 = vld [vmem:[%s3 + $0x50] sm:$0xff]
    %v430 = vld [vmem:[%s3 + $0x58] sm:$0xff]
    %v431 = vld [vmem:[%s3 + $0x60] sm:$0xff]
    %v432 = vld [vmem:[%s3 + $0x68] sm:$0xff]
    %v433 = vld [vmem:[%s3 + $0x70] sm:$0xff]
    %v434 = vld [vmem:[%s3 + $0x78] sm:$0xff]
    %v435 = vld [vmem:[%s3 + $0x80] sm:$0xff]
    %v436 = vld [vmem:[%s3 + $0x88] sm:$0xff]
    %v437 = vld [vmem:[%s3 + $0x90] sm:$0xff]
    %v438 = vld [vmem:[%s3 + $0x98] sm:$0xff]
    %v439 = vld [vmem:[%s3 + $0xa0] sm:$0xff]
    %v440 = vld [vmem:[%s3 + $0xa8] sm:$0xff]
    %v441 = vld [vmem:[%s3 + $0xb0] sm:$0xff]
    %v442 = vld [vmem:[%s3 + $0xb8] sm:$0xff]
    %v443 = vlaneseq
    %v444 = vshrl.u32 %v443, 7
    %v445 = vsub.s32 2, %v444
    %v446 = vrot.slane %v92, %v445
    %v447 = vlaneseq
    %v448 = vshrl.u32 %v447, 7
    %v449 = vsub.s32 2, %v448
    %v450 = vrot.slane %v93, %v449
    %v451 = vlaneseq
    %v452 = vshrl.u32 %v451, 7
    %v453 = vsub.s32 2, %v452
    %v454 = vrot.slane %v94, %v453
    %v456 = vsel %vm105, %v409, 0
    %v459 = vsel %vm105, %v410, 0
    %v462 = vsel %vm105, %v411, 0
    %v465 = vsel %vm105, %v412, 0
    %v468 = vsel %vm105, %v413, 0
    %v471 = vsel %vm105, %v414, 0
    %v474 = vsel %vm105, %v415, 0
    %v477 = vsel %vm105, %v416, 0
    %v480 = vsel %vm105, %v417, 0
    %v483 = vsel %vm105, %v418, 0
    %485 = vmatprep.subr.mxu0 %v420
    %486 = vmatpush1.msra.mxu0 %v419
    %487 = vmatprep.subr.mxu0 %v423
    %488 = vmatpush1.msra.mxu0 %v422
    %489 = vmatprep.subr.mxu0 %v426
    %490 = vmatpush1.msra.mxu0 %v425
    %491 = vmatprep.subr.mxu0 %v429
    %492 = vmatpush1.msra.mxu0 %v428
    %493 = vmatprep.subr.mxu0 %v432
    %494 = vmatpush1.msra.mxu0 %v431
    %495 = vmatprep.subr.mxu0 %v435
    %496 = vmatpush1.msra.mxu0 %v434
    %497 = vmatprep.subr.mxu0 %v438
    %498 = vmatpush1.msra.mxu0 %v437
    %499 = vmatprep.subr.mxu0 %v441
    %500 = vmatpush1.msra.mxu0 %v440
    %501 = vmatprep.subr.mxu0 0.0
    %502 = vmatpush1.msra.mxu0 0.0
    %503 = vmatprep.subr.mxu0 0.0
    %504 = vmatpush1.msra.mxu0 0.0
    %505 = vmatprep.subr.mxu0 0.0
    %506 = vmatpush1.msra.mxu0 0.0
    %507 = vmatprep.subr.mxu0 0.0
    %508 = vmatpush1.msra.mxu0 0.0
    %509 = vmatprep.subr.mxu0 0.0
    %510 = vmatpush1.msra.mxu0 0.0
    %511 = vmatprep.subr.mxu0 0.0
    %512 = vmatpush1.msra.mxu0 0.0
    %513 = vmatprep.subr.mxu0 0.0
    %514 = vmatpush1.msra.mxu0 0.0
    %515 = vmatprep.subr.mxu0 0.0
    %516 = vmatpush1.msra.mxu0 0.0
    %517 = vmatprep.subr.mxu0 0.0
    %518 = vmatpush1.msra.mxu0 0.0
    %519 = vmatprep.subr.mxu0 0.0
    %520 = vmatpush1.msra.mxu0 0.0
    %521 = vmatprep.subr.mxu0 0.0
    %522 = vmatpush1.msra.mxu0 0.0
    %523 = vmatprep.subr.mxu0 0.0
    %524 = vmatpush1.msra.mxu0 0.0
    %525 = vmatprep.subr.mxu0 0.0
    %526 = vmatpush1.msra.mxu0 0.0
    %527 = vmatprep.subr.mxu0 0.0
    %528 = vmatpush1.msra.mxu0 0.0
    %529 = vmatprep.subr.mxu0 0.0
    %530 = vmatpush1.msra.mxu0 0.0
    %531 = vmatprep.subr.mxu0 0.0
    %532 = vmatpush1.msra.mxu0 0.0
    %533 = vmatprep.subr.mxu0 0.0
    %534 = vmatpush1.msra.mxu0 0.0
    %535 = vmatprep.subr.mxu0 0.0
    %536 = vmatpush1.msra.mxu0 0.0
    %537 = vmatprep.subr.mxu0 0.0
    %538 = vmatpush1.msra.mxu0 0.0
    %539 = vmatprep.subr.mxu0 0.0
    %540 = vmatpush1.msra.mxu0 0.0
    %541 = vmatprep.subr.mxu0 0.0
    %542 = vmatpush1.msra.mxu0 0.0
    %543 = vmatprep.subr.mxu0 0.0
    %544 = vmatpush1.msra.mxu0 0.0
    %545 = vmatprep.subr.mxu0 0.0
    %546 = vmatpush1.msra.mxu0 0.0
    %547 = vmatprep.subr.mxu0 0.0
    %548 = vmatpush1.msra.mxu0 0.0
    %549 = vmatprep.mubr.f32.mxu0 0.0
    %550 = vmatmul.mubr.f32.gmra.mrb[0].mxu0 %v456
    %v551 = vpop.f32.mrb[0].mxu0
    %v552 = vadd.f32 %v446, %v551
    %v553 = vpop.f32.mrb[0].mxu0
    %v554 = vadd.f32 %v450, %v553
    %555 = vmatprep.mubr.f32.mxu0 0.0
    %556 = vmatmul.mubr.f32.gmra.mrb[0].mxu0 %v459
    %v557 = vpop.f32.mrb[0].mxu0
    %v558 = vadd.f32 %v446, %v557
    %v559 = vpop.f32.mrb[0].mxu0
    %v560 = vadd.f32 %v450, %v559
    %561 = vmatprep.mubr.f32.mxu0 0.0
    %562 = vmatmul.mubr.f32.gmra.mrb[0].mxu0 %v462
    %v563 = vpop.f32.mrb[0].mxu0
    %v564 = vadd.f32 %v446, %v563
    %v565 = vpop.f32.mrb[0].mxu0
    %v566 = vadd.f32 %v450, %v565
    %567 = vmatprep.mubr.f32.mxu0 0.0
    %568 = vmatmul.mubr.f32.gmra.mrb[0].mxu0 %v465
    %v569 = vpop.f32.mrb[0].mxu0
    %v570 = vadd.f32 %v446, %v569
    %v571 = vpop.f32.mrb[0].mxu0
    %v572 = vadd.f32 %v450, %v571
    %573 = vmatprep.mubr.f32.mxu0 0.0
    %574 = vmatmul.mubr.f32.gmra.mrb[0].mxu0 %v468
    %v575 = vpop.f32.mrb[0].mxu0
    %v576 = vadd.f32 %v446, %v575
    %v577 = vpop.f32.mrb[0].mxu0
    %v578 = vadd.f32 %v450, %v577
    %579 = vmatprep.mubr.f32.mxu0 0.0
    %580 = vmatmul.mubr.f32.gmra.mrb[0].mxu0 %v471
    %v581 = vpop.f32.mrb[0].mxu0
    %v582 = vadd.f32 %v446, %v581
    %v583 = vpop.f32.mrb[0].mxu0
    %v584 = vadd.f32 %v450, %v583
    %585 = vmatprep.mubr.f32.mxu0 0.0
    %586 = vmatmul.mubr.f32.gmra.mrb[0].mxu0 %v474
    %v587 = vpop.f32.mrb[0].mxu0
    %v588 = vadd.f32 %v446, %v587
    %v589 = vpop.f32.mrb[0].mxu0
    %v590 = vadd.f32 %v450, %v589
    %591 = vmatprep.mubr.f32.mxu0 0.0
    %592 = vmatmul.mubr.f32.gmra.mrb[0].mxu0 %v477
    %v593 = vpop.f32.mrb[0].mxu0
    %v594 = vadd.f32 %v446, %v593
    %v595 = vpop.f32.mrb[0].mxu0
    %v596 = vadd.f32 %v450, %v595
    %597 = vmatprep.mubr.f32.mxu0 0.0
    %598 = vmatmul.mubr.f32.gmra.mrb[0].mxu0 %v480
    %v599 = vpop.f32.mrb[0].mxu0
    %v600 = vadd.f32 %v446, %v599
    %v601 = vpop.f32.mrb[0].mxu0
    %v602 = vadd.f32 %v450, %v601
    %603 = vmatprep.mubr.f32.mxu0 0.0
    %604 = vmatmul.mubr.f32.gmra.mrb[0].mxu0 %v483
    %v605 = vpop.f32.mrb[0].mxu0
    %v606 = vadd.f32 %v446, %v605
    %v607 = vpop.f32.mrb[0].mxu0
    %v608 = vadd.f32 %v450, %v607
    %609 = vdwg.mxu0
    %610 = vmatprep.subr.mxu0 0.0
    %611 = vmatpush1.msra.mxu0 %v421
    %612 = vmatprep.subr.mxu0 0.0
    %613 = vmatpush1.msra.mxu0 %v424
    %614 = vmatprep.subr.mxu0 0.0
    %615 = vmatpush1.msra.mxu0 %v427
    %616 = vmatprep.subr.mxu0 0.0
    %617 = vmatpush1.msra.mxu0 %v430
    %618 = vmatprep.subr.mxu0 0.0
    %619 = vmatpush1.msra.mxu0 %v433
    %620 = vmatprep.subr.mxu0 0.0
    %621 = vmatpush1.msra.mxu0 %v436
    %622 = vmatprep.subr.mxu0 0.0
    %623 = vmatpush1.msra.mxu0 %v439
    %624 = vmatprep.subr.mxu0 0.0
    %625 = vmatpush1.msra.mxu0 %v442
    %626 = vmatprep.subr.mxu0 0.0
    %627 = vmatpush1.msra.mxu0 0.0
    %628 = vmatprep.subr.mxu0 0.0
    %629 = vmatpush1.msra.mxu0 0.0
    %630 = vmatprep.subr.mxu0 0.0
    %631 = vmatpush1.msra.mxu0 0.0
    %632 = vmatprep.subr.mxu0 0.0
    %633 = vmatpush1.msra.mxu0 0.0
    %634 = vmatprep.subr.mxu0 0.0
    %635 = vmatpush1.msra.mxu0 0.0
    %636 = vmatprep.subr.mxu0 0.0
    %637 = vmatpush1.msra.mxu0 0.0
    %638 = vmatprep.subr.mxu0 0.0
    %639 = vmatpush1.msra.mxu0 0.0
    %640 = vmatprep.subr.mxu0 0.0
    %641 = vmatpush1.msra.mxu0 0.0
    %642 = vmatprep.subr.mxu0 0.0
    %643 = vmatpush1.msra.mxu0 0.0
    %644 = vmatprep.subr.mxu0 0.0
    %645 = vmatpush1.msra.mxu0 0.0
    %646 = vmatprep.subr.mxu0 0.0
    %647 = vmatpush1.msra.mxu0 0.0
    %648 = vmatprep.subr.mxu0 0.0
    %649 = vmatpush1.msra.mxu0 0.0
    %650 = vmatprep.subr.mxu0 0.0
    %651 = vmatpush1.msra.mxu0 0.0
    %652 = vmatprep.subr.mxu0 0.0
    %653 = vmatpush1.msra.mxu0 0.0
    %654 = vmatprep.subr.mxu0 0.0
    %655 = vmatpush1.msra.mxu0 0.0
    %656 = vmatprep.subr.mxu0 0.0
    %657 = vmatpush1.msra.mxu0 0.0
    %658 = vmatprep.subr.mxu0 0.0
    %659 = vmatpush1.msra.mxu0 0.0
    %660 = vmatprep.subr.mxu0 0.0
    %661 = vmatpush1.msra.mxu0 0.0
    %662 = vmatprep.subr.mxu0 0.0
    %663 = vmatpush1.msra.mxu0 0.0
    %664 = vmatprep.subr.mxu0 0.0
    %665 = vmatpush1.msra.mxu0 0.0
    %666 = vmatprep.subr.mxu0 0.0
    %667 = vmatpush1.msra.mxu0 0.0
    %668 = vmatprep.subr.mxu0 0.0
    %669 = vmatpush1.msra.mxu0 0.0
    %670 = vmatprep.subr.mxu0 0.0
    %671 = vmatpush1.msra.mxu0 0.0
    %672 = vmatprep.subr.mxu0 0.0
    %673 = vmatpush1.msra.mxu0 0.0
    %674 = vmatprep.mubr.f32.mxu0 0.0
    %675 = vmatmul.mubr.f32.gmra.mrb[0].mxu0 %v456
    %v676 = vpop.f32.mrb[0].mxu0
    %v677 = vadd.f32 %v454, %v676
    %v678 = vpop.f32.mrb[0].mxu0
    %679 = vmatprep.mubr.f32.mxu0 0.0
    %680 = vmatmul.mubr.f32.gmra.mrb[0].mxu0 %v459
    %v681 = vpop.f32.mrb[0].mxu0
    %v682 = vadd.f32 %v454, %v681
    %v683 = vpop.f32.mrb[0].mxu0
    %684 = vmatprep.mubr.f32.mxu0 0.0
    %685 = vmatmul.mubr.f32.gmra.mrb[0].mxu0 %v462
    %v686 = vpop.f32.mrb[0].mxu0
    %v687 = vadd.f32 %v454, %v686
    %v688 = vpop.f32.mrb[0].mxu0
    %689 = vmatprep.mubr.f32.mxu0 0.0
    %690 = vmatmul.mubr.f32.gmra.mrb[0].mxu0 %v465
    %v691 = vpop.f32.mrb[0].mxu0
    %v692 = vadd.f32 %v454, %v691
    %v693 = vpop.f32.mrb[0].mxu0
    %694 = vmatprep.mubr.f32.mxu0 0.0
    %695 = vmatmul.mubr.f32.gmra.mrb[0].mxu0 %v468
    %v696 = vpop.f32.mrb[0].mxu0
    %v697 = vadd.f32 %v454, %v696
    %v698 = vpop.f32.mrb[0].mxu0
    %699 = vmatprep.mubr.f32.mxu0 0.0
    %700 = vmatmul.mubr.f32.gmra.mrb[0].mxu0 %v471
    %v701 = vpop.f32.mrb[0].mxu0
    %v702 = vadd.f32 %v454, %v701
    %v703 = vpop.f32.mrb[0].mxu0
    %704 = vmatprep.mubr.f32.mxu0 0.0
    %705 = vmatmul.mubr.f32.gmra.mrb[0].mxu0 %v474
    %v706 = vpop.f32.mrb[0].mxu0
    %v707 = vadd.f32 %v454, %v706
    %v708 = vpop.f32.mrb[0].mxu0
    %709 = vmatprep.mubr.f32.mxu0 0.0
    %710 = vmatmul.mubr.f32.gmra.mrb[0].mxu0 %v477
    %v711 = vpop.f32.mrb[0].mxu0
    %v712 = vadd.f32 %v454, %v711
    %v713 = vpop.f32.mrb[0].mxu0
    %714 = vmatprep.mubr.f32.mxu0 0.0
    %715 = vmatmul.mubr.f32.gmra.mrb[0].mxu0 %v480
    %v716 = vpop.f32.mrb[0].mxu0
    %v717 = vadd.f32 %v454, %v716
    %v718 = vpop.f32.mrb[0].mxu0
    %719 = vmatprep.mubr.f32.mxu0 0.0
    %720 = vmatmul.mubr.f32.gmra.mrb[0].mxu0 %v483
    %v721 = vpop.f32.mrb[0].mxu0
    %v722 = vadd.f32 %v454, %v721
    %v723 = vpop.f32.mrb[0].mxu0
    %724 = vdwg.mxu0
    %735 = vrot.lane.b32.xlu0 %v552, 64
    %v736 = vpop.permute.xlu0 %735
    %737 = vrot.lane.b32.xlu0 %v558, 64
    %v738 = vpop.permute.xlu0 %737
    %739 = vrot.lane.b32.xlu0 %v564, 64
    %v740 = vpop.permute.xlu0 %739
    %741 = vrot.lane.b32.xlu0 %v570, 64
    %v742 = vpop.permute.xlu0 %741
    %743 = vrot.lane.b32.xlu0 %v576, 64
    %v744 = vpop.permute.xlu0 %743
    %745 = vrot.lane.b32.xlu0 %v582, 64
    %v746 = vpop.permute.xlu0 %745
    %747 = vrot.lane.b32.xlu0 %v588, 64
    %v748 = vpop.permute.xlu0 %747
    %749 = vrot.lane.b32.xlu0 %v594, 64
    %v750 = vpop.permute.xlu0 %749
    %751 = vrot.lane.b32.xlu0 %v600, 64
    %v752 = vpop.permute.xlu0 %751
    %753 = vrot.lane.b32.xlu0 %v606, 64
    %v754 = vpop.permute.xlu0 %753
    %v765 = vmul.f32 %v552, %v736
    %v766 = vmul.f32 %v558, %v738
    %v767 = vmul.f32 %v564, %v740
    %v768 = vmul.f32 %v570, %v742
    %v769 = vmul.f32 %v576, %v744
    %v770 = vmul.f32 %v582, %v746
    %v771 = vmul.f32 %v588, %v748
    %v772 = vmul.f32 %v594, %v750
    %v773 = vmul.f32 %v600, %v752
    %v774 = vmul.f32 %v606, %v754
    %785 = vrot.lane.b32.xlu0 %v554, 64
    %v786 = vpop.permute.xlu0 %785
    %787 = vrot.lane.b32.xlu0 %v560, 64
    %v788 = vpop.permute.xlu0 %787
    %789 = vrot.lane.b32.xlu0 %v566, 64
    %v790 = vpop.permute.xlu0 %789
    %791 = vrot.lane.b32.xlu0 %v572, 64
    %v792 = vpop.permute.xlu0 %791
    %793 = vrot.lane.b32.xlu0 %v578, 64
    %v794 = vpop.permute.xlu0 %793
    %795 = vrot.lane.b32.xlu0 %v584, 64
    %v796 = vpop.permute.xlu0 %795
    %797 = vrot.lane.b32.xlu0 %v590, 64
    %v798 = vpop.permute.xlu0 %797
    %799 = vrot.lane.b32.xlu0 %v596, 64
    %v800 = vpop.permute.xlu0 %799
    %801 = vrot.lane.b32.xlu0 %v602, 64
    %v802 = vpop.permute.xlu0 %801
    %803 = vrot.lane.b32.xlu0 %v608, 64
    %v804 = vpop.permute.xlu0 %803
    %v815 = vmul.f32 %v552, %v786
    %v816 = vmul.f32 %v558, %v788
    %v817 = vmul.f32 %v564, %v790
    %v818 = vmul.f32 %v570, %v792
    %v819 = vmul.f32 %v576, %v794
    %v820 = vmul.f32 %v582, %v796
    %v821 = vmul.f32 %v588, %v798
    %v822 = vmul.f32 %v594, %v800
    %v823 = vmul.f32 %v600, %v802
    %v824 = vmul.f32 %v606, %v804
    %v826 = vsel %vm105, %v765, 0
    %v829 = vsel %vm105, %v766, 0
    %v832 = vsel %vm105, %v767, 0
    %v835 = vsel %vm105, %v768, 0
    %v838 = vsel %vm105, %v769, 0
    %v841 = vsel %vm105, %v770, 0
    %v844 = vsel %vm105, %v771, 0
    %v847 = vsel %vm105, %v772, 0
    %v850 = vsel %vm105, %v773, 0
    %v853 = vsel %vm105, %v774, 0
    %v856 = vsel %vm105, %v815, 0
    %v859 = vsel %vm105, %v816, 0
    %v862 = vsel %vm105, %v817, 0
    %v865 = vsel %vm105, %v818, 0
    %v868 = vsel %vm105, %v819, 0
    %v871 = vsel %vm105, %v820, 0
    %v874 = vsel %vm105, %v821, 0
    %v877 = vsel %vm105, %v822, 0
    %v880 = vsel %vm105, %v823, 0
    %v883 = vsel %vm105, %v824, 0
    %885 = vmatprep.subr.mxu0 0.0
    %886 = vmatpush1.msra.mxu0 %v54
    %887 = vmatprep.subr.mxu0 0.0
    %888 = vmatpush1.msra.mxu0 %v55
    %889 = vmatprep.subr.mxu0 0.0
    %890 = vmatpush1.msra.mxu0 %v56
    %891 = vmatprep.subr.mxu0 0.0
    %892 = vmatpush1.msra.mxu0 %v57
    %893 = vmatprep.subr.mxu0 0.0
    %894 = vmatpush1.msra.mxu0 %v58
    %895 = vmatprep.subr.mxu0 0.0
    %896 = vmatpush1.msra.mxu0 %v59
    %897 = vmatprep.subr.mxu0 0.0
    %898 = vmatpush1.msra.mxu0 %v60
    %899 = vmatprep.subr.mxu0 0.0
    %900 = vmatpush1.msra.mxu0 %v61
    %901 = vmatprep.subr.mxu0 0.0
    %902 = vmatpush1.msra.mxu0 0.0
    %903 = vmatprep.subr.mxu0 0.0
    %904 = vmatpush1.msra.mxu0 0.0
    %905 = vmatprep.subr.mxu0 0.0
    %906 = vmatpush1.msra.mxu0 0.0
    %907 = vmatprep.subr.mxu0 0.0
    %908 = vmatpush1.msra.mxu0 0.0
    %909 = vmatprep.subr.mxu0 0.0
    %910 = vmatpush1.msra.mxu0 0.0
    %911 = vmatprep.subr.mxu0 0.0
    %912 = vmatpush1.msra.mxu0 0.0
    %913 = vmatprep.subr.mxu0 0.0
    %914 = vmatpush1.msra.mxu0 0.0
    %915 = vmatprep.subr.mxu0 0.0
    %916 = vmatpush1.msra.mxu0 0.0
    %917 = vmatprep.subr.mxu0 0.0
    %918 = vmatpush1.msra.mxu0 0.0
    %919 = vmatprep.subr.mxu0 0.0
    %920 = vmatpush1.msra.mxu0 0.0
    %921 = vmatprep.subr.mxu0 0.0
    %922 = vmatpush1.msra.mxu0 0.0
    %923 = vmatprep.subr.mxu0 0.0
    %924 = vmatpush1.msra.mxu0 0.0
    %925 = vmatprep.subr.mxu0 0.0
    %926 = vmatpush1.msra.mxu0 0.0
    %927 = vmatprep.subr.mxu0 0.0
    %928 = vmatpush1.msra.mxu0 0.0
    %929 = vmatprep.subr.mxu0 0.0
    %930 = vmatpush1.msra.mxu0 0.0
    %931 = vmatprep.subr.mxu0 0.0
    %932 = vmatpush1.msra.mxu0 0.0
    %933 = vmatprep.subr.mxu0 0.0
    %934 = vmatpush1.msra.mxu0 0.0
    %935 = vmatprep.subr.mxu0 0.0
    %936 = vmatpush1.msra.mxu0 0.0
    %937 = vmatprep.subr.mxu0 0.0
    %938 = vmatpush1.msra.mxu0 0.0
    %939 = vmatprep.subr.mxu0 0.0
    %940 = vmatpush1.msra.mxu0 0.0
    %941 = vmatprep.subr.mxu0 0.0
    %942 = vmatpush1.msra.mxu0 0.0
    %943 = vmatprep.subr.mxu0 0.0
    %944 = vmatpush1.msra.mxu0 0.0
    %945 = vmatprep.subr.mxu0 0.0
    %946 = vmatpush1.msra.mxu0 0.0
    %947 = vmatprep.subr.mxu0 0.0
    %948 = vmatpush1.msra.mxu0 0.0
    %949 = vmatprep.mubr.f32.mxu0 0.0
    %950 = vmatmul.mubr.f32.gmra.mrb[0].mxu0 %v826
    %v951 = vpop.f32.mrb[0].mxu0
    %v952 = vadd.f32 0.0, %v951
    %v953 = vpop.f32.mrb[0].mxu0
    %954 = vmatprep.mubr.f32.mxu0 0.0
    %955 = vmatmul.mubr.f32.gmra.mrb[0].mxu0 %v829
    %v956 = vpop.f32.mrb[0].mxu0
    %v957 = vadd.f32 0.0, %v956
    %v958 = vpop.f32.mrb[0].mxu0
    %959 = vmatprep.mubr.f32.mxu0 0.0
    %960 = vmatmul.mubr.f32.gmra.mrb[0].mxu0 %v832
    %v961 = vpop.f32.mrb[0].mxu0
    %v962 = vadd.f32 0.0, %v961
    %v963 = vpop.f32.mrb[0].mxu0
    %964 = vmatprep.mubr.f32.mxu0 0.0
    %965 = vmatmul.mubr.f32.gmra.mrb[0].mxu0 %v835
    %v966 = vpop.f32.mrb[0].mxu0
    %v967 = vadd.f32 0.0, %v966
    %v968 = vpop.f32.mrb[0].mxu0
    %969 = vmatprep.mubr.f32.mxu0 0.0
    %970 = vmatmul.mubr.f32.gmra.mrb[0].mxu0 %v838
    %v971 = vpop.f32.mrb[0].mxu0
    %v972 = vadd.f32 0.0, %v971
    %v973 = vpop.f32.mrb[0].mxu0
    %974 = vmatprep.mubr.f32.mxu0 0.0
    %975 = vmatmul.mubr.f32.gmra.mrb[0].mxu0 %v841
    %v976 = vpop.f32.mrb[0].mxu0
    %v977 = vadd.f32 0.0, %v976
    %v978 = vpop.f32.mrb[0].mxu0
    %979 = vmatprep.mubr.f32.mxu0 0.0
    %980 = vmatmul.mubr.f32.gmra.mrb[0].mxu0 %v844
    %v981 = vpop.f32.mrb[0].mxu0
    %v982 = vadd.f32 0.0, %v981
    %v983 = vpop.f32.mrb[0].mxu0
    %984 = vmatprep.mubr.f32.mxu0 0.0
    %985 = vmatmul.mubr.f32.gmra.mrb[0].mxu0 %v847
    %v986 = vpop.f32.mrb[0].mxu0
    %v987 = vadd.f32 0.0, %v986
    %v988 = vpop.f32.mrb[0].mxu0
    %989 = vmatprep.mubr.f32.mxu0 0.0
    %990 = vmatmul.mubr.f32.gmra.mrb[0].mxu0 %v850
    %v991 = vpop.f32.mrb[0].mxu0
    %v992 = vadd.f32 0.0, %v991
    %v993 = vpop.f32.mrb[0].mxu0
    %994 = vmatprep.mubr.f32.mxu0 0.0
    %995 = vmatmul.mubr.f32.gmra.mrb[0].mxu0 %v853
    %v996 = vpop.f32.mrb[0].mxu0
    %v997 = vadd.f32 0.0, %v996
    %v998 = vpop.f32.mrb[0].mxu0
    %999 = vmatprep.mubr.f32.mxu0 0.0
    %1000 = vmatmul.mubr.f32.gmra.mrb[0].mxu0 %v856
    %v1001 = vpop.f32.mrb[0].mxu0
    %v1002 = vadd.f32 0.0, %v1001
    %v1003 = vpop.f32.mrb[0].mxu0
    %1004 = vmatprep.mubr.f32.mxu0 0.0
    %1005 = vmatmul.mubr.f32.gmra.mrb[0].mxu0 %v859
    %v1006 = vpop.f32.mrb[0].mxu0
    %v1007 = vadd.f32 0.0, %v1006
    %v1008 = vpop.f32.mrb[0].mxu0
    %1009 = vmatprep.mubr.f32.mxu0 0.0
    %1010 = vmatmul.mubr.f32.gmra.mrb[0].mxu0 %v862
    %v1011 = vpop.f32.mrb[0].mxu0
    %v1012 = vadd.f32 0.0, %v1011
    %v1013 = vpop.f32.mrb[0].mxu0
    %1014 = vmatprep.mubr.f32.mxu0 0.0
    %1015 = vmatmul.mubr.f32.gmra.mrb[0].mxu0 %v865
    %v1016 = vpop.f32.mrb[0].mxu0
    %v1017 = vadd.f32 0.0, %v1016
    %v1018 = vpop.f32.mrb[0].mxu0
    %1019 = vmatprep.mubr.f32.mxu0 0.0
    %1020 = vmatmul.mubr.f32.gmra.mrb[0].mxu0 %v868
    %v1021 = vpop.f32.mrb[0].mxu0
    %v1022 = vadd.f32 0.0, %v1021
    %v1023 = vpop.f32.mrb[0].mxu0
    %1024 = vmatprep.mubr.f32.mxu0 0.0
    %1025 = vmatmul.mubr.f32.gmra.mrb[0].mxu0 %v871
    %v1026 = vpop.f32.mrb[0].mxu0
    %v1027 = vadd.f32 0.0, %v1026
    %v1028 = vpop.f32.mrb[0].mxu0
    %1029 = vmatprep.mubr.f32.mxu0 0.0
    %1030 = vmatmul.mubr.f32.gmra.mrb[0].mxu0 %v874
    %v1031 = vpop.f32.mrb[0].mxu0
    %v1032 = vadd.f32 0.0, %v1031
    %v1033 = vpop.f32.mrb[0].mxu0
    %1034 = vmatprep.mubr.f32.mxu0 0.0
    %1035 = vmatmul.mubr.f32.gmra.mrb[0].mxu0 %v877
    %v1036 = vpop.f32.mrb[0].mxu0
    %v1037 = vadd.f32 0.0, %v1036
    %v1038 = vpop.f32.mrb[0].mxu0
    %1039 = vmatprep.mubr.f32.mxu0 0.0
    %1040 = vmatmul.mubr.f32.gmra.mrb[0].mxu0 %v880
    %v1041 = vpop.f32.mrb[0].mxu0
    %v1042 = vadd.f32 0.0, %v1041
    %v1043 = vpop.f32.mrb[0].mxu0
    %1044 = vmatprep.mubr.f32.mxu0 0.0
    %1045 = vmatmul.mubr.f32.gmra.mrb[0].mxu0 %v883
    %v1046 = vpop.f32.mrb[0].mxu0
    %v1047 = vadd.f32 0.0, %v1046
    %v1048 = vpop.f32.mrb[0].mxu0
    %1049 = vdwg.mxu0
    %v1050 = vsub.f32 %v1002, %v952
    %v1051 = vsub.f32 %v1007, %v957
    %v1052 = vsub.f32 %v1012, %v962
    %v1053 = vsub.f32 %v1017, %v967
    %v1054 = vsub.f32 %v1022, %v972
    %v1055 = vsub.f32 %v1027, %v977
    %v1056 = vsub.f32 %v1032, %v982
    %v1057 = vsub.f32 %v1037, %v987
    %v1058 = vsub.f32 %v1042, %v992
    %v1059 = vsub.f32 %v1047, %v997
    %v1060 = vmul.f32 %v1050, 1.442695
    %v1061 = vpow.pop %v1060
    %v1062 = vmul.f32 %v1051, 1.442695
    %v1063 = vpow.pop %v1062
    %v1064 = vmul.f32 %v1052, 1.442695
    %v1065 = vpow.pop %v1064
    %v1066 = vmul.f32 %v1053, 1.442695
    %v1067 = vpow.pop %v1066
    %v1068 = vmul.f32 %v1054, 1.442695
    %v1069 = vpow.pop %v1068
    %v1070 = vmul.f32 %v1055, 1.442695
    %v1071 = vpow.pop %v1070
    %v1072 = vmul.f32 %v1056, 1.442695
    %v1073 = vpow.pop %v1072
    %v1074 = vmul.f32 %v1057, 1.442695
    %v1075 = vpow.pop %v1074
    %v1076 = vmul.f32 %v1058, 1.442695
    %v1077 = vpow.pop %v1076
    %v1078 = vmul.f32 %v1059, 1.442695
    %v1079 = vpow.pop %v1078
    %v1080 = vadd.f32 %v1061, 1.0
    %v1081 = vadd.f32 %v1063, 1.0
    %v1082 = vadd.f32 %v1065, 1.0
    %v1083 = vadd.f32 %v1067, 1.0
    %v1084 = vadd.f32 %v1069, 1.0
    %v1085 = vadd.f32 %v1071, 1.0
    %v1086 = vadd.f32 %v1073, 1.0
    %v1087 = vadd.f32 %v1075, 1.0
    %v1088 = vadd.f32 %v1077, 1.0
    %v1089 = vadd.f32 %v1079, 1.0
    %v1090 = vrcp.pop %v1080
    %v1091 = vmul.f32 1.0, %v1090
    %v1092 = vrcp.pop %v1081
    %v1093 = vmul.f32 1.0, %v1092
    %v1094 = vrcp.pop %v1082
    %v1095 = vmul.f32 1.0, %v1094
    %v1096 = vrcp.pop %v1083
    %v1097 = vmul.f32 1.0, %v1096
    %v1098 = vrcp.pop %v1084
    %v1099 = vmul.f32 1.0, %v1098
    %v1100 = vrcp.pop %v1085
    %v1101 = vmul.f32 1.0, %v1100
    %v1102 = vrcp.pop %v1086
    %v1103 = vmul.f32 1.0, %v1102
    %v1104 = vrcp.pop %v1087
    %v1105 = vmul.f32 1.0, %v1104
    %v1106 = vrcp.pop %v1088
    %v1107 = vmul.f32 1.0, %v1106
    %v1108 = vrcp.pop %v1089
    %v1109 = vmul.f32 1.0, %v1108
    %v1110 = vmul.f32 %v1091, %v554
    %v1111 = vmul.f32 %v1093, %v560
    %v1112 = vmul.f32 %v1095, %v566
    %v1113 = vmul.f32 %v1097, %v572
    %v1114 = vmul.f32 %v1099, %v578
    %v1115 = vmul.f32 %v1101, %v584
    %v1116 = vmul.f32 %v1103, %v590
    %v1117 = vmul.f32 %v1105, %v596
    %v1118 = vmul.f32 %v1107, %v602
    %v1119 = vmul.f32 %v1109, %v608
    %v1120 = vsub.f32 1.0, %v1091
    %v1121 = vsub.f32 1.0, %v1093
    %v1122 = vsub.f32 1.0, %v1095
    %v1123 = vsub.f32 1.0, %v1097
    %v1124 = vsub.f32 1.0, %v1099
    %v1125 = vsub.f32 1.0, %v1101
    %v1126 = vsub.f32 1.0, %v1103
    %v1127 = vsub.f32 1.0, %v1105
    %v1128 = vsub.f32 1.0, %v1107
    %v1129 = vsub.f32 1.0, %v1109
    %v1130 = vmul.f32 %v1120, %v677
    %v1131 = vmul.f32 %v1121, %v682
    %v1132 = vmul.f32 %v1122, %v687
    %v1133 = vmul.f32 %v1123, %v692
    %v1134 = vmul.f32 %v1124, %v697
    %v1135 = vmul.f32 %v1125, %v702
    %v1136 = vmul.f32 %v1126, %v707
    %v1137 = vmul.f32 %v1127, %v712
    %v1138 = vmul.f32 %v1128, %v717
    %v1139 = vmul.f32 %v1129, %v722
    %v1140 = vadd.f32 %v1110, %v1130
    %v1141 = vadd.f32 %v1111, %v1131
    %v1142 = vadd.f32 %v1112, %v1132
    %v1143 = vadd.f32 %v1113, %v1133
    %v1144 = vadd.f32 %v1114, %v1134
    %v1145 = vadd.f32 %v1115, %v1135
    %v1146 = vadd.f32 %v1116, %v1136
    %v1147 = vadd.f32 %v1117, %v1137
    %v1148 = vadd.f32 %v1118, %v1138
    %v1149 = vadd.f32 %v1119, %v1139
    %v1150 = vld [vmem:[%s4] sm:$0xff]
    %v1151 = vld [vmem:[%s4 + $0x8] sm:$0xff]
    %v1152 = vld [vmem:[%s4 + $0x10] sm:$0xff]
    %v1153 = vld [vmem:[%s4 + $0x18] sm:$0xff]
    %v1154 = vld [vmem:[%s4 + $0x20] sm:$0xff]
    %v1155 = vld [vmem:[%s4 + $0x28] sm:$0xff]
    %v1156 = vld [vmem:[%s4 + $0x30] sm:$0xff]
    %v1157 = vld [vmem:[%s4 + $0x38] sm:$0xff]
    %v1159 = vsel %vm105, %v1140, 0
    %v1162 = vsel %vm105, %v1141, 0
    %v1165 = vsel %vm105, %v1142, 0
    %v1168 = vsel %vm105, %v1143, 0
    %v1171 = vsel %vm105, %v1144, 0
    %v1174 = vsel %vm105, %v1145, 0
    %v1177 = vsel %vm105, %v1146, 0
    %v1180 = vsel %vm105, %v1147, 0
    %v1183 = vsel %vm105, %v1148, 0
    %v1186 = vsel %vm105, %v1149, 0
    %1188 = vmatprep.subr.mxu0 0.0
    %1189 = vmatpush1.msra.mxu0 %v1150
    %1190 = vmatprep.subr.mxu0 0.0
    %1191 = vmatpush1.msra.mxu0 %v1151
    %1192 = vmatprep.subr.mxu0 0.0
    %1193 = vmatpush1.msra.mxu0 %v1152
    %1194 = vmatprep.subr.mxu0 0.0
    %1195 = vmatpush1.msra.mxu0 %v1153
    %1196 = vmatprep.subr.mxu0 0.0
    %1197 = vmatpush1.msra.mxu0 %v1154
    %1198 = vmatprep.subr.mxu0 0.0
    %1199 = vmatpush1.msra.mxu0 %v1155
    %1200 = vmatprep.subr.mxu0 0.0
    %1201 = vmatpush1.msra.mxu0 %v1156
    %1202 = vmatprep.subr.mxu0 0.0
    %1203 = vmatpush1.msra.mxu0 %v1157
    %1204 = vmatprep.subr.mxu0 0.0
    %1205 = vmatpush1.msra.mxu0 0.0
    %1206 = vmatprep.subr.mxu0 0.0
    %1207 = vmatpush1.msra.mxu0 0.0
    %1208 = vmatprep.subr.mxu0 0.0
    %1209 = vmatpush1.msra.mxu0 0.0
    %1210 = vmatprep.subr.mxu0 0.0
    %1211 = vmatpush1.msra.mxu0 0.0
    %1212 = vmatprep.subr.mxu0 0.0
    %1213 = vmatpush1.msra.mxu0 0.0
    %1214 = vmatprep.subr.mxu0 0.0
    %1215 = vmatpush1.msra.mxu0 0.0
    %1216 = vmatprep.subr.mxu0 0.0
    %1217 = vmatpush1.msra.mxu0 0.0
    %1218 = vmatprep.subr.mxu0 0.0
    %1219 = vmatpush1.msra.mxu0 0.0
    %1220 = vmatprep.subr.mxu0 0.0
    %1221 = vmatpush1.msra.mxu0 0.0
    %1222 = vmatprep.subr.mxu0 0.0
    %1223 = vmatpush1.msra.mxu0 0.0
    %1224 = vmatprep.subr.mxu0 0.0
    %1225 = vmatpush1.msra.mxu0 0.0
    %1226 = vmatprep.subr.mxu0 0.0
    %1227 = vmatpush1.msra.mxu0 0.0
    %1228 = vmatprep.subr.mxu0 0.0
    %1229 = vmatpush1.msra.mxu0 0.0
    %1230 = vmatprep.subr.mxu0 0.0
    %1231 = vmatpush1.msra.mxu0 0.0
    %1232 = vmatprep.subr.mxu0 0.0
    %1233 = vmatpush1.msra.mxu0 0.0
    %1234 = vmatprep.subr.mxu0 0.0
    %1235 = vmatpush1.msra.mxu0 0.0
    %1236 = vmatprep.subr.mxu0 0.0
    %1237 = vmatpush1.msra.mxu0 0.0
    %1238 = vmatprep.subr.mxu0 0.0
    %1239 = vmatpush1.msra.mxu0 0.0
    %1240 = vmatprep.subr.mxu0 0.0
    %1241 = vmatpush1.msra.mxu0 0.0
    %1242 = vmatprep.subr.mxu0 0.0
    %1243 = vmatpush1.msra.mxu0 0.0
    %1244 = vmatprep.subr.mxu0 0.0
    %1245 = vmatpush1.msra.mxu0 0.0
    %1246 = vmatprep.subr.mxu0 0.0
    %1247 = vmatpush1.msra.mxu0 0.0
    %1248 = vmatprep.subr.mxu0 0.0
    %1249 = vmatpush1.msra.mxu0 0.0
    %1250 = vmatprep.subr.mxu0 0.0
    %1251 = vmatpush1.msra.mxu0 0.0
    %1252 = vmatprep.mubr.f32.mxu0 0.0
    %1253 = vmatmul.mubr.f32.gmra.mrb[0].mxu0 %v1159
    %v1254 = vpop.f32.mrb[0].mxu0
    %v1255 = vadd.f32 0.0, %v1254
    %v1256 = vpop.f32.mrb[0].mxu0
    %1257 = vmatprep.mubr.f32.mxu0 0.0
    %1258 = vmatmul.mubr.f32.gmra.mrb[0].mxu0 %v1162
    %v1259 = vpop.f32.mrb[0].mxu0
    %v1260 = vadd.f32 0.0, %v1259
    %v1261 = vpop.f32.mrb[0].mxu0
    %1262 = vmatprep.mubr.f32.mxu0 0.0
    %1263 = vmatmul.mubr.f32.gmra.mrb[0].mxu0 %v1165
    %v1264 = vpop.f32.mrb[0].mxu0
    %v1265 = vadd.f32 0.0, %v1264
    %v1266 = vpop.f32.mrb[0].mxu0
    %1267 = vmatprep.mubr.f32.mxu0 0.0
    %1268 = vmatmul.mubr.f32.gmra.mrb[0].mxu0 %v1168
    %v1269 = vpop.f32.mrb[0].mxu0
    %v1270 = vadd.f32 0.0, %v1269
    %v1271 = vpop.f32.mrb[0].mxu0
    %1272 = vmatprep.mubr.f32.mxu0 0.0
    %1273 = vmatmul.mubr.f32.gmra.mrb[0].mxu0 %v1171
    %v1274 = vpop.f32.mrb[0].mxu0
    %v1275 = vadd.f32 0.0, %v1274
    %v1276 = vpop.f32.mrb[0].mxu0
    %1277 = vmatprep.mubr.f32.mxu0 0.0
    %1278 = vmatmul.mubr.f32.gmra.mrb[0].mxu0 %v1174
    %v1279 = vpop.f32.mrb[0].mxu0
    %v1280 = vadd.f32 0.0, %v1279
    %v1281 = vpop.f32.mrb[0].mxu0
    %1282 = vmatprep.mubr.f32.mxu0 0.0
    %1283 = vmatmul.mubr.f32.gmra.mrb[0].mxu0 %v1177
    %v1284 = vpop.f32.mrb[0].mxu0
    %v1285 = vadd.f32 0.0, %v1284
    %v1286 = vpop.f32.mrb[0].mxu0
    %1287 = vmatprep.mubr.f32.mxu0 0.0
    %1288 = vmatmul.mubr.f32.gmra.mrb[0].mxu0 %v1180
    %v1289 = vpop.f32.mrb[0].mxu0
    %v1290 = vadd.f32 0.0, %v1289
    %v1291 = vpop.f32.mrb[0].mxu0
    %1292 = vmatprep.mubr.f32.mxu0 0.0
    %1293 = vmatmul.mubr.f32.gmra.mrb[0].mxu0 %v1183
    %v1294 = vpop.f32.mrb[0].mxu0
    %v1295 = vadd.f32 0.0, %v1294
    %v1296 = vpop.f32.mrb[0].mxu0
    %1297 = vmatprep.mubr.f32.mxu0 0.0
    %1298 = vmatmul.mubr.f32.gmra.mrb[0].mxu0 %v1186
    %v1299 = vpop.f32.mrb[0].mxu0
    %v1300 = vadd.f32 0.0, %v1299
    %v1301 = vpop.f32.mrb[0].mxu0
    %1302 = vdwg.mxu0
    %v1303 = vadd.f32 %v82, %v1255
    %v1304 = vadd.f32 %v83, %v1260
    %v1305 = vadd.f32 %v84, %v1265
    %v1306 = vadd.f32 %v85, %v1270
    %v1307 = vadd.f32 %v86, %v1275
    %v1308 = vadd.f32 %v87, %v1280
    %v1309 = vadd.f32 %v88, %v1285
    %v1310 = vadd.f32 %v89, %v1290
    %v1311 = vadd.f32 %v90, %v1295
    %v1312 = vadd.f32 %v91, %v1300
    %v1313 = vlaneseq
    %v1314 = vshrl.u32 %v1313, 7
    %v1315 = vsub.s32 3, %v1314
    %v1316 = vrot.slane %v92, %v1315
    %v1317 = vadd.f32 %v1303, %v1316
    %v1318 = vadd.f32 %v1304, %v1316
    %v1319 = vadd.f32 %v1305, %v1316
    %v1320 = vadd.f32 %v1306, %v1316
    %v1321 = vadd.f32 %v1307, %v1316
    %v1322 = vadd.f32 %v1308, %v1316
    %v1323 = vadd.f32 %v1309, %v1316
    %v1324 = vadd.f32 %v1310, %v1316
    %v1325 = vadd.f32 %v1311, %v1316
    %v1326 = vadd.f32 %v1312, %v1316
    %v1327 = vmul.f32 %v1317, %v1317
    %v1328 = vmul.f32 %v1318, %v1318
    %v1329 = vmul.f32 %v1319, %v1319
    %v1330 = vmul.f32 %v1320, %v1320
    %v1331 = vmul.f32 %v1321, %v1321
    %v1332 = vmul.f32 %v1322, %v1322
    %v1333 = vmul.f32 %v1323, %v1323
    %v1334 = vmul.f32 %v1324, %v1324
    %v1335 = vmul.f32 %v1325, %v1325
    %v1336 = vmul.f32 %v1326, %v1326
    %v1338 = vsel %vm105, %v1317, 0
    %v1341 = vsel %vm105, %v1318, 0
    %v1344 = vsel %vm105, %v1319, 0
    %v1347 = vsel %vm105, %v1320, 0
    %v1350 = vsel %vm105, %v1321, 0
    %v1353 = vsel %vm105, %v1322, 0
    %v1356 = vsel %vm105, %v1323, 0
    %v1359 = vsel %vm105, %v1324, 0
    %v1362 = vsel %vm105, %v1325, 0
    %v1365 = vsel %vm105, %v1326, 0
    %v1368 = vsel %vm105, %v1327, 0
    %v1371 = vsel %vm105, %v1328, 0
    %v1374 = vsel %vm105, %v1329, 0
    %v1377 = vsel %vm105, %v1330, 0
    %v1380 = vsel %vm105, %v1331, 0
    %v1383 = vsel %vm105, %v1332, 0
    %v1386 = vsel %vm105, %v1333, 0
    %v1389 = vsel %vm105, %v1334, 0
    %v1392 = vsel %vm105, %v1335, 0
    %v1395 = vsel %vm105, %v1336, 0
    %1397 = vmatprep.subr.mxu0 0.0
    %1398 = vmatpush1.msra.mxu0 %v46
    %1399 = vmatprep.subr.mxu0 0.0
    %1400 = vmatpush1.msra.mxu0 %v47
    %1401 = vmatprep.subr.mxu0 0.0
    %1402 = vmatpush1.msra.mxu0 %v48
    %1403 = vmatprep.subr.mxu0 0.0
    %1404 = vmatpush1.msra.mxu0 %v49
    %1405 = vmatprep.subr.mxu0 0.0
    %1406 = vmatpush1.msra.mxu0 %v50
    %1407 = vmatprep.subr.mxu0 0.0
    %1408 = vmatpush1.msra.mxu0 %v51
    %1409 = vmatprep.subr.mxu0 0.0
    %1410 = vmatpush1.msra.mxu0 %v52
    %1411 = vmatprep.subr.mxu0 0.0
    %1412 = vmatpush1.msra.mxu0 %v53
    %1413 = vmatprep.subr.mxu0 0.0
    %1414 = vmatpush1.msra.mxu0 0.0
    %1415 = vmatprep.subr.mxu0 0.0
    %1416 = vmatpush1.msra.mxu0 0.0
    %1417 = vmatprep.subr.mxu0 0.0
    %1418 = vmatpush1.msra.mxu0 0.0
    %1419 = vmatprep.subr.mxu0 0.0
    %1420 = vmatpush1.msra.mxu0 0.0
    %1421 = vmatprep.subr.mxu0 0.0
    %1422 = vmatpush1.msra.mxu0 0.0
    %1423 = vmatprep.subr.mxu0 0.0
    %1424 = vmatpush1.msra.mxu0 0.0
    %1425 = vmatprep.subr.mxu0 0.0
    %1426 = vmatpush1.msra.mxu0 0.0
    %1427 = vmatprep.subr.mxu0 0.0
    %1428 = vmatpush1.msra.mxu0 0.0
    %1429 = vmatprep.subr.mxu0 0.0
    %1430 = vmatpush1.msra.mxu0 0.0
    %1431 = vmatprep.subr.mxu0 0.0
    %1432 = vmatpush1.msra.mxu0 0.0
    %1433 = vmatprep.subr.mxu0 0.0
    %1434 = vmatpush1.msra.mxu0 0.0
    %1435 = vmatprep.subr.mxu0 0.0
    %1436 = vmatpush1.msra.mxu0 0.0
    %1437 = vmatprep.subr.mxu0 0.0
    %1438 = vmatpush1.msra.mxu0 0.0
    %1439 = vmatprep.subr.mxu0 0.0
    %1440 = vmatpush1.msra.mxu0 0.0
    %1441 = vmatprep.subr.mxu0 0.0
    %1442 = vmatpush1.msra.mxu0 0.0
    %1443 = vmatprep.subr.mxu0 0.0
    %1444 = vmatpush1.msra.mxu0 0.0
    %1445 = vmatprep.subr.mxu0 0.0
    %1446 = vmatpush1.msra.mxu0 0.0
    %1447 = vmatprep.subr.mxu0 0.0
    %1448 = vmatpush1.msra.mxu0 0.0
    %1449 = vmatprep.subr.mxu0 0.0
    %1450 = vmatpush1.msra.mxu0 0.0
    %1451 = vmatprep.subr.mxu0 0.0
    %1452 = vmatpush1.msra.mxu0 0.0
    %1453 = vmatprep.subr.mxu0 0.0
    %1454 = vmatpush1.msra.mxu0 0.0
    %1455 = vmatprep.subr.mxu0 0.0
    %1456 = vmatpush1.msra.mxu0 0.0
    %1457 = vmatprep.subr.mxu0 0.0
    %1458 = vmatpush1.msra.mxu0 0.0
    %1459 = vmatprep.subr.mxu0 0.0
    %1460 = vmatpush1.msra.mxu0 0.0
    %1461 = vmatprep.mubr.f32.mxu0 0.0
    %1462 = vmatmul.mubr.f32.gmra.mrb[0].mxu0 %v1338
    %v1463 = vpop.f32.mrb[0].mxu0
    %v1464 = vadd.f32 0.0, %v1463
    %v1465 = vpop.f32.mrb[0].mxu0
    %1466 = vmatprep.mubr.f32.mxu0 0.0
    %1467 = vmatmul.mubr.f32.gmra.mrb[0].mxu0 %v1341
    %v1468 = vpop.f32.mrb[0].mxu0
    %v1469 = vadd.f32 0.0, %v1468
    %v1470 = vpop.f32.mrb[0].mxu0
    %1471 = vmatprep.mubr.f32.mxu0 0.0
    %1472 = vmatmul.mubr.f32.gmra.mrb[0].mxu0 %v1344
    %v1473 = vpop.f32.mrb[0].mxu0
    %v1474 = vadd.f32 0.0, %v1473
    %v1475 = vpop.f32.mrb[0].mxu0
    %1476 = vmatprep.mubr.f32.mxu0 0.0
    %1477 = vmatmul.mubr.f32.gmra.mrb[0].mxu0 %v1347
    %v1478 = vpop.f32.mrb[0].mxu0
    %v1479 = vadd.f32 0.0, %v1478
    %v1480 = vpop.f32.mrb[0].mxu0
    %1481 = vmatprep.mubr.f32.mxu0 0.0
    %1482 = vmatmul.mubr.f32.gmra.mrb[0].mxu0 %v1350
    %v1483 = vpop.f32.mrb[0].mxu0
    %v1484 = vadd.f32 0.0, %v1483
    %v1485 = vpop.f32.mrb[0].mxu0
    %1486 = vmatprep.mubr.f32.mxu0 0.0
    %1487 = vmatmul.mubr.f32.gmra.mrb[0].mxu0 %v1353
    %v1488 = vpop.f32.mrb[0].mxu0
    %v1489 = vadd.f32 0.0, %v1488
    %v1490 = vpop.f32.mrb[0].mxu0
    %1491 = vmatprep.mubr.f32.mxu0 0.0
    %1492 = vmatmul.mubr.f32.gmra.mrb[0].mxu0 %v1356
    %v1493 = vpop.f32.mrb[0].mxu0
    %v1494 = vadd.f32 0.0, %v1493
    %v1495 = vpop.f32.mrb[0].mxu0
    %1496 = vmatprep.mubr.f32.mxu0 0.0
    %1497 = vmatmul.mubr.f32.gmra.mrb[0].mxu0 %v1359
    %v1498 = vpop.f32.mrb[0].mxu0
    %v1499 = vadd.f32 0.0, %v1498
    %v1500 = vpop.f32.mrb[0].mxu0
    %1501 = vmatprep.mubr.f32.mxu0 0.0
    %1502 = vmatmul.mubr.f32.gmra.mrb[0].mxu0 %v1362
    %v1503 = vpop.f32.mrb[0].mxu0
    %v1504 = vadd.f32 0.0, %v1503
    %v1505 = vpop.f32.mrb[0].mxu0
    %1506 = vmatprep.mubr.f32.mxu0 0.0
    %1507 = vmatmul.mubr.f32.gmra.mrb[0].mxu0 %v1365
    %v1508 = vpop.f32.mrb[0].mxu0
    %v1509 = vadd.f32 0.0, %v1508
    %v1510 = vpop.f32.mrb[0].mxu0
    %1511 = vmatprep.mubr.f32.mxu0 0.0
    %1512 = vmatmul.mubr.f32.gmra.mrb[0].mxu0 %v1368
    %v1513 = vpop.f32.mrb[0].mxu0
    %v1514 = vadd.f32 0.0, %v1513
    %v1515 = vpop.f32.mrb[0].mxu0
    %1516 = vmatprep.mubr.f32.mxu0 0.0
    %1517 = vmatmul.mubr.f32.gmra.mrb[0].mxu0 %v1371
    %v1518 = vpop.f32.mrb[0].mxu0
    %v1519 = vadd.f32 0.0, %v1518
    %v1520 = vpop.f32.mrb[0].mxu0
    %1521 = vmatprep.mubr.f32.mxu0 0.0
    %1522 = vmatmul.mubr.f32.gmra.mrb[0].mxu0 %v1374
    %v1523 = vpop.f32.mrb[0].mxu0
    %v1524 = vadd.f32 0.0, %v1523
    %v1525 = vpop.f32.mrb[0].mxu0
    %1526 = vmatprep.mubr.f32.mxu0 0.0
    %1527 = vmatmul.mubr.f32.gmra.mrb[0].mxu0 %v1377
    %v1528 = vpop.f32.mrb[0].mxu0
    %v1529 = vadd.f32 0.0, %v1528
    %v1530 = vpop.f32.mrb[0].mxu0
    %1531 = vmatprep.mubr.f32.mxu0 0.0
    %1532 = vmatmul.mubr.f32.gmra.mrb[0].mxu0 %v1380
    %v1533 = vpop.f32.mrb[0].mxu0
    %v1534 = vadd.f32 0.0, %v1533
    %v1535 = vpop.f32.mrb[0].mxu0
    %1536 = vmatprep.mubr.f32.mxu0 0.0
    %1537 = vmatmul.mubr.f32.gmra.mrb[0].mxu0 %v1383
    %v1538 = vpop.f32.mrb[0].mxu0
    %v1539 = vadd.f32 0.0, %v1538
    %v1540 = vpop.f32.mrb[0].mxu0
    %1541 = vmatprep.mubr.f32.mxu0 0.0
    %1542 = vmatmul.mubr.f32.gmra.mrb[0].mxu0 %v1386
    %v1543 = vpop.f32.mrb[0].mxu0
    %v1544 = vadd.f32 0.0, %v1543
    %v1545 = vpop.f32.mrb[0].mxu0
    %1546 = vmatprep.mubr.f32.mxu0 0.0
    %1547 = vmatmul.mubr.f32.gmra.mrb[0].mxu0 %v1389
    %v1548 = vpop.f32.mrb[0].mxu0
    %v1549 = vadd.f32 0.0, %v1548
    %v1550 = vpop.f32.mrb[0].mxu0
    %1551 = vmatprep.mubr.f32.mxu0 0.0
    %1552 = vmatmul.mubr.f32.gmra.mrb[0].mxu0 %v1392
    %v1553 = vpop.f32.mrb[0].mxu0
    %v1554 = vadd.f32 0.0, %v1553
    %v1555 = vpop.f32.mrb[0].mxu0
    %1556 = vmatprep.mubr.f32.mxu0 0.0
    %1557 = vmatmul.mubr.f32.gmra.mrb[0].mxu0 %v1395
    %v1558 = vpop.f32.mrb[0].mxu0
    %v1559 = vadd.f32 0.0, %v1558
    %v1560 = vpop.f32.mrb[0].mxu0
    %1561 = vdwg.mxu0
    %v1562 = vmul.f32 %v1464, %v1464
    %v1563 = vmul.f32 %v1469, %v1469
    %v1564 = vmul.f32 %v1474, %v1474
    %v1565 = vmul.f32 %v1479, %v1479
    %v1566 = vmul.f32 %v1484, %v1484
    %v1567 = vmul.f32 %v1489, %v1489
    %v1568 = vmul.f32 %v1494, %v1494
    %v1569 = vmul.f32 %v1499, %v1499
    %v1570 = vmul.f32 %v1504, %v1504
    %v1571 = vmul.f32 %v1509, %v1509
    %v1572 = vsub.f32 %v1514, %v1562
    %v1573 = vsub.f32 %v1519, %v1563
    %v1574 = vsub.f32 %v1524, %v1564
    %v1575 = vsub.f32 %v1529, %v1565
    %v1576 = vsub.f32 %v1534, %v1566
    %v1577 = vsub.f32 %v1539, %v1567
    %v1578 = vsub.f32 %v1544, %v1568
    %v1579 = vsub.f32 %v1549, %v1569
    %v1580 = vsub.f32 %v1554, %v1570
    %v1581 = vsub.f32 %v1559, %v1571
    %v1582 = vsub.f32 %v1317, %v1464
    %v1583 = vsub.f32 %v1318, %v1469
    %v1584 = vsub.f32 %v1319, %v1474
    %v1585 = vsub.f32 %v1320, %v1479
    %v1586 = vsub.f32 %v1321, %v1484
    %v1587 = vsub.f32 %v1322, %v1489
    %v1588 = vsub.f32 %v1323, %v1494
    %v1589 = vsub.f32 %v1324, %v1499
    %v1590 = vsub.f32 %v1325, %v1504
    %v1591 = vsub.f32 %v1326, %v1509
    %v1592 = vadd.f32 %v1572, 1e-05
    %v1593 = vadd.f32 %v1573, 1e-05
    %v1594 = vadd.f32 %v1574, 1e-05
    %v1595 = vadd.f32 %v1575, 1e-05
    %v1596 = vadd.f32 %v1576, 1e-05
    %v1597 = vadd.f32 %v1577, 1e-05
    %v1598 = vadd.f32 %v1578, 1e-05
    %v1599 = vadd.f32 %v1579, 1e-05
    %v1600 = vadd.f32 %v1580, 1e-05
    %v1601 = vadd.f32 %v1581, 1e-05
    %v1602 = vrsqrt.pop %v1592
    %v1603 = vrsqrt.pop %v1593
    %v1604 = vrsqrt.pop %v1594
    %v1605 = vrsqrt.pop %v1595
    %v1606 = vrsqrt.pop %v1596
    %v1607 = vrsqrt.pop %v1597
    %v1608 = vrsqrt.pop %v1598
    %v1609 = vrsqrt.pop %v1599
    %v1610 = vrsqrt.pop %v1600
    %v1611 = vrsqrt.pop %v1601
    %v1612 = vmul.f32 %v1582, %v1602
    %v1613 = vmul.f32 %v1583, %v1603
    %v1614 = vmul.f32 %v1584, %v1604
    %v1615 = vmul.f32 %v1585, %v1605
    %v1616 = vmul.f32 %v1586, %v1606
    %v1617 = vmul.f32 %v1587, %v1607
    %v1618 = vmul.f32 %v1588, %v1608
    %v1619 = vmul.f32 %v1589, %v1609
    %v1620 = vmul.f32 %v1590, %v1610
    %v1621 = vmul.f32 %v1591, %v1611
    %v1622 = vlaneseq
    %v1623 = vshrl.u32 %v1622, 7
    %v1624 = vsub.s32 4, %v1623
    %v1625 = vrot.slane %v92, %v1624
    %v1626 = vmul.f32 %v1612, %v1625
    %v1627 = vmul.f32 %v1613, %v1625
    %v1628 = vmul.f32 %v1614, %v1625
    %v1629 = vmul.f32 %v1615, %v1625
    %v1630 = vmul.f32 %v1616, %v1625
    %v1631 = vmul.f32 %v1617, %v1625
    %v1632 = vmul.f32 %v1618, %v1625
    %v1633 = vmul.f32 %v1619, %v1625
    %v1634 = vmul.f32 %v1620, %v1625
    %v1635 = vmul.f32 %v1621, %v1625
    %v1636 = vlaneseq
    %v1637 = vshrl.u32 %v1636, 7
    %v1638 = vsub.s32 5, %v1637
    %v1639 = vrot.slane %v92, %v1638
    %v1640 = vadd.f32 %v1626, %v1639
    %v1641 = vadd.f32 %v1627, %v1639
    %v1642 = vadd.f32 %v1628, %v1639
    %v1643 = vadd.f32 %v1629, %v1639
    %v1644 = vadd.f32 %v1630, %v1639
    %v1645 = vadd.f32 %v1631, %v1639
    %v1646 = vadd.f32 %v1632, %v1639
    %v1647 = vadd.f32 %v1633, %v1639
    %v1648 = vadd.f32 %v1634, %v1639
    %v1649 = vadd.f32 %v1635, %v1639
    %v1650 = vld [vmem:[%s5] sm:$0xff]
    %v1651 = vld [vmem:[%s5 + $0x8] sm:$0xff]
    %v1652 = vld [vmem:[%s5 + $0x10] sm:$0xff]
    %v1653 = vld [vmem:[%s5 + $0x18] sm:$0xff]
    %v1654 = vld [vmem:[%s5 + $0x20] sm:$0xff]
    %v1655 = vld [vmem:[%s5 + $0x28] sm:$0xff]
    %v1656 = vld [vmem:[%s5 + $0x30] sm:$0xff]
    %v1657 = vld [vmem:[%s5 + $0x38] sm:$0xff]
    %v1658 = vld [vmem:[%s5 + $0x40] sm:$0xff]
    %v1659 = vld [vmem:[%s5 + $0x48] sm:$0xff]
    %v1660 = vld [vmem:[%s5 + $0x50] sm:$0xff]
    %v1661 = vld [vmem:[%s5 + $0x58] sm:$0xff]
    %v1662 = vld [vmem:[%s5 + $0x60] sm:$0xff]
    %v1663 = vld [vmem:[%s5 + $0x68] sm:$0xff]
    %v1664 = vld [vmem:[%s5 + $0x70] sm:$0xff]
    %v1665 = vld [vmem:[%s5 + $0x78] sm:$0xff]
    %v1666 = vlaneseq
    %v1667 = vshrl.u32 %v1666, 7
    %v1668 = vsub.s32 6, %v1667
    %v1669 = vrot.slane %v92, %v1668
    %v1670 = vlaneseq
    %v1671 = vshrl.u32 %v1670, 7
    %v1672 = vsub.s32 6, %v1671
    %v1673 = vrot.slane %v93, %v1672
    %v1675 = vsel %vm105, %v1640, 0
    %v1678 = vsel %vm105, %v1641, 0
    %v1681 = vsel %vm105, %v1642, 0
    %v1684 = vsel %vm105, %v1643, 0
    %v1687 = vsel %vm105, %v1644, 0
    %v1690 = vsel %vm105, %v1645, 0
    %v1693 = vsel %vm105, %v1646, 0
    %v1696 = vsel %vm105, %v1647, 0
    %v1699 = vsel %vm105, %v1648, 0
    %v1702 = vsel %vm105, %v1649, 0
    %1704 = vmatprep.subr.mxu0 %v1651
    %1705 = vmatpush1.msra.mxu0 %v1650
    %1706 = vmatprep.subr.mxu0 %v1653
    %1707 = vmatpush1.msra.mxu0 %v1652
    %1708 = vmatprep.subr.mxu0 %v1655
    %1709 = vmatpush1.msra.mxu0 %v1654
    %1710 = vmatprep.subr.mxu0 %v1657
    %1711 = vmatpush1.msra.mxu0 %v1656
    %1712 = vmatprep.subr.mxu0 %v1659
    %1713 = vmatpush1.msra.mxu0 %v1658
    %1714 = vmatprep.subr.mxu0 %v1661
    %1715 = vmatpush1.msra.mxu0 %v1660
    %1716 = vmatprep.subr.mxu0 %v1663
    %1717 = vmatpush1.msra.mxu0 %v1662
    %1718 = vmatprep.subr.mxu0 %v1665
    %1719 = vmatpush1.msra.mxu0 %v1664
    %1720 = vmatprep.subr.mxu0 0.0
    %1721 = vmatpush1.msra.mxu0 0.0
    %1722 = vmatprep.subr.mxu0 0.0
    %1723 = vmatpush1.msra.mxu0 0.0
    %1724 = vmatprep.subr.mxu0 0.0
    %1725 = vmatpush1.msra.mxu0 0.0
    %1726 = vmatprep.subr.mxu0 0.0
    %1727 = vmatpush1.msra.mxu0 0.0
    %1728 = vmatprep.subr.mxu0 0.0
    %1729 = vmatpush1.msra.mxu0 0.0
    %1730 = vmatprep.subr.mxu0 0.0
    %1731 = vmatpush1.msra.mxu0 0.0
    %1732 = vmatprep.subr.mxu0 0.0
    %1733 = vmatpush1.msra.mxu0 0.0
    %1734 = vmatprep.subr.mxu0 0.0
    %1735 = vmatpush1.msra.mxu0 0.0
    %1736 = vmatprep.subr.mxu0 0.0
    %1737 = vmatpush1.msra.mxu0 0.0
    %1738 = vmatprep.subr.mxu0 0.0
    %1739 = vmatpush1.msra.mxu0 0.0
    %1740 = vmatprep.subr.mxu0 0.0
    %1741 = vmatpush1.msra.mxu0 0.0
    %1742 = vmatprep.subr.mxu0 0.0
    %1743 = vmatpush1.msra.mxu0 0.0
    %1744 = vmatprep.subr.mxu0 0.0
    %1745 = vmatpush1.msra.mxu0 0.0
    %1746 = vmatprep.subr.mxu0 0.0
    %1747 = vmatpush1.msra.mxu0 0.0
    %1748 = vmatprep.subr.mxu0 0.0
    %1749 = vmatpush1.msra.mxu0 0.0
    %1750 = vmatprep.subr.mxu0 0.0
    %1751 = vmatpush1.msra.mxu0 0.0
    %1752 = vmatprep.subr.mxu0 0.0
    %1753 = vmatpush1.msra.mxu0 0.0
    %1754 = vmatprep.subr.mxu0 0.0
    %1755 = vmatpush1.msra.mxu0 0.0
    %1756 = vmatprep.subr.mxu0 0.0
    %1757 = vmatpush1.msra.mxu0 0.0
    %1758 = vmatprep.subr.mxu0 0.0
    %1759 = vmatpush1.msra.mxu0 0.0
    %1760 = vmatprep.subr.mxu0 0.0
    %1761 = vmatpush1.msra.mxu0 0.0
    %1762 = vmatprep.subr.mxu0 0.0
    %1763 = vmatpush1.msra.mxu0 0.0
    %1764 = vmatprep.subr.mxu0 0.0
    %1765 = vmatpush1.msra.mxu0 0.0
    %1766 = vmatprep.subr.mxu0 0.0
    %1767 = vmatpush1.msra.mxu0 0.0
    %1768 = vmatprep.mubr.f32.mxu0 0.0
    %1769 = vmatmul.mubr.f32.gmra.mrb[0].mxu0 %v1675
    %v1770 = vpop.f32.mrb[0].mxu0
    %v1771 = vadd.f32 %v1669, %v1770
    %v1772 = vpop.f32.mrb[0].mxu0
    %v1773 = vadd.f32 %v1673, %v1772
    %1774 = vmatprep.mubr.f32.mxu0 0.0
    %1775 = vmatmul.mubr.f32.gmra.mrb[0].mxu0 %v1678
    %v1776 = vpop.f32.mrb[0].mxu0
    %v1777 = vadd.f32 %v1669, %v1776
    %v1778 = vpop.f32.mrb[0].mxu0
    %v1779 = vadd.f32 %v1673, %v1778
    %1780 = vmatprep.mubr.f32.mxu0 0.0
    %1781 = vmatmul.mubr.f32.gmra.mrb[0].mxu0 %v1681
    %v1782 = vpop.f32.mrb[0].mxu0
    %v1783 = vadd.f32 %v1669, %v1782
    %v1784 = vpop.f32.mrb[0].mxu0
    %v1785 = vadd.f32 %v1673, %v1784
    %1786 = vmatprep.mubr.f32.mxu0 0.0
    %1787 = vmatmul.mubr.f32.gmra.mrb[0].mxu0 %v1684
    %v1788 = vpop.f32.mrb[0].mxu0
    %v1789 = vadd.f32 %v1669, %v1788
    %v1790 = vpop.f32.mrb[0].mxu0
    %v1791 = vadd.f32 %v1673, %v1790
    %1792 = vmatprep.mubr.f32.mxu0 0.0
    %1793 = vmatmul.mubr.f32.gmra.mrb[0].mxu0 %v1687
    %v1794 = vpop.f32.mrb[0].mxu0
    %v1795 = vadd.f32 %v1669, %v1794
    %v1796 = vpop.f32.mrb[0].mxu0
    %v1797 = vadd.f32 %v1673, %v1796
    %1798 = vmatprep.mubr.f32.mxu0 0.0
    %1799 = vmatmul.mubr.f32.gmra.mrb[0].mxu0 %v1690
    %v1800 = vpop.f32.mrb[0].mxu0
    %v1801 = vadd.f32 %v1669, %v1800
    %v1802 = vpop.f32.mrb[0].mxu0
    %v1803 = vadd.f32 %v1673, %v1802
    %1804 = vmatprep.mubr.f32.mxu0 0.0
    %1805 = vmatmul.mubr.f32.gmra.mrb[0].mxu0 %v1693
    %v1806 = vpop.f32.mrb[0].mxu0
    %v1807 = vadd.f32 %v1669, %v1806
    %v1808 = vpop.f32.mrb[0].mxu0
    %v1809 = vadd.f32 %v1673, %v1808
    %1810 = vmatprep.mubr.f32.mxu0 0.0
    %1811 = vmatmul.mubr.f32.gmra.mrb[0].mxu0 %v1696
    %v1812 = vpop.f32.mrb[0].mxu0
    %v1813 = vadd.f32 %v1669, %v1812
    %v1814 = vpop.f32.mrb[0].mxu0
    %v1815 = vadd.f32 %v1673, %v1814
    %1816 = vmatprep.mubr.f32.mxu0 0.0
    %1817 = vmatmul.mubr.f32.gmra.mrb[0].mxu0 %v1699
    %v1818 = vpop.f32.mrb[0].mxu0
    %v1819 = vadd.f32 %v1669, %v1818
    %v1820 = vpop.f32.mrb[0].mxu0
    %v1821 = vadd.f32 %v1673, %v1820
    %1822 = vmatprep.mubr.f32.mxu0 0.0
    %1823 = vmatmul.mubr.f32.gmra.mrb[0].mxu0 %v1702
    %v1824 = vpop.f32.mrb[0].mxu0
    %v1825 = vadd.f32 %v1669, %v1824
    %v1826 = vpop.f32.mrb[0].mxu0
    %v1827 = vadd.f32 %v1673, %v1826
    %1828 = vdwg.mxu0
    %v1829 = vmul.f32 %v1771, 0.5
    %v1830 = vmul.f32 %v1773, 0.5
    %v1831 = vmul.f32 %v1777, 0.5
    %v1832 = vmul.f32 %v1779, 0.5
    %v1833 = vmul.f32 %v1783, 0.5
    %v1834 = vmul.f32 %v1785, 0.5
    %v1835 = vmul.f32 %v1789, 0.5
    %v1836 = vmul.f32 %v1791, 0.5
    %v1837 = vmul.f32 %v1795, 0.5
    %v1838 = vmul.f32 %v1797, 0.5
    %v1839 = vmul.f32 %v1801, 0.5
    %v1840 = vmul.f32 %v1803, 0.5
    %v1841 = vmul.f32 %v1807, 0.5
    %v1842 = vmul.f32 %v1809, 0.5
    %v1843 = vmul.f32 %v1813, 0.5
    %v1844 = vmul.f32 %v1815, 0.5
    %v1845 = vmul.f32 %v1819, 0.5
    %v1846 = vmul.f32 %v1821, 0.5
    %v1847 = vmul.f32 %v1825, 0.5
    %v1848 = vmul.f32 %v1827, 0.5
    %v1849 = vmul.f32 %v1771, 0.70710677
    %v1850 = vmul.f32 %v1773, 0.70710677
    %v1851 = vmul.f32 %v1777, 0.70710677
    %v1852 = vmul.f32 %v1779, 0.70710677
    %v1853 = vmul.f32 %v1783, 0.70710677
    %v1854 = vmul.f32 %v1785, 0.70710677
    %v1855 = vmul.f32 %v1789, 0.70710677
    %v1856 = vmul.f32 %v1791, 0.70710677
    %v1857 = vmul.f32 %v1795, 0.70710677
    %v1858 = vmul.f32 %v1797, 0.70710677
    %v1859 = vmul.f32 %v1801, 0.70710677
    %v1860 = vmul.f32 %v1803, 0.70710677
    %v1861 = vmul.f32 %v1807, 0.70710677
    %v1862 = vmul.f32 %v1809, 0.70710677
    %v1863 = vmul.f32 %v1813, 0.70710677
    %v1864 = vmul.f32 %v1815, 0.70710677
    %v1865 = vmul.f32 %v1819, 0.70710677
    %v1866 = vmul.f32 %v1821, 0.70710677
    %v1867 = vmul.f32 %v1825, 0.70710677
    %v1868 = vmul.f32 %v1827, 0.70710677
    %v1869 = verf.f32.pop %v1849
    %v1870 = verf.f32.pop %v1850
    %v1871 = verf.f32.pop %v1851
    %v1872 = verf.f32.pop %v1852
    %v1873 = verf.f32.pop %v1853
    %v1874 = verf.f32.pop %v1854
    %v1875 = verf.f32.pop %v1855
    %v1876 = verf.f32.pop %v1856
    %v1877 = verf.f32.pop %v1857
    %v1878 = verf.f32.pop %v1858
    %v1879 = verf.f32.pop %v1859
    %v1880 = verf.f32.pop %v1860
    %v1881 = verf.f32.pop %v1861
    %v1882 = verf.f32.pop %v1862
    %v1883 = verf.f32.pop %v1863
    %v1884 = verf.f32.pop %v1864
    %v1885 = verf.f32.pop %v1865
    %v1886 = verf.f32.pop %v1866
    %v1887 = verf.f32.pop %v1867
    %v1888 = verf.f32.pop %v1868
    %v1889 = vadd.f32 %v1869, 1.0
    %v1890 = vadd.f32 %v1870, 1.0
    %v1891 = vadd.f32 %v1871, 1.0
    %v1892 = vadd.f32 %v1872, 1.0
    %v1893 = vadd.f32 %v1873, 1.0
    %v1894 = vadd.f32 %v1874, 1.0
    %v1895 = vadd.f32 %v1875, 1.0
    %v1896 = vadd.f32 %v1876, 1.0
    %v1897 = vadd.f32 %v1877, 1.0
    %v1898 = vadd.f32 %v1878, 1.0
    %v1899 = vadd.f32 %v1879, 1.0
    %v1900 = vadd.f32 %v1880, 1.0
    %v1901 = vadd.f32 %v1881, 1.0
    %v1902 = vadd.f32 %v1882, 1.0
    %v1903 = vadd.f32 %v1883, 1.0
    %v1904 = vadd.f32 %v1884, 1.0
    %v1905 = vadd.f32 %v1885, 1.0
    %v1906 = vadd.f32 %v1886, 1.0
    %v1907 = vadd.f32 %v1887, 1.0
    %v1908 = vadd.f32 %v1888, 1.0
    %v1909 = vmul.f32 %v1829, %v1889
    %v1910 = vmul.f32 %v1830, %v1890
    %v1911 = vmul.f32 %v1831, %v1891
    %v1912 = vmul.f32 %v1832, %v1892
    %v1913 = vmul.f32 %v1833, %v1893
    %v1914 = vmul.f32 %v1834, %v1894
    %v1915 = vmul.f32 %v1835, %v1895
    %v1916 = vmul.f32 %v1836, %v1896
    %v1917 = vmul.f32 %v1837, %v1897
    %v1918 = vmul.f32 %v1838, %v1898
    %v1919 = vmul.f32 %v1839, %v1899
    %v1920 = vmul.f32 %v1840, %v1900
    %v1921 = vmul.f32 %v1841, %v1901
    %v1922 = vmul.f32 %v1842, %v1902
    %v1923 = vmul.f32 %v1843, %v1903
    %v1924 = vmul.f32 %v1844, %v1904
    %v1925 = vmul.f32 %v1845, %v1905
    %v1926 = vmul.f32 %v1846, %v1906
    %v1927 = vmul.f32 %v1847, %v1907
    %v1928 = vmul.f32 %v1848, %v1908
    %v1929 = vld [vmem:[%s6] sm:$0xff]
    %v1930 = vld [vmem:[%s6 + $0x8] sm:$0xff]
    %v1931 = vld [vmem:[%s6 + $0x10] sm:$0xff]
    %v1932 = vld [vmem:[%s6 + $0x18] sm:$0xff]
    %v1933 = vld [vmem:[%s6 + $0x20] sm:$0xff]
    %v1934 = vld [vmem:[%s6 + $0x28] sm:$0xff]
    %v1935 = vld [vmem:[%s6 + $0x30] sm:$0xff]
    %v1936 = vld [vmem:[%s6 + $0x38] sm:$0xff]
    %v1937 = vld [vmem:[%s6 + $0x40] sm:$0xff]
    %v1938 = vld [vmem:[%s6 + $0x48] sm:$0xff]
    %v1939 = vld [vmem:[%s6 + $0x50] sm:$0xff]
    %v1940 = vld [vmem:[%s6 + $0x58] sm:$0xff]
    %v1941 = vld [vmem:[%s6 + $0x60] sm:$0xff]
    %v1942 = vld [vmem:[%s6 + $0x68] sm:$0xff]
    %v1943 = vld [vmem:[%s6 + $0x70] sm:$0xff]
    %v1944 = vld [vmem:[%s6 + $0x78] sm:$0xff]
    %v1945 = vld [vmem:[%s6 + $0x80] sm:$0xff]
    %v1946 = vld [vmem:[%s6 + $0x88] sm:$0xff]
    %v1947 = vld [vmem:[%s6 + $0x90] sm:$0xff]
    %v1948 = vld [vmem:[%s6 + $0x98] sm:$0xff]
    %v1949 = vld [vmem:[%s6 + $0xa0] sm:$0xff]
    %v1950 = vld [vmem:[%s6 + $0xa8] sm:$0xff]
    %v1951 = vld [vmem:[%s6 + $0xb0] sm:$0xff]
    %v1952 = vld [vmem:[%s6 + $0xb8] sm:$0xff]
    %v1953 = vld [vmem:[%s6 + $0xc0] sm:$0xff]
    %v1954 = vld [vmem:[%s6 + $0xc8] sm:$0xff]
    %v1955 = vld [vmem:[%s6 + $0xd0] sm:$0xff]
    %v1956 = vld [vmem:[%s6 + $0xd8] sm:$0xff]
    %v1957 = vld [vmem:[%s6 + $0xe0] sm:$0xff]
    %v1958 = vld [vmem:[%s6 + $0xe8] sm:$0xff]
    %v1959 = vld [vmem:[%s6 + $0xf0] sm:$0xff]
    %v1960 = vld [vmem:[%s6 + $0xf8] sm:$0xff]
    %1961 = vmatprep.subr.mxu0 0.0
    %1962 = vmatpush1.msra.mxu0 %v1929
    %1963 = vmatprep.subr.mxu0 0.0
    %1964 = vmatpush1.msra.mxu0 %v1930
    %1965 = vmatprep.subr.mxu0 0.0
    %1966 = vmatpush1.msra.mxu0 %v1931
    %1967 = vmatprep.subr.mxu0 0.0
    %1968 = vmatpush1.msra.mxu0 %v1932
    %1969 = vmatprep.subr.mxu0 0.0
    %1970 = vmatpush1.msra.mxu0 %v1933
    %1971 = vmatprep.subr.mxu0 0.0
    %1972 = vmatpush1.msra.mxu0 %v1934
    %1973 = vmatprep.subr.mxu0 0.0
    %1974 = vmatpush1.msra.mxu0 %v1935
    %1975 = vmatprep.subr.mxu0 0.0
    %1976 = vmatpush1.msra.mxu0 %v1936
    %1977 = vmatprep.subr.mxu0 0.0
    %1978 = vmatpush1.msra.mxu0 %v1937
    %1979 = vmatprep.subr.mxu0 0.0
    %1980 = vmatpush1.msra.mxu0 %v1938
    %1981 = vmatprep.subr.mxu0 0.0
    %1982 = vmatpush1.msra.mxu0 %v1939
    %1983 = vmatprep.subr.mxu0 0.0
    %1984 = vmatpush1.msra.mxu0 %v1940
    %1985 = vmatprep.subr.mxu0 0.0
    %1986 = vmatpush1.msra.mxu0 %v1941
    %1987 = vmatprep.subr.mxu0 0.0
    %1988 = vmatpush1.msra.mxu0 %v1942
    %1989 = vmatprep.subr.mxu0 0.0
    %1990 = vmatpush1.msra.mxu0 %v1943
    %1991 = vmatprep.subr.mxu0 0.0
    %1992 = vmatpush1.msra.mxu0 %v1944
    %1993 = vmatprep.subr.mxu0 0.0
    %1994 = vmatpush1.msra.mxu0 %v1945
    %1995 = vmatprep.subr.mxu0 0.0
    %1996 = vmatpush1.msra.mxu0 %v1946
    %1997 = vmatprep.subr.mxu0 0.0
    %1998 = vmatpush1.msra.mxu0 %v1947
    %1999 = vmatprep.subr.mxu0 0.0
    %2000 = vmatpush1.msra.mxu0 %v1948
    %2001 = vmatprep.subr.mxu0 0.0
    %2002 = vmatpush1.msra.mxu0 %v1949
    %2003 = vmatprep.subr.mxu0 0.0
    %2004 = vmatpush1.msra.mxu0 %v1950
    %2005 = vmatprep.subr.mxu0 0.0
    %2006 = vmatpush1.msra.mxu0 %v1951
    %2007 = vmatprep.subr.mxu0 0.0
    %2008 = vmatpush1.msra.mxu0 %v1952
    %2009 = vmatprep.subr.mxu0 0.0
    %2010 = vmatpush1.msra.mxu0 %v1953
    %2011 = vmatprep.subr.mxu0 0.0
    %2012 = vmatpush1.msra.mxu0 %v1954
    %2013 = vmatprep.subr.mxu0 0.0
    %2014 = vmatpush1.msra.mxu0 %v1955
    %2015 = vmatprep.subr.mxu0 0.0
    %2016 = vmatpush1.msra.mxu0 %v1956
    %2017 = vmatprep.subr.mxu0 0.0
    %2018 = vmatpush1.msra.mxu0 %v1957
    %2019 = vmatprep.subr.mxu0 0.0
    %2020 = vmatpush1.msra.mxu0 %v1958
    %2021 = vmatprep.subr.mxu0 0.0
    %2022 = vmatpush1.msra.mxu0 %v1959
    %2023 = vmatprep.subr.mxu0 0.0
    %2024 = vmatpush1.msra.mxu0 %v1960
    %2025 = vmatprep.mubr.f32.mxu0 %v1910
    %2026 = vmatmul.mubr.f32.gmra.mrb[0].mxu0 %v1909
    %v2027 = vpop.f32.mrb[0].mxu0
    %v2028 = vadd.f32 0.0, %v2027
    %v2029 = vpop.f32.mrb[0].mxu0
    %2030 = vmatprep.mubr.f32.mxu0 %v1912
    %2031 = vmatmul.mubr.f32.gmra.mrb[0].mxu0 %v1911
    %v2032 = vpop.f32.mrb[0].mxu0
    %v2033 = vadd.f32 0.0, %v2032
    %v2034 = vpop.f32.mrb[0].mxu0
    %2035 = vmatprep.mubr.f32.mxu0 %v1914
    %2036 = vmatmul.mubr.f32.gmra.mrb[0].mxu0 %v1913
    %v2037 = vpop.f32.mrb[0].mxu0
    %v2038 = vadd.f32 0.0, %v2037
    %v2039 = vpop.f32.mrb[0].mxu0
    %2040 = vmatprep.mubr.f32.mxu0 %v1916
    %2041 = vmatmul.mubr.f32.gmra.mrb[0].mxu0 %v1915
    %v2042 = vpop.f32.mrb[0].mxu0
    %v2043 = vadd.f32 0.0, %v2042
    %v2044 = vpop.f32.mrb[0].mxu0
    %2045 = vmatprep.mubr.f32.mxu0 %v1918
    %2046 = vmatmul.mubr.f32.gmra.mrb[0].mxu0 %v1917
    %v2047 = vpop.f32.mrb[0].mxu0
    %v2048 = vadd.f32 0.0, %v2047
    %v2049 = vpop.f32.mrb[0].mxu0
    %2050 = vmatprep.mubr.f32.mxu0 %v1920
    %2051 = vmatmul.mubr.f32.gmra.mrb[0].mxu0 %v1919
    %v2052 = vpop.f32.mrb[0].mxu0
    %v2053 = vadd.f32 0.0, %v2052
    %v2054 = vpop.f32.mrb[0].mxu0
    %2055 = vmatprep.mubr.f32.mxu0 %v1922
    %2056 = vmatmul.mubr.f32.gmra.mrb[0].mxu0 %v1921
    %v2057 = vpop.f32.mrb[0].mxu0
    %v2058 = vadd.f32 0.0, %v2057
    %v2059 = vpop.f32.mrb[0].mxu0
    %2060 = vmatprep.mubr.f32.mxu0 %v1924
    %2061 = vmatmul.mubr.f32.gmra.mrb[0].mxu0 %v1923
    %v2062 = vpop.f32.mrb[0].mxu0
    %v2063 = vadd.f32 0.0, %v2062
    %v2064 = vpop.f32.mrb[0].mxu0
    %2065 = vmatprep.mubr.f32.mxu0 %v1926
    %2066 = vmatmul.mubr.f32.gmra.mrb[0].mxu0 %v1925
    %v2067 = vpop.f32.mrb[0].mxu0
    %v2068 = vadd.f32 0.0, %v2067
    %v2069 = vpop.f32.mrb[0].mxu0
    %2070 = vmatprep.mubr.f32.mxu0 %v1928
    %2071 = vmatmul.mubr.f32.gmra.mrb[0].mxu0 %v1927
    %v2072 = vpop.f32.mrb[0].mxu0
    %v2073 = vadd.f32 0.0, %v2072
    %v2074 = vpop.f32.mrb[0].mxu0
    %2075 = vdwg.mxu0
    %v2076 = vadd.f32 %v1317, %v2028
    %v2077 = vadd.f32 %v1318, %v2033
    %v2078 = vadd.f32 %v1319, %v2038
    %v2079 = vadd.f32 %v1320, %v2043
    %v2080 = vadd.f32 %v1321, %v2048
    %v2081 = vadd.f32 %v1322, %v2053
    %v2082 = vadd.f32 %v1323, %v2058
    %v2083 = vadd.f32 %v1324, %v2063
    %v2084 = vadd.f32 %v1325, %v2068
    %v2085 = vadd.f32 %v1326, %v2073
    %v2086 = vlaneseq
    %v2087 = vshrl.u32 %v2086, 7
    %v2088 = vsub.s32 7, %v2087
    %v2089 = vrot.slane %v92, %v2088
    %v2090 = vadd.f32 %v2076, %v2089
    %v2091 = vadd.f32 %v2077, %v2089
    %v2092 = vadd.f32 %v2078, %v2089
    %v2093 = vadd.f32 %v2079, %v2089
    %v2094 = vadd.f32 %v2080, %v2089
    %v2095 = vadd.f32 %v2081, %v2089
    %v2096 = vadd.f32 %v2082, %v2089
    %v2097 = vadd.f32 %v2083, %v2089
    %v2098 = vadd.f32 %v2084, %v2089
    %v2099 = vadd.f32 %v2085, %v2089
    %s2100 = scalar_lea.vmem %s7, 24
    %v2101 = vld [vmem:[%s2100] sm:$0xff]
    %v2102 = vld [vmem:[%s2100 + $0x8] sm:$0xff]
    %v2103 = vld [vmem:[%s2100 + $0x10] sm:$0xff]
    %v2104 = vmul.f32 %v2090, %v2090
    %v2105 = vmul.f32 %v2091, %v2091
    %v2106 = vmul.f32 %v2092, %v2092
    %v2107 = vmul.f32 %v2093, %v2093
    %v2108 = vmul.f32 %v2094, %v2094
    %v2109 = vmul.f32 %v2095, %v2095
    %v2110 = vmul.f32 %v2096, %v2096
    %v2111 = vmul.f32 %v2097, %v2097
    %v2112 = vmul.f32 %v2098, %v2098
    %v2113 = vmul.f32 %v2099, %v2099
    %v2115 = vsel %vm105, %v2090, 0
    %v2118 = vsel %vm105, %v2091, 0
    %v2121 = vsel %vm105, %v2092, 0
    %v2124 = vsel %vm105, %v2093, 0
    %v2127 = vsel %vm105, %v2094, 0
    %v2130 = vsel %vm105, %v2095, 0
    %v2133 = vsel %vm105, %v2096, 0
    %v2136 = vsel %vm105, %v2097, 0
    %v2139 = vsel %vm105, %v2098, 0
    %v2142 = vsel %vm105, %v2099, 0
    %v2145 = vsel %vm105, %v2104, 0
    %v2148 = vsel %vm105, %v2105, 0
    %v2151 = vsel %vm105, %v2106, 0
    %v2154 = vsel %vm105, %v2107, 0
    %v2157 = vsel %vm105, %v2108, 0
    %v2160 = vsel %vm105, %v2109, 0
    %v2163 = vsel %vm105, %v2110, 0
    %v2166 = vsel %vm105, %v2111, 0
    %v2169 = vsel %vm105, %v2112, 0
    %v2172 = vsel %vm105, %v2113, 0
    %2174 = vmatprep.subr.mxu0 0.0
    %2175 = vmatpush1.msra.mxu0 %v46
    %2176 = vmatprep.subr.mxu0 0.0
    %2177 = vmatpush1.msra.mxu0 %v47
    %2178 = vmatprep.subr.mxu0 0.0
    %2179 = vmatpush1.msra.mxu0 %v48
    %2180 = vmatprep.subr.mxu0 0.0
    %2181 = vmatpush1.msra.mxu0 %v49
    %2182 = vmatprep.subr.mxu0 0.0
    %2183 = vmatpush1.msra.mxu0 %v50
    %2184 = vmatprep.subr.mxu0 0.0
    %2185 = vmatpush1.msra.mxu0 %v51
    %2186 = vmatprep.subr.mxu0 0.0
    %2187 = vmatpush1.msra.mxu0 %v52
    %2188 = vmatprep.subr.mxu0 0.0
    %2189 = vmatpush1.msra.mxu0 %v53
    %2190 = vmatprep.subr.mxu0 0.0
    %2191 = vmatpush1.msra.mxu0 0.0
    %2192 = vmatprep.subr.mxu0 0.0
    %2193 = vmatpush1.msra.mxu0 0.0
    %2194 = vmatprep.subr.mxu0 0.0
    %2195 = vmatpush1.msra.mxu0 0.0
    %2196 = vmatprep.subr.mxu0 0.0
    %2197 = vmatpush1.msra.mxu0 0.0
    %2198 = vmatprep.subr.mxu0 0.0
    %2199 = vmatpush1.msra.mxu0 0.0
    %2200 = vmatprep.subr.mxu0 0.0
    %2201 = vmatpush1.msra.mxu0 0.0
    %2202 = vmatprep.subr.mxu0 0.0
    %2203 = vmatpush1.msra.mxu0 0.0
    %2204 = vmatprep.subr.mxu0 0.0
    %2205 = vmatpush1.msra.mxu0 0.0
    %2206 = vmatprep.subr.mxu0 0.0
    %2207 = vmatpush1.msra.mxu0 0.0
    %2208 = vmatprep.subr.mxu0 0.0
    %2209 = vmatpush1.msra.mxu0 0.0
    %2210 = vmatprep.subr.mxu0 0.0
    %2211 = vmatpush1.msra.mxu0 0.0
    %2212 = vmatprep.subr.mxu0 0.0
    %2213 = vmatpush1.msra.mxu0 0.0
    %2214 = vmatprep.subr.mxu0 0.0
    %2215 = vmatpush1.msra.mxu0 0.0
    %2216 = vmatprep.subr.mxu0 0.0
    %2217 = vmatpush1.msra.mxu0 0.0
    %2218 = vmatprep.subr.mxu0 0.0
    %2219 = vmatpush1.msra.mxu0 0.0
    %2220 = vmatprep.subr.mxu0 0.0
    %2221 = vmatpush1.msra.mxu0 0.0
    %2222 = vmatprep.subr.mxu0 0.0
    %2223 = vmatpush1.msra.mxu0 0.0
    %2224 = vmatprep.subr.mxu0 0.0
    %2225 = vmatpush1.msra.mxu0 0.0
    %2226 = vmatprep.subr.mxu0 0.0
    %2227 = vmatpush1.msra.mxu0 0.0
    %2228 = vmatprep.subr.mxu0 0.0
    %2229 = vmatpush1.msra.mxu0 0.0
    %2230 = vmatprep.subr.mxu0 0.0
    %2231 = vmatpush1.msra.mxu0 0.0
    %2232 = vmatprep.subr.mxu0 0.0
    %2233 = vmatpush1.msra.mxu0 0.0
    %2234 = vmatprep.subr.mxu0 0.0
    %2235 = vmatpush1.msra.mxu0 0.0
    %2236 = vmatprep.subr.mxu0 0.0
    %2237 = vmatpush1.msra.mxu0 0.0
    %2238 = vmatprep.mubr.f32.mxu0 0.0
    %2239 = vmatmul.mubr.f32.gmra.mrb[0].mxu0 %v2115
    %v2240 = vpop.f32.mrb[0].mxu0
    %v2241 = vadd.f32 0.0, %v2240
    %v2242 = vpop.f32.mrb[0].mxu0
    %2243 = vmatprep.mubr.f32.mxu0 0.0
    %2244 = vmatmul.mubr.f32.gmra.mrb[0].mxu0 %v2118
    %v2245 = vpop.f32.mrb[0].mxu0
    %v2246 = vadd.f32 0.0, %v2245
    %v2247 = vpop.f32.mrb[0].mxu0
    %2248 = vmatprep.mubr.f32.mxu0 0.0
    %2249 = vmatmul.mubr.f32.gmra.mrb[0].mxu0 %v2121
    %v2250 = vpop.f32.mrb[0].mxu0
    %v2251 = vadd.f32 0.0, %v2250
    %v2252 = vpop.f32.mrb[0].mxu0
    %2253 = vmatprep.mubr.f32.mxu0 0.0
    %2254 = vmatmul.mubr.f32.gmra.mrb[0].mxu0 %v2124
    %v2255 = vpop.f32.mrb[0].mxu0
    %v2256 = vadd.f32 0.0, %v2255
    %v2257 = vpop.f32.mrb[0].mxu0
    %2258 = vmatprep.mubr.f32.mxu0 0.0
    %2259 = vmatmul.mubr.f32.gmra.mrb[0].mxu0 %v2127
    %v2260 = vpop.f32.mrb[0].mxu0
    %v2261 = vadd.f32 0.0, %v2260
    %v2262 = vpop.f32.mrb[0].mxu0
    %2263 = vmatprep.mubr.f32.mxu0 0.0
    %2264 = vmatmul.mubr.f32.gmra.mrb[0].mxu0 %v2130
    %v2265 = vpop.f32.mrb[0].mxu0
    %v2266 = vadd.f32 0.0, %v2265
    %v2267 = vpop.f32.mrb[0].mxu0
    %2268 = vmatprep.mubr.f32.mxu0 0.0
    %2269 = vmatmul.mubr.f32.gmra.mrb[0].mxu0 %v2133
    %v2270 = vpop.f32.mrb[0].mxu0
    %v2271 = vadd.f32 0.0, %v2270
    %v2272 = vpop.f32.mrb[0].mxu0
    %2273 = vmatprep.mubr.f32.mxu0 0.0
    %2274 = vmatmul.mubr.f32.gmra.mrb[0].mxu0 %v2136
    %v2275 = vpop.f32.mrb[0].mxu0
    %v2276 = vadd.f32 0.0, %v2275
    %v2277 = vpop.f32.mrb[0].mxu0
    %2278 = vmatprep.mubr.f32.mxu0 0.0
    %2279 = vmatmul.mubr.f32.gmra.mrb[0].mxu0 %v2139
    %v2280 = vpop.f32.mrb[0].mxu0
    %v2281 = vadd.f32 0.0, %v2280
    %v2282 = vpop.f32.mrb[0].mxu0
    %2283 = vmatprep.mubr.f32.mxu0 0.0
    %2284 = vmatmul.mubr.f32.gmra.mrb[0].mxu0 %v2142
    %v2285 = vpop.f32.mrb[0].mxu0
    %v2286 = vadd.f32 0.0, %v2285
    %v2287 = vpop.f32.mrb[0].mxu0
    %2288 = vmatprep.mubr.f32.mxu0 0.0
    %2289 = vmatmul.mubr.f32.gmra.mrb[0].mxu0 %v2145
    %v2290 = vpop.f32.mrb[0].mxu0
    %v2291 = vadd.f32 0.0, %v2290
    %v2292 = vpop.f32.mrb[0].mxu0
    %2293 = vmatprep.mubr.f32.mxu0 0.0
    %2294 = vmatmul.mubr.f32.gmra.mrb[0].mxu0 %v2148
    %v2295 = vpop.f32.mrb[0].mxu0
    %v2296 = vadd.f32 0.0, %v2295
    %v2297 = vpop.f32.mrb[0].mxu0
    %2298 = vmatprep.mubr.f32.mxu0 0.0
    %2299 = vmatmul.mubr.f32.gmra.mrb[0].mxu0 %v2151
    %v2300 = vpop.f32.mrb[0].mxu0
    %v2301 = vadd.f32 0.0, %v2300
    %v2302 = vpop.f32.mrb[0].mxu0
    %2303 = vmatprep.mubr.f32.mxu0 0.0
    %2304 = vmatmul.mubr.f32.gmra.mrb[0].mxu0 %v2154
    %v2305 = vpop.f32.mrb[0].mxu0
    %v2306 = vadd.f32 0.0, %v2305
    %v2307 = vpop.f32.mrb[0].mxu0
    %2308 = vmatprep.mubr.f32.mxu0 0.0
    %2309 = vmatmul.mubr.f32.gmra.mrb[0].mxu0 %v2157
    %v2310 = vpop.f32.mrb[0].mxu0
    %v2311 = vadd.f32 0.0, %v2310
    %v2312 = vpop.f32.mrb[0].mxu0
    %2313 = vmatprep.mubr.f32.mxu0 0.0
    %2314 = vmatmul.mubr.f32.gmra.mrb[0].mxu0 %v2160
    %v2315 = vpop.f32.mrb[0].mxu0
    %v2316 = vadd.f32 0.0, %v2315
    %v2317 = vpop.f32.mrb[0].mxu0
    %2318 = vmatprep.mubr.f32.mxu0 0.0
    %2319 = vmatmul.mubr.f32.gmra.mrb[0].mxu0 %v2163
    %v2320 = vpop.f32.mrb[0].mxu0
    %v2321 = vadd.f32 0.0, %v2320
    %v2322 = vpop.f32.mrb[0].mxu0
    %2323 = vmatprep.mubr.f32.mxu0 0.0
    %2324 = vmatmul.mubr.f32.gmra.mrb[0].mxu0 %v2166
    %v2325 = vpop.f32.mrb[0].mxu0
    %v2326 = vadd.f32 0.0, %v2325
    %v2327 = vpop.f32.mrb[0].mxu0
    %2328 = vmatprep.mubr.f32.mxu0 0.0
    %2329 = vmatmul.mubr.f32.gmra.mrb[0].mxu0 %v2169
    %v2330 = vpop.f32.mrb[0].mxu0
    %v2331 = vadd.f32 0.0, %v2330
    %v2332 = vpop.f32.mrb[0].mxu0
    %2333 = vmatprep.mubr.f32.mxu0 0.0
    %2334 = vmatmul.mubr.f32.gmra.mrb[0].mxu0 %v2172
    %v2335 = vpop.f32.mrb[0].mxu0
    %v2336 = vadd.f32 0.0, %v2335
    %v2337 = vpop.f32.mrb[0].mxu0
    %2338 = vdwg.mxu0
    %v2339 = vmul.f32 %v2241, %v2241
    %v2340 = vmul.f32 %v2246, %v2246
    %v2341 = vmul.f32 %v2251, %v2251
    %v2342 = vmul.f32 %v2256, %v2256
    %v2343 = vmul.f32 %v2261, %v2261
    %v2344 = vmul.f32 %v2266, %v2266
    %v2345 = vmul.f32 %v2271, %v2271
    %v2346 = vmul.f32 %v2276, %v2276
    %v2347 = vmul.f32 %v2281, %v2281
    %v2348 = vmul.f32 %v2286, %v2286
    %v2349 = vsub.f32 %v2291, %v2339
    %v2350 = vsub.f32 %v2296, %v2340
    %v2351 = vsub.f32 %v2301, %v2341
    %v2352 = vsub.f32 %v2306, %v2342
    %v2353 = vsub.f32 %v2311, %v2343
    %v2354 = vsub.f32 %v2316, %v2344
    %v2355 = vsub.f32 %v2321, %v2345
    %v2356 = vsub.f32 %v2326, %v2346
    %v2357 = vsub.f32 %v2331, %v2347
    %v2358 = vsub.f32 %v2336, %v2348
    %v2359 = vsub.f32 %v2090, %v2241
    %v2360 = vsub.f32 %v2091, %v2246
    %v2361 = vsub.f32 %v2092, %v2251
    %v2362 = vsub.f32 %v2093, %v2256
    %v2363 = vsub.f32 %v2094, %v2261
    %v2364 = vsub.f32 %v2095, %v2266
    %v2365 = vsub.f32 %v2096, %v2271
    %v2366 = vsub.f32 %v2097, %v2276
    %v2367 = vsub.f32 %v2098, %v2281
    %v2368 = vsub.f32 %v2099, %v2286
    %v2369 = vadd.f32 %v2349, 1e-05
    %v2370 = vadd.f32 %v2350, 1e-05
    %v2371 = vadd.f32 %v2351, 1e-05
    %v2372 = vadd.f32 %v2352, 1e-05
    %v2373 = vadd.f32 %v2353, 1e-05
    %v2374 = vadd.f32 %v2354, 1e-05
    %v2375 = vadd.f32 %v2355, 1e-05
    %v2376 = vadd.f32 %v2356, 1e-05
    %v2377 = vadd.f32 %v2357, 1e-05
    %v2378 = vadd.f32 %v2358, 1e-05
    %v2379 = vrsqrt.pop %v2369
    %v2380 = vrsqrt.pop %v2370
    %v2381 = vrsqrt.pop %v2371
    %v2382 = vrsqrt.pop %v2372
    %v2383 = vrsqrt.pop %v2373
    %v2384 = vrsqrt.pop %v2374
    %v2385 = vrsqrt.pop %v2375
    %v2386 = vrsqrt.pop %v2376
    %v2387 = vrsqrt.pop %v2377
    %v2388 = vrsqrt.pop %v2378
    %v2389 = vmul.f32 %v2359, %v2379
    %v2390 = vmul.f32 %v2360, %v2380
    %v2391 = vmul.f32 %v2361, %v2381
    %v2392 = vmul.f32 %v2362, %v2382
    %v2393 = vmul.f32 %v2363, %v2383
    %v2394 = vmul.f32 %v2364, %v2384
    %v2395 = vmul.f32 %v2365, %v2385
    %v2396 = vmul.f32 %v2366, %v2386
    %v2397 = vmul.f32 %v2367, %v2387
    %v2398 = vmul.f32 %v2368, %v2388
    %v2399 = vlaneseq
    %v2400 = vshrl.u32 %v2399, 7
    %v2401 = vsub.s32 0, %v2400
    %v2402 = vrot.slane %v2101, %v2401
    %v2403 = vmul.f32 %v2389, %v2402
    %v2404 = vmul.f32 %v2390, %v2402
    %v2405 = vmul.f32 %v2391, %v2402
    %v2406 = vmul.f32 %v2392, %v2402
    %v2407 = vmul.f32 %v2393, %v2402
    %v2408 = vmul.f32 %v2394, %v2402
    %v2409 = vmul.f32 %v2395, %v2402
    %v2410 = vmul.f32 %v2396, %v2402
    %v2411 = vmul.f32 %v2397, %v2402
    %v2412 = vmul.f32 %v2398, %v2402
    %v2413 = vlaneseq
    %v2414 = vshrl.u32 %v2413, 7
    %v2415 = vsub.s32 1, %v2414
    %v2416 = vrot.slane %v2101, %v2415
    %v2417 = vadd.f32 %v2403, %v2416
    %v2418 = vadd.f32 %v2404, %v2416
    %v2419 = vadd.f32 %v2405, %v2416
    %v2420 = vadd.f32 %v2406, %v2416
    %v2421 = vadd.f32 %v2407, %v2416
    %v2422 = vadd.f32 %v2408, %v2416
    %v2423 = vadd.f32 %v2409, %v2416
    %v2424 = vadd.f32 %v2410, %v2416
    %v2425 = vadd.f32 %v2411, %v2416
    %v2426 = vadd.f32 %v2412, %v2416
    %s2427 = scalar_lea.vmem %s3, 192
    %v2428 = vld [vmem:[%s2427] sm:$0xff]
    %v2429 = vld [vmem:[%s2427 + $0x8] sm:$0xff]
    %v2430 = vld [vmem:[%s2427 + $0x10] sm:$0xff]
    %v2431 = vld [vmem:[%s2427 + $0x18] sm:$0xff]
    %v2432 = vld [vmem:[%s2427 + $0x20] sm:$0xff]
    %v2433 = vld [vmem:[%s2427 + $0x28] sm:$0xff]
    %v2434 = vld [vmem:[%s2427 + $0x30] sm:$0xff]
    %v2435 = vld [vmem:[%s2427 + $0x38] sm:$0xff]
    %v2436 = vld [vmem:[%s2427 + $0x40] sm:$0xff]
    %v2437 = vld [vmem:[%s2427 + $0x48] sm:$0xff]
    %v2438 = vld [vmem:[%s2427 + $0x50] sm:$0xff]
    %v2439 = vld [vmem:[%s2427 + $0x58] sm:$0xff]
    %v2440 = vld [vmem:[%s2427 + $0x60] sm:$0xff]
    %v2441 = vld [vmem:[%s2427 + $0x68] sm:$0xff]
    %v2442 = vld [vmem:[%s2427 + $0x70] sm:$0xff]
    %v2443 = vld [vmem:[%s2427 + $0x78] sm:$0xff]
    %v2444 = vld [vmem:[%s2427 + $0x80] sm:$0xff]
    %v2445 = vld [vmem:[%s2427 + $0x88] sm:$0xff]
    %v2446 = vld [vmem:[%s2427 + $0x90] sm:$0xff]
    %v2447 = vld [vmem:[%s2427 + $0x98] sm:$0xff]
    %v2448 = vld [vmem:[%s2427 + $0xa0] sm:$0xff]
    %v2449 = vld [vmem:[%s2427 + $0xa8] sm:$0xff]
    %v2450 = vld [vmem:[%s2427 + $0xb0] sm:$0xff]
    %v2451 = vld [vmem:[%s2427 + $0xb8] sm:$0xff]
    %v2452 = vlaneseq
    %v2453 = vshrl.u32 %v2452, 7
    %v2454 = vsub.s32 2, %v2453
    %v2455 = vrot.slane %v2101, %v2454
    %v2456 = vlaneseq
    %v2457 = vshrl.u32 %v2456, 7
    %v2458 = vsub.s32 2, %v2457
    %v2459 = vrot.slane %v2102, %v2458
    %v2460 = vlaneseq
    %v2461 = vshrl.u32 %v2460, 7
    %v2462 = vsub.s32 2, %v2461
    %v2463 = vrot.slane %v2103, %v2462
    %v2465 = vsel %vm105, %v2417, 0
    %v2468 = vsel %vm105, %v2418, 0
    %v2471 = vsel %vm105, %v2419, 0
    %v2474 = vsel %vm105, %v2420, 0
    %v2477 = vsel %vm105, %v2421, 0
    %v2480 = vsel %vm105, %v2422, 0
    %v2483 = vsel %vm105, %v2423, 0
    %v2486 = vsel %vm105, %v2424, 0
    %v2489 = vsel %vm105, %v2425, 0
    %v2492 = vsel %vm105, %v2426, 0
    %2494 = vmatprep.subr.mxu0 %v2429
    %2495 = vmatpush1.msra.mxu0 %v2428
    %2496 = vmatprep.subr.mxu0 %v2432
    %2497 = vmatpush1.msra.mxu0 %v2431
    %2498 = vmatprep.subr.mxu0 %v2435
    %2499 = vmatpush1.msra.mxu0 %v2434
    %2500 = vmatprep.subr.mxu0 %v2438
    %2501 = vmatpush1.msra.mxu0 %v2437
    %2502 = vmatprep.subr.mxu0 %v2441
    %2503 = vmatpush1.msra.mxu0 %v2440
    %2504 = vmatprep.subr.mxu0 %v2444
    %2505 = vmatpush1.msra.mxu0 %v2443
    %2506 = vmatprep.subr.mxu0 %v2447
    %2507 = vmatpush1.msra.mxu0 %v2446
    %2508 = vmatprep.subr.mxu0 %v2450
    %2509 = vmatpush1.msra.mxu0 %v2449
    %2510 = vmatprep.subr.mxu0 0.0
    %2511 = vmatpush1.msra.mxu0 0.0
    %2512 = vmatprep.subr.mxu0 0.0
    %2513 = vmatpush1.msra.mxu0 0.0
    %2514 = vmatprep.subr.mxu0 0.0
    %2515 = vmatpush1.msra.mxu0 0.0
    %2516 = vmatprep.subr.mxu0 0.0
    %2517 = vmatpush1.msra.mxu0 0.0
    %2518 = vmatprep.subr.mxu0 0.0
    %2519 = vmatpush1.msra.mxu0 0.0
    %2520 = vmatprep.subr.mxu0 0.0
    %2521 = vmatpush1.msra.mxu0 0.0
    %2522 = vmatprep.subr.mxu0 0.0
    %2523 = vmatpush1.msra.mxu0 0.0
    %2524 = vmatprep.subr.mxu0 0.0
    %2525 = vmatpush1.msra.mxu0 0.0
    %2526 = vmatprep.subr.mxu0 0.0
    %2527 = vmatpush1.msra.mxu0 0.0
    %2528 = vmatprep.subr.mxu0 0.0
    %2529 = vmatpush1.msra.mxu0 0.0
    %2530 = vmatprep.subr.mxu0 0.0
    %2531 = vmatpush1.msra.mxu0 0.0
    %2532 = vmatprep.subr.mxu0 0.0
    %2533 = vmatpush1.msra.mxu0 0.0
    %2534 = vmatprep.subr.mxu0 0.0
    %2535 = vmatpush1.msra.mxu0 0.0
    %2536 = vmatprep.subr.mxu0 0.0
    %2537 = vmatpush1.msra.mxu0 0.0
    %2538 = vmatprep.subr.mxu0 0.0
    %2539 = vmatpush1.msra.mxu0 0.0
    %2540 = vmatprep.subr.mxu0 0.0
    %2541 = vmatpush1.msra.mxu0 0.0
    %2542 = vmatprep.subr.mxu0 0.0
    %2543 = vmatpush1.msra.mxu0 0.0
    %2544 = vmatprep.subr.mxu0 0.0
    %2545 = vmatpush1.msra.mxu0 0.0
    %2546 = vmatprep.subr.mxu0 0.0
    %2547 = vmatpush1.msra.mxu0 0.0
    %2548 = vmatprep.subr.mxu0 0.0
    %2549 = vmatpush1.msra.mxu0 0.0
    %2550 = vmatprep.subr.mxu0 0.0
    %2551 = vmatpush1.msra.mxu0 0.0
    %2552 = vmatprep.subr.mxu0 0.0
    %2553 = vmatpush1.msra.mxu0 0.0
    %2554 = vmatprep.subr.mxu0 0.0
    %2555 = vmatpush1.msra.mxu0 0.0
    %2556 = vmatprep.subr.mxu0 0.0
    %2557 = vmatpush1.msra.mxu0 0.0
    %2558 = vmatprep.mubr.f32.mxu0 0.0
    %2559 = vmatmul.mubr.f32.gmra.mrb[0].mxu0 %v2465
    %v2560 = vpop.f32.mrb[0].mxu0
    %v2561 = vadd.f32 %v2455, %v2560
    %v2562 = vpop.f32.mrb[0].mxu0
    %v2563 = vadd.f32 %v2459, %v2562
    %2564 = vmatprep.mubr.f32.mxu0 0.0
    %2565 = vmatmul.mubr.f32.gmra.mrb[0].mxu0 %v2468
    %v2566 = vpop.f32.mrb[0].mxu0
    %v2567 = vadd.f32 %v2455, %v2566
    %v2568 = vpop.f32.mrb[0].mxu0
    %v2569 = vadd.f32 %v2459, %v2568
    %2570 = vmatprep.mubr.f32.mxu0 0.0
    %2571 = vmatmul.mubr.f32.gmra.mrb[0].mxu0 %v2471
    %v2572 = vpop.f32.mrb[0].mxu0
    %v2573 = vadd.f32 %v2455, %v2572
    %v2574 = vpop.f32.mrb[0].mxu0
    %v2575 = vadd.f32 %v2459, %v2574
    %2576 = vmatprep.mubr.f32.mxu0 0.0
    %2577 = vmatmul.mubr.f32.gmra.mrb[0].mxu0 %v2474
    %v2578 = vpop.f32.mrb[0].mxu0
    %v2579 = vadd.f32 %v2455, %v2578
    %v2580 = vpop.f32.mrb[0].mxu0
    %v2581 = vadd.f32 %v2459, %v2580
    %2582 = vmatprep.mubr.f32.mxu0 0.0
    %2583 = vmatmul.mubr.f32.gmra.mrb[0].mxu0 %v2477
    %v2584 = vpop.f32.mrb[0].mxu0
    %v2585 = vadd.f32 %v2455, %v2584
    %v2586 = vpop.f32.mrb[0].mxu0
    %v2587 = vadd.f32 %v2459, %v2586
    %2588 = vmatprep.mubr.f32.mxu0 0.0
    %2589 = vmatmul.mubr.f32.gmra.mrb[0].mxu0 %v2480
    %v2590 = vpop.f32.mrb[0].mxu0
    %v2591 = vadd.f32 %v2455, %v2590
    %v2592 = vpop.f32.mrb[0].mxu0
    %v2593 = vadd.f32 %v2459, %v2592
    %2594 = vmatprep.mubr.f32.mxu0 0.0
    %2595 = vmatmul.mubr.f32.gmra.mrb[0].mxu0 %v2483
    %v2596 = vpop.f32.mrb[0].mxu0
    %v2597 = vadd.f32 %v2455, %v2596
    %v2598 = vpop.f32.mrb[0].mxu0
    %v2599 = vadd.f32 %v2459, %v2598
    %2600 = vmatprep.mubr.f32.mxu0 0.0
    %2601 = vmatmul.mubr.f32.gmra.mrb[0].mxu0 %v2486
    %v2602 = vpop.f32.mrb[0].mxu0
    %v2603 = vadd.f32 %v2455, %v2602
    %v2604 = vpop.f32.mrb[0].mxu0
    %v2605 = vadd.f32 %v2459, %v2604
    %2606 = vmatprep.mubr.f32.mxu0 0.0
    %2607 = vmatmul.mubr.f32.gmra.mrb[0].mxu0 %v2489
    %v2608 = vpop.f32.mrb[0].mxu0
    %v2609 = vadd.f32 %v2455, %v2608
    %v2610 = vpop.f32.mrb[0].mxu0
    %v2611 = vadd.f32 %v2459, %v2610
    %2612 = vmatprep.mubr.f32.mxu0 0.0
    %2613 = vmatmul.mubr.f32.gmra.mrb[0].mxu0 %v2492
    %v2614 = vpop.f32.mrb[0].mxu0
    %v2615 = vadd.f32 %v2455, %v2614
    %v2616 = vpop.f32.mrb[0].mxu0
    %v2617 = vadd.f32 %v2459, %v2616
    %2618 = vdwg.mxu0
    %2619 = vmatprep.subr.mxu0 0.0
    %2620 = vmatpush1.msra.mxu0 %v2430
    %2621 = vmatprep.subr.mxu0 0.0
    %2622 = vmatpush1.msra.mxu0 %v2433
    %2623 = vmatprep.subr.mxu0 0.0
    %2624 = vmatpush1.msra.mxu0 %v2436
    %2625 = vmatprep.subr.mxu0 0.0
    %2626 = vmatpush1.msra.mxu0 %v2439
    %2627 = vmatprep.subr.mxu0 0.0
    %2628 = vmatpush1.msra.mxu0 %v2442
    %2629 = vmatprep.subr.mxu0 0.0
    %2630 = vmatpush1.msra.mxu0 %v2445
    %2631 = vmatprep.subr.mxu0 0.0
    %2632 = vmatpush1.msra.mxu0 %v2448
    %2633 = vmatprep.subr.mxu0 0.0
    %2634 = vmatpush1.msra.mxu0 %v2451
    %2635 = vmatprep.subr.mxu0 0.0
    %2636 = vmatpush1.msra.mxu0 0.0
    %2637 = vmatprep.subr.mxu0 0.0
    %2638 = vmatpush1.msra.mxu0 0.0
    %2639 = vmatprep.subr.mxu0 0.0
    %2640 = vmatpush1.msra.mxu0 0.0
    %2641 = vmatprep.subr.mxu0 0.0
    %2642 = vmatpush1.msra.mxu0 0.0
    %2643 = vmatprep.subr.mxu0 0.0
    %2644 = vmatpush1.msra.mxu0 0.0
    %2645 = vmatprep.subr.mxu0 0.0
    %2646 = vmatpush1.msra.mxu0 0.0
    %2647 = vmatprep.subr.mxu0 0.0
    %2648 = vmatpush1.msra.mxu0 0.0
    %2649 = vmatprep.subr.mxu0 0.0
    %2650 = vmatpush1.msra.mxu0 0.0
    %2651 = vmatprep.subr.mxu0 0.0
    %2652 = vmatpush1.msra.mxu0 0.0
    %2653 = vmatprep.subr.mxu0 0.0
    %2654 = vmatpush1.msra.mxu0 0.0
    %2655 = vmatprep.subr.mxu0 0.0
    %2656 = vmatpush1.msra.mxu0 0.0
    %2657 = vmatprep.subr.mxu0 0.0
    %2658 = vmatpush1.msra.mxu0 0.0
    %2659 = vmatprep.subr.mxu0 0.0
    %2660 = vmatpush1.msra.mxu0 0.0
    %2661 = vmatprep.subr.mxu0 0.0
    %2662 = vmatpush1.msra.mxu0 0.0
    %2663 = vmatprep.subr.mxu0 0.0
    %2664 = vmatpush1.msra.mxu0 0.0
    %2665 = vmatprep.subr.mxu0 0.0
    %2666 = vmatpush1.msra.mxu0 0.0
    %2667 = vmatprep.subr.mxu0 0.0
    %2668 = vmatpush1.msra.mxu0 0.0
    %2669 = vmatprep.subr.mxu0 0.0
    %2670 = vmatpush1.msra.mxu0 0.0
    %2671 = vmatprep.subr.mxu0 0.0
    %2672 = vmatpush1.msra.mxu0 0.0
    %2673 = vmatprep.subr.mxu0 0.0
    %2674 = vmatpush1.msra.mxu0 0.0
    %2675 = vmatprep.subr.mxu0 0.0
    %2676 = vmatpush1.msra.mxu0 0.0
    %2677 = vmatprep.subr.mxu0 0.0
    %2678 = vmatpush1.msra.mxu0 0.0
    %2679 = vmatprep.subr.mxu0 0.0
    %2680 = vmatpush1.msra.mxu0 0.0
    %2681 = vmatprep.subr.mxu0 0.0
    %2682 = vmatpush1.msra.mxu0 0.0
    %2683 = vmatprep.mubr.f32.mxu0 0.0
    %2684 = vmatmul.mubr.f32.gmra.mrb[0].mxu0 %v2465
    %v2685 = vpop.f32.mrb[0].mxu0
    %v2686 = vadd.f32 %v2463, %v2685
    %v2687 = vpop.f32.mrb[0].mxu0
    %2688 = vmatprep.mubr.f32.mxu0 0.0
    %2689 = vmatmul.mubr.f32.gmra.mrb[0].mxu0 %v2468
    %v2690 = vpop.f32.mrb[0].mxu0
    %v2691 = vadd.f32 %v2463, %v2690
    %v2692 = vpop.f32.mrb[0].mxu0
    %2693 = vmatprep.mubr.f32.mxu0 0.0
    %2694 = vmatmul.mubr.f32.gmra.mrb[0].mxu0 %v2471
    %v2695 = vpop.f32.mrb[0].mxu0
    %v2696 = vadd.f32 %v2463, %v2695
    %v2697 = vpop.f32.mrb[0].mxu0
    %2698 = vmatprep.mubr.f32.mxu0 0.0
    %2699 = vmatmul.mubr.f32.gmra.mrb[0].mxu0 %v2474
    %v2700 = vpop.f32.mrb[0].mxu0
    %v2701 = vadd.f32 %v2463, %v2700
    %v2702 = vpop.f32.mrb[0].mxu0
    %2703 = vmatprep.mubr.f32.mxu0 0.0
    %2704 = vmatmul.mubr.f32.gmra.mrb[0].mxu0 %v2477
    %v2705 = vpop.f32.mrb[0].mxu0
    %v2706 = vadd.f32 %v2463, %v2705
    %v2707 = vpop.f32.mrb[0].mxu0
    %2708 = vmatprep.mubr.f32.mxu0 0.0
    %2709 = vmatmul.mubr.f32.gmra.mrb[0].mxu0 %v2480
    %v2710 = vpop.f32.mrb[0].mxu0
    %v2711 = vadd.f32 %v2463, %v2710
    %v2712 = vpop.f32.mrb[0].mxu0
    %2713 = vmatprep.mubr.f32.mxu0 0.0
    %2714 = vmatmul.mubr.f32.gmra.mrb[0].mxu0 %v2483
    %v2715 = vpop.f32.mrb[0].mxu0
    %v2716 = vadd.f32 %v2463, %v2715
    %v2717 = vpop.f32.mrb[0].mxu0
    %2718 = vmatprep.mubr.f32.mxu0 0.0
    %2719 = vmatmul.mubr.f32.gmra.mrb[0].mxu0 %v2486
    %v2720 = vpop.f32.mrb[0].mxu0
    %v2721 = vadd.f32 %v2463, %v2720
    %v2722 = vpop.f32.mrb[0].mxu0
    %2723 = vmatprep.mubr.f32.mxu0 0.0
    %2724 = vmatmul.mubr.f32.gmra.mrb[0].mxu0 %v2489
    %v2725 = vpop.f32.mrb[0].mxu0
    %v2726 = vadd.f32 %v2463, %v2725
    %v2727 = vpop.f32.mrb[0].mxu0
    %2728 = vmatprep.mubr.f32.mxu0 0.0
    %2729 = vmatmul.mubr.f32.gmra.mrb[0].mxu0 %v2492
    %v2730 = vpop.f32.mrb[0].mxu0
    %v2731 = vadd.f32 %v2463, %v2730
    %v2732 = vpop.f32.mrb[0].mxu0
    %2733 = vdwg.mxu0
    %2744 = vrot.lane.b32.xlu0 %v2561, 64
    %v2745 = vpop.permute.xlu0 %2744
    %2746 = vrot.lane.b32.xlu0 %v2567, 64
    %v2747 = vpop.permute.xlu0 %2746
    %2748 = vrot.lane.b32.xlu0 %v2573, 64
    %v2749 = vpop.permute.xlu0 %2748
    %2750 = vrot.lane.b32.xlu0 %v2579, 64
    %v2751 = vpop.permute.xlu0 %2750
    %2752 = vrot.lane.b32.xlu0 %v2585, 64
    %v2753 = vpop.permute.xlu0 %2752
    %2754 = vrot.lane.b32.xlu0 %v2591, 64
    %v2755 = vpop.permute.xlu0 %2754
    %2756 = vrot.lane.b32.xlu0 %v2597, 64
    %v2757 = vpop.permute.xlu0 %2756
    %2758 = vrot.lane.b32.xlu0 %v2603, 64
    %v2759 = vpop.permute.xlu0 %2758
    %2760 = vrot.lane.b32.xlu0 %v2609, 64
    %v2761 = vpop.permute.xlu0 %2760
    %2762 = vrot.lane.b32.xlu0 %v2615, 64
    %v2763 = vpop.permute.xlu0 %2762
    %v2774 = vmul.f32 %v2561, %v2745
    %v2775 = vmul.f32 %v2567, %v2747
    %v2776 = vmul.f32 %v2573, %v2749
    %v2777 = vmul.f32 %v2579, %v2751
    %v2778 = vmul.f32 %v2585, %v2753
    %v2779 = vmul.f32 %v2591, %v2755
    %v2780 = vmul.f32 %v2597, %v2757
    %v2781 = vmul.f32 %v2603, %v2759
    %v2782 = vmul.f32 %v2609, %v2761
    %v2783 = vmul.f32 %v2615, %v2763
    %2794 = vrot.lane.b32.xlu0 %v2563, 64
    %v2795 = vpop.permute.xlu0 %2794
    %2796 = vrot.lane.b32.xlu0 %v2569, 64
    %v2797 = vpop.permute.xlu0 %2796
    %2798 = vrot.lane.b32.xlu0 %v2575, 64
    %v2799 = vpop.permute.xlu0 %2798
    %2800 = vrot.lane.b32.xlu0 %v2581, 64
    %v2801 = vpop.permute.xlu0 %2800
    %2802 = vrot.lane.b32.xlu0 %v2587, 64
    %v2803 = vpop.permute.xlu0 %2802
    %2804 = vrot.lane.b32.xlu0 %v2593, 64
    %v2805 = vpop.permute.xlu0 %2804
    %2806 = vrot.lane.b32.xlu0 %v2599, 64
    %v2807 = vpop.permute.xlu0 %2806
    %2808 = vrot.lane.b32.xlu0 %v2605, 64
    %v2809 = vpop.permute.xlu0 %2808
    %2810 = vrot.lane.b32.xlu0 %v2611, 64
    %v2811 = vpop.permute.xlu0 %2810
    %2812 = vrot.lane.b32.xlu0 %v2617, 64
    %v2813 = vpop.permute.xlu0 %2812
    %v2824 = vmul.f32 %v2561, %v2795
    %v2825 = vmul.f32 %v2567, %v2797
    %v2826 = vmul.f32 %v2573, %v2799
    %v2827 = vmul.f32 %v2579, %v2801
    %v2828 = vmul.f32 %v2585, %v2803
    %v2829 = vmul.f32 %v2591, %v2805
    %v2830 = vmul.f32 %v2597, %v2807
    %v2831 = vmul.f32 %v2603, %v2809
    %v2832 = vmul.f32 %v2609, %v2811
    %v2833 = vmul.f32 %v2615, %v2813
    %v2835 = vsel %vm105, %v2774, 0
    %v2838 = vsel %vm105, %v2775, 0
    %v2841 = vsel %vm105, %v2776, 0
    %v2844 = vsel %vm105, %v2777, 0
    %v2847 = vsel %vm105, %v2778, 0
    %v2850 = vsel %vm105, %v2779, 0
    %v2853 = vsel %vm105, %v2780, 0
    %v2856 = vsel %vm105, %v2781, 0
    %v2859 = vsel %vm105, %v2782, 0
    %v2862 = vsel %vm105, %v2783, 0
    %v2865 = vsel %vm105, %v2824, 0
    %v2868 = vsel %vm105, %v2825, 0
    %v2871 = vsel %vm105, %v2826, 0
    %v2874 = vsel %vm105, %v2827, 0
    %v2877 = vsel %vm105, %v2828, 0
    %v2880 = vsel %vm105, %v2829, 0
    %v2883 = vsel %vm105, %v2830, 0
    %v2886 = vsel %vm105, %v2831, 0
    %v2889 = vsel %vm105, %v2832, 0
    %v2892 = vsel %vm105, %v2833, 0
    %2894 = vmatprep.subr.mxu0 0.0
    %2895 = vmatpush1.msra.mxu0 %v54
    %2896 = vmatprep.subr.mxu0 0.0
    %2897 = vmatpush1.msra.mxu0 %v55
    %2898 = vmatprep.subr.mxu0 0.0
    %2899 = vmatpush1.msra.mxu0 %v56
    %2900 = vmatprep.subr.mxu0 0.0
    %2901 = vmatpush1.msra.mxu0 %v57
    %2902 = vmatprep.subr.mxu0 0.0
    %2903 = vmatpush1.msra.mxu0 %v58
    %2904 = vmatprep.subr.mxu0 0.0
    %2905 = vmatpush1.msra.mxu0 %v59
    %2906 = vmatprep.subr.mxu0 0.0
    %2907 = vmatpush1.msra.mxu0 %v60
    %2908 = vmatprep.subr.mxu0 0.0
    %2909 = vmatpush1.msra.mxu0 %v61
    %2910 = vmatprep.subr.mxu0 0.0
    %2911 = vmatpush1.msra.mxu0 0.0
    %2912 = vmatprep.subr.mxu0 0.0
    %2913 = vmatpush1.msra.mxu0 0.0
    %2914 = vmatprep.subr.mxu0 0.0
    %2915 = vmatpush1.msra.mxu0 0.0
    %2916 = vmatprep.subr.mxu0 0.0
    %2917 = vmatpush1.msra.mxu0 0.0
    %2918 = vmatprep.subr.mxu0 0.0
    %2919 = vmatpush1.msra.mxu0 0.0
    %2920 = vmatprep.subr.mxu0 0.0
    %2921 = vmatpush1.msra.mxu0 0.0
    %2922 = vmatprep.subr.mxu0 0.0
    %2923 = vmatpush1.msra.mxu0 0.0
    %2924 = vmatprep.subr.mxu0 0.0
    %2925 = vmatpush1.msra.mxu0 0.0
    %2926 = vmatprep.subr.mxu0 0.0
    %2927 = vmatpush1.msra.mxu0 0.0
    %2928 = vmatprep.subr.mxu0 0.0
    %2929 = vmatpush1.msra.mxu0 0.0
    %2930 = vmatprep.subr.mxu0 0.0
    %2931 = vmatpush1.msra.mxu0 0.0
    %2932 = vmatprep.subr.mxu0 0.0
    %2933 = vmatpush1.msra.mxu0 0.0
    %2934 = vmatprep.subr.mxu0 0.0
    %2935 = vmatpush1.msra.mxu0 0.0
    %2936 = vmatprep.subr.mxu0 0.0
    %2937 = vmatpush1.msra.mxu0 0.0
    %2938 = vmatprep.subr.mxu0 0.0
    %2939 = vmatpush1.msra.mxu0 0.0
    %2940 = vmatprep.subr.mxu0 0.0
    %2941 = vmatpush1.msra.mxu0 0.0
    %2942 = vmatprep.subr.mxu0 0.0
    %2943 = vmatpush1.msra.mxu0 0.0
    %2944 = vmatprep.subr.mxu0 0.0
    %2945 = vmatpush1.msra.mxu0 0.0
    %2946 = vmatprep.subr.mxu0 0.0
    %2947 = vmatpush1.msra.mxu0 0.0
    %2948 = vmatprep.subr.mxu0 0.0
    %2949 = vmatpush1.msra.mxu0 0.0
    %2950 = vmatprep.subr.mxu0 0.0
    %2951 = vmatpush1.msra.mxu0 0.0
    %2952 = vmatprep.subr.mxu0 0.0
    %2953 = vmatpush1.msra.mxu0 0.0
    %2954 = vmatprep.subr.mxu0 0.0
    %2955 = vmatpush1.msra.mxu0 0.0
    %2956 = vmatprep.subr.mxu0 0.0
    %2957 = vmatpush1.msra.mxu0 0.0
    %2958 = vmatprep.mubr.f32.mxu0 0.0
    %2959 = vmatmul.mubr.f32.gmra.mrb[0].mxu0 %v2835
    %v2960 = vpop.f32.mrb[0].mxu0
    %v2961 = vadd.f32 0.0, %v2960
    %v2962 = vpop.f32.mrb[0].mxu0
    %2963 = vmatprep.mubr.f32.mxu0 0.0
    %2964 = vmatmul.mubr.f32.gmra.mrb[0].mxu0 %v2838
    %v2965 = vpop.f32.mrb[0].mxu0
    %v2966 = vadd.f32 0.0, %v2965
    %v2967 = vpop.f32.mrb[0].mxu0
    %2968 = vmatprep.mubr.f32.mxu0 0.0
    %2969 = vmatmul.mubr.f32.gmra.mrb[0].mxu0 %v2841
    %v2970 = vpop.f32.mrb[0].mxu0
    %v2971 = vadd.f32 0.0, %v2970
    %v2972 = vpop.f32.mrb[0].mxu0
    %2973 = vmatprep.mubr.f32.mxu0 0.0
    %2974 = vmatmul.mubr.f32.gmra.mrb[0].mxu0 %v2844
    %v2975 = vpop.f32.mrb[0].mxu0
    %v2976 = vadd.f32 0.0, %v2975
    %v2977 = vpop.f32.mrb[0].mxu0
    %2978 = vmatprep.mubr.f32.mxu0 0.0
    %2979 = vmatmul.mubr.f32.gmra.mrb[0].mxu0 %v2847
    %v2980 = vpop.f32.mrb[0].mxu0
    %v2981 = vadd.f32 0.0, %v2980
    %v2982 = vpop.f32.mrb[0].mxu0
    %2983 = vmatprep.mubr.f32.mxu0 0.0
    %2984 = vmatmul.mubr.f32.gmra.mrb[0].mxu0 %v2850
    %v2985 = vpop.f32.mrb[0].mxu0
    %v2986 = vadd.f32 0.0, %v2985
    %v2987 = vpop.f32.mrb[0].mxu0
    %2988 = vmatprep.mubr.f32.mxu0 0.0
    %2989 = vmatmul.mubr.f32.gmra.mrb[0].mxu0 %v2853
    %v2990 = vpop.f32.mrb[0].mxu0
    %v2991 = vadd.f32 0.0, %v2990
    %v2992 = vpop.f32.mrb[0].mxu0
    %2993 = vmatprep.mubr.f32.mxu0 0.0
    %2994 = vmatmul.mubr.f32.gmra.mrb[0].mxu0 %v2856
    %v2995 = vpop.f32.mrb[0].mxu0
    %v2996 = vadd.f32 0.0, %v2995
    %v2997 = vpop.f32.mrb[0].mxu0
    %2998 = vmatprep.mubr.f32.mxu0 0.0
    %2999 = vmatmul.mubr.f32.gmra.mrb[0].mxu0 %v2859
    %v3000 = vpop.f32.mrb[0].mxu0
    %v3001 = vadd.f32 0.0, %v3000
    %v3002 = vpop.f32.mrb[0].mxu0
    %3003 = vmatprep.mubr.f32.mxu0 0.0
    %3004 = vmatmul.mubr.f32.gmra.mrb[0].mxu0 %v2862
    %v3005 = vpop.f32.mrb[0].mxu0
    %v3006 = vadd.f32 0.0, %v3005
    %v3007 = vpop.f32.mrb[0].mxu0
    %3008 = vmatprep.mubr.f32.mxu0 0.0
    %3009 = vmatmul.mubr.f32.gmra.mrb[0].mxu0 %v2865
    %v3010 = vpop.f32.mrb[0].mxu0
    %v3011 = vadd.f32 0.0, %v3010
    %v3012 = vpop.f32.mrb[0].mxu0
    %3013 = vmatprep.mubr.f32.mxu0 0.0
    %3014 = vmatmul.mubr.f32.gmra.mrb[0].mxu0 %v2868
    %v3015 = vpop.f32.mrb[0].mxu0
    %v3016 = vadd.f32 0.0, %v3015
    %v3017 = vpop.f32.mrb[0].mxu0
    %3018 = vmatprep.mubr.f32.mxu0 0.0
    %3019 = vmatmul.mubr.f32.gmra.mrb[0].mxu0 %v2871
    %v3020 = vpop.f32.mrb[0].mxu0
    %v3021 = vadd.f32 0.0, %v3020
    %v3022 = vpop.f32.mrb[0].mxu0
    %3023 = vmatprep.mubr.f32.mxu0 0.0
    %3024 = vmatmul.mubr.f32.gmra.mrb[0].mxu0 %v2874
    %v3025 = vpop.f32.mrb[0].mxu0
    %v3026 = vadd.f32 0.0, %v3025
    %v3027 = vpop.f32.mrb[0].mxu0
    %3028 = vmatprep.mubr.f32.mxu0 0.0
    %3029 = vmatmul.mubr.f32.gmra.mrb[0].mxu0 %v2877
    %v3030 = vpop.f32.mrb[0].mxu0
    %v3031 = vadd.f32 0.0, %v3030
    %v3032 = vpop.f32.mrb[0].mxu0
    %3033 = vmatprep.mubr.f32.mxu0 0.0
    %3034 = vmatmul.mubr.f32.gmra.mrb[0].mxu0 %v2880
    %v3035 = vpop.f32.mrb[0].mxu0
    %v3036 = vadd.f32 0.0, %v3035
    %v3037 = vpop.f32.mrb[0].mxu0
    %3038 = vmatprep.mubr.f32.mxu0 0.0
    %3039 = vmatmul.mubr.f32.gmra.mrb[0].mxu0 %v2883
    %v3040 = vpop.f32.mrb[0].mxu0
    %v3041 = vadd.f32 0.0, %v3040
    %v3042 = vpop.f32.mrb[0].mxu0
    %3043 = vmatprep.mubr.f32.mxu0 0.0
    %3044 = vmatmul.mubr.f32.gmra.mrb[0].mxu0 %v2886
    %v3045 = vpop.f32.mrb[0].mxu0
    %v3046 = vadd.f32 0.0, %v3045
    %v3047 = vpop.f32.mrb[0].mxu0
    %3048 = vmatprep.mubr.f32.mxu0 0.0
    %3049 = vmatmul.mubr.f32.gmra.mrb[0].mxu0 %v2889
    %v3050 = vpop.f32.mrb[0].mxu0
    %v3051 = vadd.f32 0.0, %v3050
    %v3052 = vpop.f32.mrb[0].mxu0
    %3053 = vmatprep.mubr.f32.mxu0 0.0
    %3054 = vmatmul.mubr.f32.gmra.mrb[0].mxu0 %v2892
    %v3055 = vpop.f32.mrb[0].mxu0
    %v3056 = vadd.f32 0.0, %v3055
    %v3057 = vpop.f32.mrb[0].mxu0
    %3058 = vdwg.mxu0
    %v3059 = vsub.f32 %v3011, %v2961
    %v3060 = vsub.f32 %v3016, %v2966
    %v3061 = vsub.f32 %v3021, %v2971
    %v3062 = vsub.f32 %v3026, %v2976
    %v3063 = vsub.f32 %v3031, %v2981
    %v3064 = vsub.f32 %v3036, %v2986
    %v3065 = vsub.f32 %v3041, %v2991
    %v3066 = vsub.f32 %v3046, %v2996
    %v3067 = vsub.f32 %v3051, %v3001
    %v3068 = vsub.f32 %v3056, %v3006
    %v3069 = vmul.f32 %v3059, 1.442695
    %v3070 = vpow.pop %v3069
    %v3071 = vmul.f32 %v3060, 1.442695
    %v3072 = vpow.pop %v3071
    %v3073 = vmul.f32 %v3061, 1.442695
    %v3074 = vpow.pop %v3073
    %v3075 = vmul.f32 %v3062, 1.442695
    %v3076 = vpow.pop %v3075
    %v3077 = vmul.f32 %v3063, 1.442695
    %v3078 = vpow.pop %v3077
    %v3079 = vmul.f32 %v3064, 1.442695
    %v3080 = vpow.pop %v3079
    %v3081 = vmul.f32 %v3065, 1.442695
    %v3082 = vpow.pop %v3081
    %v3083 = vmul.f32 %v3066, 1.442695
    %v3084 = vpow.pop %v3083
    %v3085 = vmul.f32 %v3067, 1.442695
    %v3086 = vpow.pop %v3085
    %v3087 = vmul.f32 %v3068, 1.442695
    %v3088 = vpow.pop %v3087
    %v3089 = vadd.f32 %v3070, 1.0
    %v3090 = vadd.f32 %v3072, 1.0
    %v3091 = vadd.f32 %v3074, 1.0
    %v3092 = vadd.f32 %v3076, 1.0
    %v3093 = vadd.f32 %v3078, 1.0
    %v3094 = vadd.f32 %v3080, 1.0
    %v3095 = vadd.f32 %v3082, 1.0
    %v3096 = vadd.f32 %v3084, 1.0
    %v3097 = vadd.f32 %v3086, 1.0
    %v3098 = vadd.f32 %v3088, 1.0
    %v3099 = vrcp.pop %v3089
    %v3100 = vmul.f32 1.0, %v3099
    %v3101 = vrcp.pop %v3090
    %v3102 = vmul.f32 1.0, %v3101
    %v3103 = vrcp.pop %v3091
    %v3104 = vmul.f32 1.0, %v3103
    %v3105 = vrcp.pop %v3092
    %v3106 = vmul.f32 1.0, %v3105
    %v3107 = vrcp.pop %v3093
    %v3108 = vmul.f32 1.0, %v3107
    %v3109 = vrcp.pop %v3094
    %v3110 = vmul.f32 1.0, %v3109
    %v3111 = vrcp.pop %v3095
    %v3112 = vmul.f32 1.0, %v3111
    %v3113 = vrcp.pop %v3096
    %v3114 = vmul.f32 1.0, %v3113
    %v3115 = vrcp.pop %v3097
    %v3116 = vmul.f32 1.0, %v3115
    %v3117 = vrcp.pop %v3098
    %v3118 = vmul.f32 1.0, %v3117
    %v3119 = vmul.f32 %v3100, %v2563
    %v3120 = vmul.f32 %v3102, %v2569
    %v3121 = vmul.f32 %v3104, %v2575
    %v3122 = vmul.f32 %v3106, %v2581
    %v3123 = vmul.f32 %v3108, %v2587
    %v3124 = vmul.f32 %v3110, %v2593
    %v3125 = vmul.f32 %v3112, %v2599
    %v3126 = vmul.f32 %v3114, %v2605
    %v3127 = vmul.f32 %v3116, %v2611
    %v3128 = vmul.f32 %v3118, %v2617
    %v3129 = vsub.f32 1.0, %v3100
    %v3130 = vsub.f32 1.0, %v3102
    %v3131 = vsub.f32 1.0, %v3104
    %v3132 = vsub.f32 1.0, %v3106
    %v3133 = vsub.f32 1.0, %v3108
    %v3134 = vsub.f32 1.0, %v3110
    %v3135 = vsub.f32 1.0, %v3112
    %v3136 = vsub.f32 1.0, %v3114
    %v3137 = vsub.f32 1.0, %v3116
    %v3138 = vsub.f32 1.0, %v3118
    %v3139 = vmul.f32 %v3129, %v2686
    %v3140 = vmul.f32 %v3130, %v2691
    %v3141 = vmul.f32 %v3131, %v2696
    %v3142 = vmul.f32 %v3132, %v2701
    %v3143 = vmul.f32 %v3133, %v2706
    %v3144 = vmul.f32 %v3134, %v2711
    %v3145 = vmul.f32 %v3135, %v2716
    %v3146 = vmul.f32 %v3136, %v2721
    %v3147 = vmul.f32 %v3137, %v2726
    %v3148 = vmul.f32 %v3138, %v2731
    %v3149 = vadd.f32 %v3119, %v3139
    %v3150 = vadd.f32 %v3120, %v3140
    %v3151 = vadd.f32 %v3121, %v3141
    %v3152 = vadd.f32 %v3122, %v3142
    %v3153 = vadd.f32 %v3123, %v3143
    %v3154 = vadd.f32 %v3124, %v3144
    %v3155 = vadd.f32 %v3125, %v3145
    %v3156 = vadd.f32 %v3126, %v3146
    %v3157 = vadd.f32 %v3127, %v3147
    %v3158 = vadd.f32 %v3128, %v3148
    %s3159 = scalar_lea.vmem %s4, 64
    %v3160 = vld [vmem:[%s3159] sm:$0xff]
    %v3161 = vld [vmem:[%s3159 + $0x8] sm:$0xff]
    %v3162 = vld [vmem:[%s3159 + $0x10] sm:$0xff]
    %v3163 = vld [vmem:[%s3159 + $0x18] sm:$0xff]
    %v3164 = vld [vmem:[%s3159 + $0x20] sm:$0xff]
    %v3165 = vld [vmem:[%s3159 + $0x28] sm:$0xff]
    %v3166 = vld [vmem:[%s3159 + $0x30] sm:$0xff]
    %v3167 = vld [vmem:[%s3159 + $0x38] sm:$0xff]
    %v3169 = vsel %vm105, %v3149, 0
    %v3172 = vsel %vm105, %v3150, 0
    %v3175 = vsel %vm105, %v3151, 0
    %v3178 = vsel %vm105, %v3152, 0
    %v3181 = vsel %vm105, %v3153, 0
    %v3184 = vsel %vm105, %v3154, 0
    %v3187 = vsel %vm105, %v3155, 0
    %v3190 = vsel %vm105, %v3156, 0
    %v3193 = vsel %vm105, %v3157, 0
    %v3196 = vsel %vm105, %v3158, 0
    %3198 = vmatprep.subr.mxu0 0.0
    %3199 = vmatpush1.msra.mxu0 %v3160
    %3200 = vmatprep.subr.mxu0 0.0
    %3201 = vmatpush1.msra.mxu0 %v3161
    %3202 = vmatprep.subr.mxu0 0.0
    %3203 = vmatpush1.msra.mxu0 %v3162
    %3204 = vmatprep.subr.mxu0 0.0
    %3205 = vmatpush1.msra.mxu0 %v3163
    %3206 = vmatprep.subr.mxu0 0.0
    %3207 = vmatpush1.msra.mxu0 %v3164
    %3208 = vmatprep.subr.mxu0 0.0
    %3209 = vmatpush1.msra.mxu0 %v3165
    %3210 = vmatprep.subr.mxu0 0.0
    %3211 = vmatpush1.msra.mxu0 %v3166
    %3212 = vmatprep.subr.mxu0 0.0
    %3213 = vmatpush1.msra.mxu0 %v3167
    %3214 = vmatprep.subr.mxu0 0.0
    %3215 = vmatpush1.msra.mxu0 0.0
    %3216 = vmatprep.subr.mxu0 0.0
    %3217 = vmatpush1.msra.mxu0 0.0
    %3218 = vmatprep.subr.mxu0 0.0
    %3219 = vmatpush1.msra.mxu0 0.0
    %3220 = vmatprep.subr.mxu0 0.0
    %3221 = vmatpush1.msra.mxu0 0.0
    %3222 = vmatprep.subr.mxu0 0.0
    %3223 = vmatpush1.msra.mxu0 0.0
    %3224 = vmatprep.subr.mxu0 0.0
    %3225 = vmatpush1.msra.mxu0 0.0
    %3226 = vmatprep.subr.mxu0 0.0
    %3227 = vmatpush1.msra.mxu0 0.0
    %3228 = vmatprep.subr.mxu0 0.0
    %3229 = vmatpush1.msra.mxu0 0.0
    %3230 = vmatprep.subr.mxu0 0.0
    %3231 = vmatpush1.msra.mxu0 0.0
    %3232 = vmatprep.subr.mxu0 0.0
    %3233 = vmatpush1.msra.mxu0 0.0
    %3234 = vmatprep.subr.mxu0 0.0
    %3235 = vmatpush1.msra.mxu0 0.0
    %3236 = vmatprep.subr.mxu0 0.0
    %3237 = vmatpush1.msra.mxu0 0.0
    %3238 = vmatprep.subr.mxu0 0.0
    %3239 = vmatpush1.msra.mxu0 0.0
    %3240 = vmatprep.subr.mxu0 0.0
    %3241 = vmatpush1.msra.mxu0 0.0
    %3242 = vmatprep.subr.mxu0 0.0
    %3243 = vmatpush1.msra.mxu0 0.0
    %3244 = vmatprep.subr.mxu0 0.0
    %3245 = vmatpush1.msra.mxu0 0.0
    %3246 = vmatprep.subr.mxu0 0.0
    %3247 = vmatpush1.msra.mxu0 0.0
    %3248 = vmatprep.subr.mxu0 0.0
    %3249 = vmatpush1.msra.mxu0 0.0
    %3250 = vmatprep.subr.mxu0 0.0
    %3251 = vmatpush1.msra.mxu0 0.0
    %3252 = vmatprep.subr.mxu0 0.0
    %3253 = vmatpush1.msra.mxu0 0.0
    %3254 = vmatprep.subr.mxu0 0.0
    %3255 = vmatpush1.msra.mxu0 0.0
    %3256 = vmatprep.subr.mxu0 0.0
    %3257 = vmatpush1.msra.mxu0 0.0
    %3258 = vmatprep.subr.mxu0 0.0
    %3259 = vmatpush1.msra.mxu0 0.0
    %3260 = vmatprep.subr.mxu0 0.0
    %3261 = vmatpush1.msra.mxu0 0.0
    %3262 = vmatprep.mubr.f32.mxu0 0.0
    %3263 = vmatmul.mubr.f32.gmra.mrb[0].mxu0 %v3169
    %v3264 = vpop.f32.mrb[0].mxu0
    %v3265 = vadd.f32 0.0, %v3264
    %v3266 = vpop.f32.mrb[0].mxu0
    %3267 = vmatprep.mubr.f32.mxu0 0.0
    %3268 = vmatmul.mubr.f32.gmra.mrb[0].mxu0 %v3172
    %v3269 = vpop.f32.mrb[0].mxu0
    %v3270 = vadd.f32 0.0, %v3269
    %v3271 = vpop.f32.mrb[0].mxu0
    %3272 = vmatprep.mubr.f32.mxu0 0.0
    %3273 = vmatmul.mubr.f32.gmra.mrb[0].mxu0 %v3175
    %v3274 = vpop.f32.mrb[0].mxu0
    %v3275 = vadd.f32 0.0, %v3274
    %v3276 = vpop.f32.mrb[0].mxu0
    %3277 = vmatprep.mubr.f32.mxu0 0.0
    %3278 = vmatmul.mubr.f32.gmra.mrb[0].mxu0 %v3178
    %v3279 = vpop.f32.mrb[0].mxu0
    %v3280 = vadd.f32 0.0, %v3279
    %v3281 = vpop.f32.mrb[0].mxu0
    %3282 = vmatprep.mubr.f32.mxu0 0.0
    %3283 = vmatmul.mubr.f32.gmra.mrb[0].mxu0 %v3181
    %v3284 = vpop.f32.mrb[0].mxu0
    %v3285 = vadd.f32 0.0, %v3284
    %v3286 = vpop.f32.mrb[0].mxu0
    %3287 = vmatprep.mubr.f32.mxu0 0.0
    %3288 = vmatmul.mubr.f32.gmra.mrb[0].mxu0 %v3184
    %v3289 = vpop.f32.mrb[0].mxu0
    %v3290 = vadd.f32 0.0, %v3289
    %v3291 = vpop.f32.mrb[0].mxu0
    %3292 = vmatprep.mubr.f32.mxu0 0.0
    %3293 = vmatmul.mubr.f32.gmra.mrb[0].mxu0 %v3187
    %v3294 = vpop.f32.mrb[0].mxu0
    %v3295 = vadd.f32 0.0, %v3294
    %v3296 = vpop.f32.mrb[0].mxu0
    %3297 = vmatprep.mubr.f32.mxu0 0.0
    %3298 = vmatmul.mubr.f32.gmra.mrb[0].mxu0 %v3190
    %v3299 = vpop.f32.mrb[0].mxu0
    %v3300 = vadd.f32 0.0, %v3299
    %v3301 = vpop.f32.mrb[0].mxu0
    %3302 = vmatprep.mubr.f32.mxu0 0.0
    %3303 = vmatmul.mubr.f32.gmra.mrb[0].mxu0 %v3193
    %v3304 = vpop.f32.mrb[0].mxu0
    %v3305 = vadd.f32 0.0, %v3304
    %v3306 = vpop.f32.mrb[0].mxu0
    %3307 = vmatprep.mubr.f32.mxu0 0.0
    %3308 = vmatmul.mubr.f32.gmra.mrb[0].mxu0 %v3196
    %v3309 = vpop.f32.mrb[0].mxu0
    %v3310 = vadd.f32 0.0, %v3309
    %v3311 = vpop.f32.mrb[0].mxu0
    %3312 = vdwg.mxu0
    %v3313 = vadd.f32 %v2090, %v3265
    %v3314 = vadd.f32 %v2091, %v3270
    %v3315 = vadd.f32 %v2092, %v3275
    %v3316 = vadd.f32 %v2093, %v3280
    %v3317 = vadd.f32 %v2094, %v3285
    %v3318 = vadd.f32 %v2095, %v3290
    %v3319 = vadd.f32 %v2096, %v3295
    %v3320 = vadd.f32 %v2097, %v3300
    %v3321 = vadd.f32 %v2098, %v3305
    %v3322 = vadd.f32 %v2099, %v3310
    %v3323 = vlaneseq
    %v3324 = vshrl.u32 %v3323, 7
    %v3325 = vsub.s32 3, %v3324
    %v3326 = vrot.slane %v2101, %v3325
    %v3327 = vadd.f32 %v3313, %v3326
    %v3328 = vadd.f32 %v3314, %v3326
    %v3329 = vadd.f32 %v3315, %v3326
    %v3330 = vadd.f32 %v3316, %v3326
    %v3331 = vadd.f32 %v3317, %v3326
    %v3332 = vadd.f32 %v3318, %v3326
    %v3333 = vadd.f32 %v3319, %v3326
    %v3334 = vadd.f32 %v3320, %v3326
    %v3335 = vadd.f32 %v3321, %v3326
    %v3336 = vadd.f32 %v3322, %v3326
    %v3337 = vmul.f32 %v3327, %v3327
    %v3338 = vmul.f32 %v3328, %v3328
    %v3339 = vmul.f32 %v3329, %v3329
    %v3340 = vmul.f32 %v3330, %v3330
    %v3341 = vmul.f32 %v3331, %v3331
    %v3342 = vmul.f32 %v3332, %v3332
    %v3343 = vmul.f32 %v3333, %v3333
    %v3344 = vmul.f32 %v3334, %v3334
    %v3345 = vmul.f32 %v3335, %v3335
    %v3346 = vmul.f32 %v3336, %v3336
    %v3348 = vsel %vm105, %v3327, 0
    %v3351 = vsel %vm105, %v3328, 0
    %v3354 = vsel %vm105, %v3329, 0
    %v3357 = vsel %vm105, %v3330, 0
    %v3360 = vsel %vm105, %v3331, 0
    %v3363 = vsel %vm105, %v3332, 0
    %v3366 = vsel %vm105, %v3333, 0
    %v3369 = vsel %vm105, %v3334, 0
    %v3372 = vsel %vm105, %v3335, 0
    %v3375 = vsel %vm105, %v3336, 0
    %v3378 = vsel %vm105, %v3337, 0
    %v3381 = vsel %vm105, %v3338, 0
    %v3384 = vsel %vm105, %v3339, 0
    %v3387 = vsel %vm105, %v3340, 0
    %v3390 = vsel %vm105, %v3341, 0
    %v3393 = vsel %vm105, %v3342, 0
    %v3396 = vsel %vm105, %v3343, 0
    %v3399 = vsel %vm105, %v3344, 0
    %v3402 = vsel %vm105, %v3345, 0
    %v3405 = vsel %vm105, %v3346, 0
    %3407 = vmatprep.subr.mxu0 0.0
    %3408 = vmatpush1.msra.mxu0 %v46
    %3409 = vmatprep.subr.mxu0 0.0
    %3410 = vmatpush1.msra.mxu0 %v47
    %3411 = vmatprep.subr.mxu0 0.0
    %3412 = vmatpush1.msra.mxu0 %v48
    %3413 = vmatprep.subr.mxu0 0.0
    %3414 = vmatpush1.msra.mxu0 %v49
    %3415 = vmatprep.subr.mxu0 0.0
    %3416 = vmatpush1.msra.mxu0 %v50
    %3417 = vmatprep.subr.mxu0 0.0
    %3418 = vmatpush1.msra.mxu0 %v51
    %3419 = vmatprep.subr.mxu0 0.0
    %3420 = vmatpush1.msra.mxu0 %v52
    %3421 = vmatprep.subr.mxu0 0.0
    %3422 = vmatpush1.msra.mxu0 %v53
    %3423 = vmatprep.subr.mxu0 0.0
    %3424 = vmatpush1.msra.mxu0 0.0
    %3425 = vmatprep.subr.mxu0 0.0
    %3426 = vmatpush1.msra.mxu0 0.0
    %3427 = vmatprep.subr.mxu0 0.0
    %3428 = vmatpush1.msra.mxu0 0.0
    %3429 = vmatprep.subr.mxu0 0.0
    %3430 = vmatpush1.msra.mxu0 0.0
    %3431 = vmatprep.subr.mxu0 0.0
    %3432 = vmatpush1.msra.mxu0 0.0
    %3433 = vmatprep.subr.mxu0 0.0
    %3434 = vmatpush1.msra.mxu0 0.0
    %3435 = vmatprep.subr.mxu0 0.0
    %3436 = vmatpush1.msra.mxu0 0.0
    %3437 = vmatprep.subr.mxu0 0.0
    %3438 = vmatpush1.msra.mxu0 0.0
    %3439 = vmatprep.subr.mxu0 0.0
    %3440 = vmatpush1.msra.mxu0 0.0
    %3441 = vmatprep.subr.mxu0 0.0
    %3442 = vmatpush1.msra.mxu0 0.0
    %3443 = vmatprep.subr.mxu0 0.0
    %3444 = vmatpush1.msra.mxu0 0.0
    %3445 = vmatprep.subr.mxu0 0.0
    %3446 = vmatpush1.msra.mxu0 0.0
    %3447 = vmatprep.subr.mxu0 0.0
    %3448 = vmatpush1.msra.mxu0 0.0
    %3449 = vmatprep.subr.mxu0 0.0
    %3450 = vmatpush1.msra.mxu0 0.0
    %3451 = vmatprep.subr.mxu0 0.0
    %3452 = vmatpush1.msra.mxu0 0.0
    %3453 = vmatprep.subr.mxu0 0.0
    %3454 = vmatpush1.msra.mxu0 0.0
    %3455 = vmatprep.subr.mxu0 0.0
    %3456 = vmatpush1.msra.mxu0 0.0
    %3457 = vmatprep.subr.mxu0 0.0
    %3458 = vmatpush1.msra.mxu0 0.0
    %3459 = vmatprep.subr.mxu0 0.0
    %3460 = vmatpush1.msra.mxu0 0.0
    %3461 = vmatprep.subr.mxu0 0.0
    %3462 = vmatpush1.msra.mxu0 0.0
    %3463 = vmatprep.subr.mxu0 0.0
    %3464 = vmatpush1.msra.mxu0 0.0
    %3465 = vmatprep.subr.mxu0 0.0
    %3466 = vmatpush1.msra.mxu0 0.0
    %3467 = vmatprep.subr.mxu0 0.0
    %3468 = vmatpush1.msra.mxu0 0.0
    %3469 = vmatprep.subr.mxu0 0.0
    %3470 = vmatpush1.msra.mxu0 0.0
    %3471 = vmatprep.mubr.f32.mxu0 0.0
    %3472 = vmatmul.mubr.f32.gmra.mrb[0].mxu0 %v3348
    %v3473 = vpop.f32.mrb[0].mxu0
    %v3474 = vadd.f32 0.0, %v3473
    %v3475 = vpop.f32.mrb[0].mxu0
    %3476 = vmatprep.mubr.f32.mxu0 0.0
    %3477 = vmatmul.mubr.f32.gmra.mrb[0].mxu0 %v3351
    %v3478 = vpop.f32.mrb[0].mxu0
    %v3479 = vadd.f32 0.0, %v3478
    %v3480 = vpop.f32.mrb[0].mxu0
    %3481 = vmatprep.mubr.f32.mxu0 0.0
    %3482 = vmatmul.mubr.f32.gmra.mrb[0].mxu0 %v3354
    %v3483 = vpop.f32.mrb[0].mxu0
    %v3484 = vadd.f32 0.0, %v3483
    %v3485 = vpop.f32.mrb[0].mxu0
    %3486 = vmatprep.mubr.f32.mxu0 0.0
    %3487 = vmatmul.mubr.f32.gmra.mrb[0].mxu0 %v3357
    %v3488 = vpop.f32.mrb[0].mxu0
    %v3489 = vadd.f32 0.0, %v3488
    %v3490 = vpop.f32.mrb[0].mxu0
    %3491 = vmatprep.mubr.f32.mxu0 0.0
    %3492 = vmatmul.mubr.f32.gmra.mrb[0].mxu0 %v3360
    %v3493 = vpop.f32.mrb[0].mxu0
    %v3494 = vadd.f32 0.0, %v3493
    %v3495 = vpop.f32.mrb[0].mxu0
    %3496 = vmatprep.mubr.f32.mxu0 0.0
    %3497 = vmatmul.mubr.f32.gmra.mrb[0].mxu0 %v3363
    %v3498 = vpop.f32.mrb[0].mxu0
    %v3499 = vadd.f32 0.0, %v3498
    %v3500 = vpop.f32.mrb[0].mxu0
    %3501 = vmatprep.mubr.f32.mxu0 0.0
    %3502 = vmatmul.mubr.f32.gmra.mrb[0].mxu0 %v3366
    %v3503 = vpop.f32.mrb[0].mxu0
    %v3504 = vadd.f32 0.0, %v3503
    %v3505 = vpop.f32.mrb[0].mxu0
    %3506 = vmatprep.mubr.f32.mxu0 0.0
    %3507 = vmatmul.mubr.f32.gmra.mrb[0].mxu0 %v3369
    %v3508 = vpop.f32.mrb[0].mxu0
    %v3509 = vadd.f32 0.0, %v3508
    %v3510 = vpop.f32.mrb[0].mxu0
    %3511 = vmatprep.mubr.f32.mxu0 0.0
    %3512 = vmatmul.mubr.f32.gmra.mrb[0].mxu0 %v3372
    %v3513 = vpop.f32.mrb[0].mxu0
    %v3514 = vadd.f32 0.0, %v3513
    %v3515 = vpop.f32.mrb[0].mxu0
    %3516 = vmatprep.mubr.f32.mxu0 0.0
    %3517 = vmatmul.mubr.f32.gmra.mrb[0].mxu0 %v3375
    %v3518 = vpop.f32.mrb[0].mxu0
    %v3519 = vadd.f32 0.0, %v3518
    %v3520 = vpop.f32.mrb[0].mxu0
    %3521 = vmatprep.mubr.f32.mxu0 0.0
    %3522 = vmatmul.mubr.f32.gmra.mrb[0].mxu0 %v3378
    %v3523 = vpop.f32.mrb[0].mxu0
    %v3524 = vadd.f32 0.0, %v3523
    %v3525 = vpop.f32.mrb[0].mxu0
    %3526 = vmatprep.mubr.f32.mxu0 0.0
    %3527 = vmatmul.mubr.f32.gmra.mrb[0].mxu0 %v3381
    %v3528 = vpop.f32.mrb[0].mxu0
    %v3529 = vadd.f32 0.0, %v3528
    %v3530 = vpop.f32.mrb[0].mxu0
    %3531 = vmatprep.mubr.f32.mxu0 0.0
    %3532 = vmatmul.mubr.f32.gmra.mrb[0].mxu0 %v3384
    %v3533 = vpop.f32.mrb[0].mxu0
    %v3534 = vadd.f32 0.0, %v3533
    %v3535 = vpop.f32.mrb[0].mxu0
    %3536 = vmatprep.mubr.f32.mxu0 0.0
    %3537 = vmatmul.mubr.f32.gmra.mrb[0].mxu0 %v3387
    %v3538 = vpop.f32.mrb[0].mxu0
    %v3539 = vadd.f32 0.0, %v3538
    %v3540 = vpop.f32.mrb[0].mxu0
    %3541 = vmatprep.mubr.f32.mxu0 0.0
    %3542 = vmatmul.mubr.f32.gmra.mrb[0].mxu0 %v3390
    %v3543 = vpop.f32.mrb[0].mxu0
    %v3544 = vadd.f32 0.0, %v3543
    %v3545 = vpop.f32.mrb[0].mxu0
    %3546 = vmatprep.mubr.f32.mxu0 0.0
    %3547 = vmatmul.mubr.f32.gmra.mrb[0].mxu0 %v3393
    %v3548 = vpop.f32.mrb[0].mxu0
    %v3549 = vadd.f32 0.0, %v3548
    %v3550 = vpop.f32.mrb[0].mxu0
    %3551 = vmatprep.mubr.f32.mxu0 0.0
    %3552 = vmatmul.mubr.f32.gmra.mrb[0].mxu0 %v3396
    %v3553 = vpop.f32.mrb[0].mxu0
    %v3554 = vadd.f32 0.0, %v3553
    %v3555 = vpop.f32.mrb[0].mxu0
    %3556 = vmatprep.mubr.f32.mxu0 0.0
    %3557 = vmatmul.mubr.f32.gmra.mrb[0].mxu0 %v3399
    %v3558 = vpop.f32.mrb[0].mxu0
    %v3559 = vadd.f32 0.0, %v3558
    %v3560 = vpop.f32.mrb[0].mxu0
    %3561 = vmatprep.mubr.f32.mxu0 0.0
    %3562 = vmatmul.mubr.f32.gmra.mrb[0].mxu0 %v3402
    %v3563 = vpop.f32.mrb[0].mxu0
    %v3564 = vadd.f32 0.0, %v3563
    %v3565 = vpop.f32.mrb[0].mxu0
    %3566 = vmatprep.mubr.f32.mxu0 0.0
    %3567 = vmatmul.mubr.f32.gmra.mrb[0].mxu0 %v3405
    %v3568 = vpop.f32.mrb[0].mxu0
    %v3569 = vadd.f32 0.0, %v3568
    %v3570 = vpop.f32.mrb[0].mxu0
    %3571 = vdwg.mxu0
    %v3572 = vmul.f32 %v3474, %v3474
    %v3573 = vmul.f32 %v3479, %v3479
    %v3574 = vmul.f32 %v3484, %v3484
    %v3575 = vmul.f32 %v3489, %v3489
    %v3576 = vmul.f32 %v3494, %v3494
    %v3577 = vmul.f32 %v3499, %v3499
    %v3578 = vmul.f32 %v3504, %v3504
    %v3579 = vmul.f32 %v3509, %v3509
    %v3580 = vmul.f32 %v3514, %v3514
    %v3581 = vmul.f32 %v3519, %v3519
    %v3582 = vsub.f32 %v3524, %v3572
    %v3583 = vsub.f32 %v3529, %v3573
    %v3584 = vsub.f32 %v3534, %v3574
    %v3585 = vsub.f32 %v3539, %v3575
    %v3586 = vsub.f32 %v3544, %v3576
    %v3587 = vsub.f32 %v3549, %v3577
    %v3588 = vsub.f32 %v3554, %v3578
    %v3589 = vsub.f32 %v3559, %v3579
    %v3590 = vsub.f32 %v3564, %v3580
    %v3591 = vsub.f32 %v3569, %v3581
    %v3592 = vsub.f32 %v3327, %v3474
    %v3593 = vsub.f32 %v3328, %v3479
    %v3594 = vsub.f32 %v3329, %v3484
    %v3595 = vsub.f32 %v3330, %v3489
    %v3596 = vsub.f32 %v3331, %v3494
    %v3597 = vsub.f32 %v3332, %v3499
    %v3598 = vsub.f32 %v3333, %v3504
    %v3599 = vsub.f32 %v3334, %v3509
    %v3600 = vsub.f32 %v3335, %v3514
    %v3601 = vsub.f32 %v3336, %v3519
    %v3602 = vadd.f32 %v3582, 1e-05
    %v3603 = vadd.f32 %v3583, 1e-05
    %v3604 = vadd.f32 %v3584, 1e-05
    %v3605 = vadd.f32 %v3585, 1e-05
    %v3606 = vadd.f32 %v3586, 1e-05
    %v3607 = vadd.f32 %v3587, 1e-05
    %v3608 = vadd.f32 %v3588, 1e-05
    %v3609 = vadd.f32 %v3589, 1e-05
    %v3610 = vadd.f32 %v3590, 1e-05
    %v3611 = vadd.f32 %v3591, 1e-05
    %v3612 = vrsqrt.pop %v3602
    %v3613 = vrsqrt.pop %v3603
    %v3614 = vrsqrt.pop %v3604
    %v3615 = vrsqrt.pop %v3605
    %v3616 = vrsqrt.pop %v3606
    %v3617 = vrsqrt.pop %v3607
    %v3618 = vrsqrt.pop %v3608
    %v3619 = vrsqrt.pop %v3609
    %v3620 = vrsqrt.pop %v3610
    %v3621 = vrsqrt.pop %v3611
    %v3622 = vmul.f32 %v3592, %v3612
    %v3623 = vmul.f32 %v3593, %v3613
    %v3624 = vmul.f32 %v3594, %v3614
    %v3625 = vmul.f32 %v3595, %v3615
    %v3626 = vmul.f32 %v3596, %v3616
    %v3627 = vmul.f32 %v3597, %v3617
    %v3628 = vmul.f32 %v3598, %v3618
    %v3629 = vmul.f32 %v3599, %v3619
    %v3630 = vmul.f32 %v3600, %v3620
    %v3631 = vmul.f32 %v3601, %v3621
    %v3632 = vlaneseq
    %v3633 = vshrl.u32 %v3632, 7
    %v3634 = vsub.s32 4, %v3633
    %v3635 = vrot.slane %v2101, %v3634
    %v3636 = vmul.f32 %v3622, %v3635
    %v3637 = vmul.f32 %v3623, %v3635
    %v3638 = vmul.f32 %v3624, %v3635
    %v3639 = vmul.f32 %v3625, %v3635
    %v3640 = vmul.f32 %v3626, %v3635
    %v3641 = vmul.f32 %v3627, %v3635
    %v3642 = vmul.f32 %v3628, %v3635
    %v3643 = vmul.f32 %v3629, %v3635
    %v3644 = vmul.f32 %v3630, %v3635
    %v3645 = vmul.f32 %v3631, %v3635
    %v3646 = vlaneseq
    %v3647 = vshrl.u32 %v3646, 7
    %v3648 = vsub.s32 5, %v3647
    %v3649 = vrot.slane %v2101, %v3648
    %v3650 = vadd.f32 %v3636, %v3649
    %v3651 = vadd.f32 %v3637, %v3649
    %v3652 = vadd.f32 %v3638, %v3649
    %v3653 = vadd.f32 %v3639, %v3649
    %v3654 = vadd.f32 %v3640, %v3649
    %v3655 = vadd.f32 %v3641, %v3649
    %v3656 = vadd.f32 %v3642, %v3649
    %v3657 = vadd.f32 %v3643, %v3649
    %v3658 = vadd.f32 %v3644, %v3649
    %v3659 = vadd.f32 %v3645, %v3649
    %s3660 = scalar_lea.vmem %s5, 128
    %v3661 = vld [vmem:[%s3660] sm:$0xff]
    %v3662 = vld [vmem:[%s3660 + $0x8] sm:$0xff]
    %v3663 = vld [vmem:[%s3660 + $0x10] sm:$0xff]
    %v3664 = vld [vmem:[%s3660 + $0x18] sm:$0xff]
    %v3665 = vld [vmem:[%s3660 + $0x20] sm:$0xff]
    %v3666 = vld [vmem:[%s3660 + $0x28] sm:$0xff]
    %v3667 = vld [vmem:[%s3660 + $0x30] sm:$0xff]
    %v3668 = vld [vmem:[%s3660 + $0x38] sm:$0xff]
    %v3669 = vld [vmem:[%s3660 + $0x40] sm:$0xff]
    %v3670 = vld [vmem:[%s3660 + $0x48] sm:$0xff]
    %v3671 = vld [vmem:[%s3660 + $0x50] sm:$0xff]
    %v3672 = vld [vmem:[%s3660 + $0x58] sm:$0xff]
    %v3673 = vld [vmem:[%s3660 + $0x60] sm:$0xff]
    %v3674 = vld [vmem:[%s3660 + $0x68] sm:$0xff]
    %v3675 = vld [vmem:[%s3660 + $0x70] sm:$0xff]
    %v3676 = vld [vmem:[%s3660 + $0x78] sm:$0xff]
    %v3677 = vlaneseq
    %v3678 = vshrl.u32 %v3677, 7
    %v3679 = vsub.s32 6, %v3678
    %v3680 = vrot.slane %v2101, %v3679
    %v3681 = vlaneseq
    %v3682 = vshrl.u32 %v3681, 7
    %v3683 = vsub.s32 6, %v3682
    %v3684 = vrot.slane %v2102, %v3683
    %v3686 = vsel %vm105, %v3650, 0
    %v3689 = vsel %vm105, %v3651, 0
    %v3692 = vsel %vm105, %v3652, 0
    %v3695 = vsel %vm105, %v3653, 0
    %v3698 = vsel %vm105, %v3654, 0
    %v3701 = vsel %vm105, %v3655, 0
    %v3704 = vsel %vm105, %v3656, 0
    %v3707 = vsel %vm105, %v3657, 0
    %v3710 = vsel %vm105, %v3658, 0
    %v3713 = vsel %vm105, %v3659, 0
    %3715 = vmatprep.subr.mxu0 %v3662
    %3716 = vmatpush1.msra.mxu0 %v3661
    %3717 = vmatprep.subr.mxu0 %v3664
    %3718 = vmatpush1.msra.mxu0 %v3663
    %3719 = vmatprep.subr.mxu0 %v3666
    %3720 = vmatpush1.msra.mxu0 %v3665
    %3721 = vmatprep.subr.mxu0 %v3668
    %3722 = vmatpush1.msra.mxu0 %v3667
    %3723 = vmatprep.subr.mxu0 %v3670
    %3724 = vmatpush1.msra.mxu0 %v3669
    %3725 = vmatprep.subr.mxu0 %v3672
    %3726 = vmatpush1.msra.mxu0 %v3671
    %3727 = vmatprep.subr.mxu0 %v3674
    %3728 = vmatpush1.msra.mxu0 %v3673
    %3729 = vmatprep.subr.mxu0 %v3676
    %3730 = vmatpush1.msra.mxu0 %v3675
    %3731 = vmatprep.subr.mxu0 0.0
    %3732 = vmatpush1.msra.mxu0 0.0
    %3733 = vmatprep.subr.mxu0 0.0
    %3734 = vmatpush1.msra.mxu0 0.0
    %3735 = vmatprep.subr.mxu0 0.0
    %3736 = vmatpush1.msra.mxu0 0.0
    %3737 = vmatprep.subr.mxu0 0.0
    %3738 = vmatpush1.msra.mxu0 0.0
    %3739 = vmatprep.subr.mxu0 0.0
    %3740 = vmatpush1.msra.mxu0 0.0
    %3741 = vmatprep.subr.mxu0 0.0
    %3742 = vmatpush1.msra.mxu0 0.0
    %3743 = vmatprep.subr.mxu0 0.0
    %3744 = vmatpush1.msra.mxu0 0.0
    %3745 = vmatprep.subr.mxu0 0.0
    %3746 = vmatpush1.msra.mxu0 0.0
    %3747 = vmatprep.subr.mxu0 0.0
    %3748 = vmatpush1.msra.mxu0 0.0
    %3749 = vmatprep.subr.mxu0 0.0
    %3750 = vmatpush1.msra.mxu0 0.0
    %3751 = vmatprep.subr.mxu0 0.0
    %3752 = vmatpush1.msra.mxu0 0.0
    %3753 = vmatprep.subr.mxu0 0.0
    %3754 = vmatpush1.msra.mxu0 0.0
    %3755 = vmatprep.subr.mxu0 0.0
    %3756 = vmatpush1.msra.mxu0 0.0
    %3757 = vmatprep.subr.mxu0 0.0
    %3758 = vmatpush1.msra.mxu0 0.0
    %3759 = vmatprep.subr.mxu0 0.0
    %3760 = vmatpush1.msra.mxu0 0.0
    %3761 = vmatprep.subr.mxu0 0.0
    %3762 = vmatpush1.msra.mxu0 0.0
    %3763 = vmatprep.subr.mxu0 0.0
    %3764 = vmatpush1.msra.mxu0 0.0
    %3765 = vmatprep.subr.mxu0 0.0
    %3766 = vmatpush1.msra.mxu0 0.0
    %3767 = vmatprep.subr.mxu0 0.0
    %3768 = vmatpush1.msra.mxu0 0.0
    %3769 = vmatprep.subr.mxu0 0.0
    %3770 = vmatpush1.msra.mxu0 0.0
    %3771 = vmatprep.subr.mxu0 0.0
    %3772 = vmatpush1.msra.mxu0 0.0
    %3773 = vmatprep.subr.mxu0 0.0
    %3774 = vmatpush1.msra.mxu0 0.0
    %3775 = vmatprep.subr.mxu0 0.0
    %3776 = vmatpush1.msra.mxu0 0.0
    %3777 = vmatprep.subr.mxu0 0.0
    %3778 = vmatpush1.msra.mxu0 0.0
    %3779 = vmatprep.mubr.f32.mxu0 0.0
    %3780 = vmatmul.mubr.f32.gmra.mrb[0].mxu0 %v3686
    %v3781 = vpop.f32.mrb[0].mxu0
    %v3782 = vadd.f32 %v3680, %v3781
    %v3783 = vpop.f32.mrb[0].mxu0
    %v3784 = vadd.f32 %v3684, %v3783
    %3785 = vmatprep.mubr.f32.mxu0 0.0
    %3786 = vmatmul.mubr.f32.gmra.mrb[0].mxu0 %v3689
    %v3787 = vpop.f32.mrb[0].mxu0
    %v3788 = vadd.f32 %v3680, %v3787
    %v3789 = vpop.f32.mrb[0].mxu0
    %v3790 = vadd.f32 %v3684, %v3789
    %3791 = vmatprep.mubr.f32.mxu0 0.0
    %3792 = vmatmul.mubr.f32.gmra.mrb[0].mxu0 %v3692
    %v3793 = vpop.f32.mrb[0].mxu0
    %v3794 = vadd.f32 %v3680, %v3793
    %v3795 = vpop.f32.mrb[0].mxu0
    %v3796 = vadd.f32 %v3684, %v3795
    %3797 = vmatprep.mubr.f32.mxu0 0.0
    %3798 = vmatmul.mubr.f32.gmra.mrb[0].mxu0 %v3695
    %v3799 = vpop.f32.mrb[0].mxu0
    %v3800 = vadd.f32 %v3680, %v3799
    %v3801 = vpop.f32.mrb[0].mxu0
    %v3802 = vadd.f32 %v3684, %v3801
    %3803 = vmatprep.mubr.f32.mxu0 0.0
    %3804 = vmatmul.mubr.f32.gmra.mrb[0].mxu0 %v3698
    %v3805 = vpop.f32.mrb[0].mxu0
    %v3806 = vadd.f32 %v3680, %v3805
    %v3807 = vpop.f32.mrb[0].mxu0
    %v3808 = vadd.f32 %v3684, %v3807
    %3809 = vmatprep.mubr.f32.mxu0 0.0
    %3810 = vmatmul.mubr.f32.gmra.mrb[0].mxu0 %v3701
    %v3811 = vpop.f32.mrb[0].mxu0
    %v3812 = vadd.f32 %v3680, %v3811
    %v3813 = vpop.f32.mrb[0].mxu0
    %v3814 = vadd.f32 %v3684, %v3813
    %3815 = vmatprep.mubr.f32.mxu0 0.0
    %3816 = vmatmul.mubr.f32.gmra.mrb[0].mxu0 %v3704
    %v3817 = vpop.f32.mrb[0].mxu0
    %v3818 = vadd.f32 %v3680, %v3817
    %v3819 = vpop.f32.mrb[0].mxu0
    %v3820 = vadd.f32 %v3684, %v3819
    %3821 = vmatprep.mubr.f32.mxu0 0.0
    %3822 = vmatmul.mubr.f32.gmra.mrb[0].mxu0 %v3707
    %v3823 = vpop.f32.mrb[0].mxu0
    %v3824 = vadd.f32 %v3680, %v3823
    %v3825 = vpop.f32.mrb[0].mxu0
    %v3826 = vadd.f32 %v3684, %v3825
    %3827 = vmatprep.mubr.f32.mxu0 0.0
    %3828 = vmatmul.mubr.f32.gmra.mrb[0].mxu0 %v3710
    %v3829 = vpop.f32.mrb[0].mxu0
    %v3830 = vadd.f32 %v3680, %v3829
    %v3831 = vpop.f32.mrb[0].mxu0
    %v3832 = vadd.f32 %v3684, %v3831
    %3833 = vmatprep.mubr.f32.mxu0 0.0
    %3834 = vmatmul.mubr.f32.gmra.mrb[0].mxu0 %v3713
    %v3835 = vpop.f32.mrb[0].mxu0
    %v3836 = vadd.f32 %v3680, %v3835
    %v3837 = vpop.f32.mrb[0].mxu0
    %v3838 = vadd.f32 %v3684, %v3837
    %3839 = vdwg.mxu0
    %v3840 = vmul.f32 %v3782, 0.5
    %v3841 = vmul.f32 %v3784, 0.5
    %v3842 = vmul.f32 %v3788, 0.5
    %v3843 = vmul.f32 %v3790, 0.5
    %v3844 = vmul.f32 %v3794, 0.5
    %v3845 = vmul.f32 %v3796, 0.5
    %v3846 = vmul.f32 %v3800, 0.5
    %v3847 = vmul.f32 %v3802, 0.5
    %v3848 = vmul.f32 %v3806, 0.5
    %v3849 = vmul.f32 %v3808, 0.5
    %v3850 = vmul.f32 %v3812, 0.5
    %v3851 = vmul.f32 %v3814, 0.5
    %v3852 = vmul.f32 %v3818, 0.5
    %v3853 = vmul.f32 %v3820, 0.5
    %v3854 = vmul.f32 %v3824, 0.5
    %v3855 = vmul.f32 %v3826, 0.5
    %v3856 = vmul.f32 %v3830, 0.5
    %v3857 = vmul.f32 %v3832, 0.5
    %v3858 = vmul.f32 %v3836, 0.5
    %v3859 = vmul.f32 %v3838, 0.5
    %v3860 = vmul.f32 %v3782, 0.70710677
    %v3861 = vmul.f32 %v3784, 0.70710677
    %v3862 = vmul.f32 %v3788, 0.70710677
    %v3863 = vmul.f32 %v3790, 0.70710677
    %v3864 = vmul.f32 %v3794, 0.70710677
    %v3865 = vmul.f32 %v3796, 0.70710677
    %v3866 = vmul.f32 %v3800, 0.70710677
    %v3867 = vmul.f32 %v3802, 0.70710677
    %v3868 = vmul.f32 %v3806, 0.70710677
    %v3869 = vmul.f32 %v3808, 0.70710677
    %v3870 = vmul.f32 %v3812, 0.70710677
    %v3871 = vmul.f32 %v3814, 0.70710677
    %v3872 = vmul.f32 %v3818, 0.70710677
    %v3873 = vmul.f32 %v3820, 0.70710677
    %v3874 = vmul.f32 %v3824, 0.70710677
    %v3875 = vmul.f32 %v3826, 0.70710677
    %v3876 = vmul.f32 %v3830, 0.70710677
    %v3877 = vmul.f32 %v3832, 0.70710677
    %v3878 = vmul.f32 %v3836, 0.70710677
    %v3879 = vmul.f32 %v3838, 0.70710677
    %v3880 = verf.f32.pop %v3860
    %v3881 = verf.f32.pop %v3861
    %v3882 = verf.f32.pop %v3862
    %v3883 = verf.f32.pop %v3863
    %v3884 = verf.f32.pop %v3864
    %v3885 = verf.f32.pop %v3865
    %v3886 = verf.f32.pop %v3866
    %v3887 = verf.f32.pop %v3867
    %v3888 = verf.f32.pop %v3868
    %v3889 = verf.f32.pop %v3869
    %v3890 = verf.f32.pop %v3870
    %v3891 = verf.f32.pop %v3871
    %v3892 = verf.f32.pop %v3872
    %v3893 = verf.f32.pop %v3873
    %v3894 = verf.f32.pop %v3874
    %v3895 = verf.f32.pop %v3875
    %v3896 = verf.f32.pop %v3876
    %v3897 = verf.f32.pop %v3877
    %v3898 = verf.f32.pop %v3878
    %v3899 = verf.f32.pop %v3879
    %v3900 = vadd.f32 %v3880, 1.0
    %v3901 = vadd.f32 %v3881, 1.0
    %v3902 = vadd.f32 %v3882, 1.0
    %v3903 = vadd.f32 %v3883, 1.0
    %v3904 = vadd.f32 %v3884, 1.0
    %v3905 = vadd.f32 %v3885, 1.0
    %v3906 = vadd.f32 %v3886, 1.0
    %v3907 = vadd.f32 %v3887, 1.0
    %v3908 = vadd.f32 %v3888, 1.0
    %v3909 = vadd.f32 %v3889, 1.0
    %v3910 = vadd.f32 %v3890, 1.0
    %v3911 = vadd.f32 %v3891, 1.0
    %v3912 = vadd.f32 %v3892, 1.0
    %v3913 = vadd.f32 %v3893, 1.0
    %v3914 = vadd.f32 %v3894, 1.0
    %v3915 = vadd.f32 %v3895, 1.0
    %v3916 = vadd.f32 %v3896, 1.0
    %v3917 = vadd.f32 %v3897, 1.0
    %v3918 = vadd.f32 %v3898, 1.0
    %v3919 = vadd.f32 %v3899, 1.0
    %v3920 = vmul.f32 %v3840, %v3900
    %v3921 = vmul.f32 %v3841, %v3901
    %v3922 = vmul.f32 %v3842, %v3902
    %v3923 = vmul.f32 %v3843, %v3903
    %v3924 = vmul.f32 %v3844, %v3904
    %v3925 = vmul.f32 %v3845, %v3905
    %v3926 = vmul.f32 %v3846, %v3906
    %v3927 = vmul.f32 %v3847, %v3907
    %v3928 = vmul.f32 %v3848, %v3908
    %v3929 = vmul.f32 %v3849, %v3909
    %v3930 = vmul.f32 %v3850, %v3910
    %v3931 = vmul.f32 %v3851, %v3911
    %v3932 = vmul.f32 %v3852, %v3912
    %v3933 = vmul.f32 %v3853, %v3913
    %v3934 = vmul.f32 %v3854, %v3914
    %v3935 = vmul.f32 %v3855, %v3915
    %v3936 = vmul.f32 %v3856, %v3916
    %v3937 = vmul.f32 %v3857, %v3917
    %v3938 = vmul.f32 %v3858, %v3918
    %v3939 = vmul.f32 %v3859, %v3919
    %s3940 = scalar_lea.vmem %s6, 256
    %v3941 = vld [vmem:[%s3940] sm:$0xff]
    %v3942 = vld [vmem:[%s3940 + $0x8] sm:$0xff]
    %v3943 = vld [vmem:[%s3940 + $0x10] sm:$0xff]
    %v3944 = vld [vmem:[%s3940 + $0x18] sm:$0xff]
    %v3945 = vld [vmem:[%s3940 + $0x20] sm:$0xff]
    %v3946 = vld [vmem:[%s3940 + $0x28] sm:$0xff]
    %v3947 = vld [vmem:[%s3940 + $0x30] sm:$0xff]
    %v3948 = vld [vmem:[%s3940 + $0x38] sm:$0xff]
    %v3949 = vld [vmem:[%s3940 + $0x40] sm:$0xff]
    %v3950 = vld [vmem:[%s3940 + $0x48] sm:$0xff]
    %v3951 = vld [vmem:[%s3940 + $0x50] sm:$0xff]
    %v3952 = vld [vmem:[%s3940 + $0x58] sm:$0xff]
    %v3953 = vld [vmem:[%s3940 + $0x60] sm:$0xff]
    %v3954 = vld [vmem:[%s3940 + $0x68] sm:$0xff]
    %v3955 = vld [vmem:[%s3940 + $0x70] sm:$0xff]
    %v3956 = vld [vmem:[%s3940 + $0x78] sm:$0xff]
    %v3957 = vld [vmem:[%s3940 + $0x80] sm:$0xff]
    %v3958 = vld [vmem:[%s3940 + $0x88] sm:$0xff]
    %v3959 = vld [vmem:[%s3940 + $0x90] sm:$0xff]
    %v3960 = vld [vmem:[%s3940 + $0x98] sm:$0xff]
    %v3961 = vld [vmem:[%s3940 + $0xa0] sm:$0xff]
    %v3962 = vld [vmem:[%s3940 + $0xa8] sm:$0xff]
    %v3963 = vld [vmem:[%s3940 + $0xb0] sm:$0xff]
    %v3964 = vld [vmem:[%s3940 + $0xb8] sm:$0xff]
    %v3965 = vld [vmem:[%s3940 + $0xc0] sm:$0xff]
    %v3966 = vld [vmem:[%s3940 + $0xc8] sm:$0xff]
    %v3967 = vld [vmem:[%s3940 + $0xd0] sm:$0xff]
    %v3968 = vld [vmem:[%s3940 + $0xd8] sm:$0xff]
    %v3969 = vld [vmem:[%s3940 + $0xe0] sm:$0xff]
    %v3970 = vld [vmem:[%s3940 + $0xe8] sm:$0xff]
    %v3971 = vld [vmem:[%s3940 + $0xf0] sm:$0xff]
    %v3972 = vld [vmem:[%s3940 + $0xf8] sm:$0xff]
    %3973 = vmatprep.subr.mxu0 0.0
    %3974 = vmatpush1.msra.mxu0 %v3941
    %3975 = vmatprep.subr.mxu0 0.0
    %3976 = vmatpush1.msra.mxu0 %v3942
    %3977 = vmatprep.subr.mxu0 0.0
    %3978 = vmatpush1.msra.mxu0 %v3943
    %3979 = vmatprep.subr.mxu0 0.0
    %3980 = vmatpush1.msra.mxu0 %v3944
    %3981 = vmatprep.subr.mxu0 0.0
    %3982 = vmatpush1.msra.mxu0 %v3945
    %3983 = vmatprep.subr.mxu0 0.0
    %3984 = vmatpush1.msra.mxu0 %v3946
    %3985 = vmatprep.subr.mxu0 0.0
    %3986 = vmatpush1.msra.mxu0 %v3947
    %3987 = vmatprep.subr.mxu0 0.0
    %3988 = vmatpush1.msra.mxu0 %v3948
    %3989 = vmatprep.subr.mxu0 0.0
    %3990 = vmatpush1.msra.mxu0 %v3949
    %3991 = vmatprep.subr.mxu0 0.0
    %3992 = vmatpush1.msra.mxu0 %v3950
    %3993 = vmatprep.subr.mxu0 0.0
    %3994 = vmatpush1.msra.mxu0 %v3951
    %3995 = vmatprep.subr.mxu0 0.0
    %3996 = vmatpush1.msra.mxu0 %v3952
    %3997 = vmatprep.subr.mxu0 0.0
    %3998 = vmatpush1.msra.mxu0 %v3953
    %3999 = vmatprep.subr.mxu0 0.0
    %4000 = vmatpush1.msra.mxu0 %v3954
    %4001 = vmatprep.subr.mxu0 0.0
    %4002 = vmatpush1.msra.mxu0 %v3955
    %4003 = vmatprep.subr.mxu0 0.0
    %4004 = vmatpush1.msra.mxu0 %v3956
    %4005 = vmatprep.subr.mxu0 0.0
    %4006 = vmatpush1.msra.mxu0 %v3957
    %4007 = vmatprep.subr.mxu0 0.0
    %4008 = vmatpush1.msra.mxu0 %v3958
    %4009 = vmatprep.subr.mxu0 0.0
    %4010 = vmatpush1.msra.mxu0 %v3959
    %4011 = vmatprep.subr.mxu0 0.0
    %4012 = vmatpush1.msra.mxu0 %v3960
    %4013 = vmatprep.subr.mxu0 0.0
    %4014 = vmatpush1.msra.mxu0 %v3961
    %4015 = vmatprep.subr.mxu0 0.0
    %4016 = vmatpush1.msra.mxu0 %v3962
    %4017 = vmatprep.subr.mxu0 0.0
    %4018 = vmatpush1.msra.mxu0 %v3963
    %4019 = vmatprep.subr.mxu0 0.0
    %4020 = vmatpush1.msra.mxu0 %v3964
    %4021 = vmatprep.subr.mxu0 0.0
    %4022 = vmatpush1.msra.mxu0 %v3965
    %4023 = vmatprep.subr.mxu0 0.0
    %4024 = vmatpush1.msra.mxu0 %v3966
    %4025 = vmatprep.subr.mxu0 0.0
    %4026 = vmatpush1.msra.mxu0 %v3967
    %4027 = vmatprep.subr.mxu0 0.0
    %4028 = vmatpush1.msra.mxu0 %v3968
    %4029 = vmatprep.subr.mxu0 0.0
    %4030 = vmatpush1.msra.mxu0 %v3969
    %4031 = vmatprep.subr.mxu0 0.0
    %4032 = vmatpush1.msra.mxu0 %v3970
    %4033 = vmatprep.subr.mxu0 0.0
    %4034 = vmatpush1.msra.mxu0 %v3971
    %4035 = vmatprep.subr.mxu0 0.0
    %4036 = vmatpush1.msra.mxu0 %v3972
    %4037 = vmatprep.mubr.f32.mxu0 %v3921
    %4038 = vmatmul.mubr.f32.gmra.mrb[0].mxu0 %v3920
    %v4039 = vpop.f32.mrb[0].mxu0
    %v4040 = vadd.f32 0.0, %v4039
    %v4041 = vpop.f32.mrb[0].mxu0
    %4042 = vmatprep.mubr.f32.mxu0 %v3923
    %4043 = vmatmul.mubr.f32.gmra.mrb[0].mxu0 %v3922
    %v4044 = vpop.f32.mrb[0].mxu0
    %v4045 = vadd.f32 0.0, %v4044
    %v4046 = vpop.f32.mrb[0].mxu0
    %4047 = vmatprep.mubr.f32.mxu0 %v3925
    %4048 = vmatmul.mubr.f32.gmra.mrb[0].mxu0 %v3924
    %v4049 = vpop.f32.mrb[0].mxu0
    %v4050 = vadd.f32 0.0, %v4049
    %v4051 = vpop.f32.mrb[0].mxu0
    %4052 = vmatprep.mubr.f32.mxu0 %v3927
    %4053 = vmatmul.mubr.f32.gmra.mrb[0].mxu0 %v3926
    %v4054 = vpop.f32.mrb[0].mxu0
    %v4055 = vadd.f32 0.0, %v4054
    %v4056 = vpop.f32.mrb[0].mxu0
    %4057 = vmatprep.mubr.f32.mxu0 %v3929
    %4058 = vmatmul.mubr.f32.gmra.mrb[0].mxu0 %v3928
    %v4059 = vpop.f32.mrb[0].mxu0
    %v4060 = vadd.f32 0.0, %v4059
    %v4061 = vpop.f32.mrb[0].mxu0
    %4062 = vmatprep.mubr.f32.mxu0 %v3931
    %4063 = vmatmul.mubr.f32.gmra.mrb[0].mxu0 %v3930
    %v4064 = vpop.f32.mrb[0].mxu0
    %v4065 = vadd.f32 0.0, %v4064
    %v4066 = vpop.f32.mrb[0].mxu0
    %4067 = vmatprep.mubr.f32.mxu0 %v3933
    %4068 = vmatmul.mubr.f32.gmra.mrb[0].mxu0 %v3932
    %v4069 = vpop.f32.mrb[0].mxu0
    %v4070 = vadd.f32 0.0, %v4069
    %v4071 = vpop.f32.mrb[0].mxu0
    %4072 = vmatprep.mubr.f32.mxu0 %v3935
    %4073 = vmatmul.mubr.f32.gmra.mrb[0].mxu0 %v3934
    %v4074 = vpop.f32.mrb[0].mxu0
    %v4075 = vadd.f32 0.0, %v4074
    %v4076 = vpop.f32.mrb[0].mxu0
    %4077 = vmatprep.mubr.f32.mxu0 %v3937
    %4078 = vmatmul.mubr.f32.gmra.mrb[0].mxu0 %v3936
    %v4079 = vpop.f32.mrb[0].mxu0
    %v4080 = vadd.f32 0.0, %v4079
    %v4081 = vpop.f32.mrb[0].mxu0
    %4082 = vmatprep.mubr.f32.mxu0 %v3939
    %4083 = vmatmul.mubr.f32.gmra.mrb[0].mxu0 %v3938
    %v4084 = vpop.f32.mrb[0].mxu0
    %v4085 = vadd.f32 0.0, %v4084
    %v4086 = vpop.f32.mrb[0].mxu0
    %4087 = vdwg.mxu0
    %v4088 = vadd.f32 %v3327, %v4040
    %v4089 = vadd.f32 %v3328, %v4045
    %v4090 = vadd.f32 %v3329, %v4050
    %v4091 = vadd.f32 %v3330, %v4055
    %v4092 = vadd.f32 %v3331, %v4060
    %v4093 = vadd.f32 %v3332, %v4065
    %v4094 = vadd.f32 %v3333, %v4070
    %v4095 = vadd.f32 %v3334, %v4075
    %v4096 = vadd.f32 %v3335, %v4080
    %v4097 = vadd.f32 %v3336, %v4085
    %v4098 = vlaneseq
    %v4099 = vshrl.u32 %v4098, 7
    %v4100 = vsub.s32 7, %v4099
    %v4101 = vrot.slane %v2101, %v4100
    %v4102 = vadd.f32 %v4088, %v4101
    %v4103 = vadd.f32 %v4089, %v4101
    %v4104 = vadd.f32 %v4090, %v4101
    %v4105 = vadd.f32 %v4091, %v4101
    %v4106 = vadd.f32 %v4092, %v4101
    %v4107 = vadd.f32 %v4093, %v4101
    %v4108 = vadd.f32 %v4094, %v4101
    %v4109 = vadd.f32 %v4095, %v4101
    %v4110 = vadd.f32 %v4096, %v4101
    %v4111 = vadd.f32 %v4097, %v4101
    %v4112 = vlaneseq
    %v4113 = vand.u32 %v4112, 127
    %v4114 = vlaneseq
    %v4115 = vshrl.u32 %v4114, 7
    %vm4116 = vcmp.eq.s32.totalorder %v4115, 0
    %s4117 = sld [smem:[#allocation3]]
    %v4118 = vstv %s4117
    %vm4119 = vcmp.eq.s32.totalorder %v4113, %v4118
    %vm4120 = vmand %vm4116, %vm4119
    %v4121 = vsel %vm4120, 1.0, 0.0
    %v4122 = vadd.f32 %v4121, 0.0
    %vm4123 = vcmp.eq.s32.totalorder %v4115, 1
    %s4124 = sld [smem:[#allocation3 + $0x1]]
    %v4125 = vstv %s4124
    %vm4126 = vcmp.eq.s32.totalorder %v4113, %v4125
    %vm4127 = vmand %vm4123, %vm4126
    %v4128 = vsel %vm4127, 1.0, 0.0
    %v4129 = vadd.f32 %v4122, %v4128
    %vm4130 = vcmask 654336
    %v4132 = vsel %vm4130, %v4129, 0
    %4134 = vmatprep.subr.mxu0 0.0
    %4135 = vmatpush1.msra.mxu0 %v4102
    %4136 = vmatprep.subr.mxu0 0.0
    %4137 = vmatpush1.msra.mxu0 %v4103
    %4138 = vmatprep.subr.mxu0 0.0
    %4139 = vmatpush1.msra.mxu0 %v4104
    %4140 = vmatprep.subr.mxu0 0.0
    %4141 = vmatpush1.msra.mxu0 %v4105
    %4142 = vmatprep.subr.mxu0 0.0
    %4143 = vmatpush1.msra.mxu0 %v4106
    %4144 = vmatprep.subr.mxu0 0.0
    %4145 = vmatpush1.msra.mxu0 %v4107
    %4146 = vmatprep.subr.mxu0 0.0
    %4147 = vmatpush1.msra.mxu0 %v4108
    %4148 = vmatprep.subr.mxu0 0.0
    %4149 = vmatpush1.msra.mxu0 %v4109
    %4150 = vmatprep.subr.mxu0 0.0
    %4151 = vmatpush1.msra.mxu0 %v4110
    %4152 = vmatprep.subr.mxu0 0.0
    %4153 = vmatpush1.msra.mxu0 %v4111
    %4154 = vmatprep.subr.mxu0 0.0
    %4155 = vmatpush1.msra.mxu0 0.0
    %4156 = vmatprep.subr.mxu0 0.0
    %4157 = vmatpush1.msra.mxu0 0.0
    %4158 = vmatprep.subr.mxu0 0.0
    %4159 = vmatpush1.msra.mxu0 0.0
    %4160 = vmatprep.subr.mxu0 0.0
    %4161 = vmatpush1.msra.mxu0 0.0
    %4162 = vmatprep.subr.mxu0 0.0
    %4163 = vmatpush1.msra.mxu0 0.0
    %4164 = vmatprep.subr.mxu0 0.0
    %4165 = vmatpush1.msra.mxu0 0.0
    %4166 = vmatprep.subr.mxu0 0.0
    %4167 = vmatpush1.msra.mxu0 0.0
    %4168 = vmatprep.subr.mxu0 0.0
    %4169 = vmatpush1.msra.mxu0 0.0
    %4170 = vmatprep.subr.mxu0 0.0
    %4171 = vmatpush1.msra.mxu0 0.0
    %4172 = vmatprep.subr.mxu0 0.0
    %4173 = vmatpush1.msra.mxu0 0.0
    %4174 = vmatprep.subr.mxu0 0.0
    %4175 = vmatpush1.msra.mxu0 0.0
    %4176 = vmatprep.subr.mxu0 0.0
    %4177 = vmatpush1.msra.mxu0 0.0
    %4178 = vmatprep.subr.mxu0 0.0
    %4179 = vmatpush1.msra.mxu0 0.0
    %4180 = vmatprep.subr.mxu0 0.0
    %4181 = vmatpush1.msra.mxu0 0.0
    %4182 = vmatprep.subr.mxu0 0.0
    %4183 = vmatpush1.msra.mxu0 0.0
    %4184 = vmatprep.subr.mxu0 0.0
    %4185 = vmatpush1.msra.mxu0 0.0
    %4186 = vmatprep.subr.mxu0 0.0
    %4187 = vmatpush1.msra.mxu0 0.0
    %4188 = vmatprep.subr.mxu0 0.0
    %4189 = vmatpush1.msra.mxu0 0.0
    %4190 = vmatprep.subr.mxu0 0.0
    %4191 = vmatpush1.msra.mxu0 0.0
    %4192 = vmatprep.subr.mxu0 0.0
    %4193 = vmatpush1.msra.mxu0 0.0
    %4194 = vmatprep.subr.mxu0 0.0
    %4195 = vmatpush1.msra.mxu0 0.0
    %4196 = vmatprep.subr.mxu0 0.0
    %4197 = vmatpush1.msra.mxu0 0.0
    %4198 = vmatprep.mubr.f32.mxu0 0.0
    %4199 = vmatmul.mubr.f32.gmra.mrb[0].mxu0 %v4132
    %v4200 = vpop.f32.mrb[0].mxu0
    %v4201 = vadd.f32 0.0, %v4200
    %v4202 = vpop.f32.mrb[0].mxu0
    %4203 = vdwg.mxu0
    %4205 = vrot.lane.b32.xlu0 %v4201, 32
    %v4206 = vpop.permute.xlu0 %4205
    %v4208 = vsel %vm4123, %v4201, %v4206
    %4210 = vrot.lane.b32.xlu0 %v4208, 96
    %v4211 = vpop.permute.xlu0 %4210
    %vm4213 = vcmask 254976
    %v4214 = vsel %vm4213, %v4211, 0.0
    %4215 = vadd.xlane.f32.xlu0 %v4214
    %v4216 = vpop.xlane.xlu0 %4215
    %v4217 = vrcp.pop 32.0
    %v4218 = vmul.f32 %v4216, %v4217
    %v4219 = vsub.f32 %v4208, %v4218
    %v4220 = vmul.f32 %v4219, %v4219
    %4222 = vrot.lane.b32.xlu0 %v4220, 96
    %v4223 = vpop.permute.xlu0 %4222
    %v4225 = vsel %vm4213, %v4223, 0.0
    %4226 = vadd.xlane.f32.xlu0 %v4225
    %v4227 = vpop.xlane.xlu0 %4226
    %v4228 = vmul.f32 %v4227, %v4217
    %v4229 = vadd.f32 %v4228, 1e-05
    %v4230 = vrsqrt.pop %v4229
    %v4231 = vmul.f32 %v4219, %v4230
    %v4232 = vld [vmem:[%s10] sm:$0x1]
    %v4233 = vlaneseq
    %v4234 = vshrl.u32 %v4233, 7
    %v4235 = vsub.s32 0, %v4234
    %v4236 = vrot.slane %v4232, %v4235
    %4238 = vrot.lane.b32.xlu0 %v4236, 32
    %v4239 = vpop.permute.xlu0 %4238
    %v4241 = vmul.f32 %v4231, %v4239
    %v4242 = vld [vmem:[%s10 + $0x1] sm:$0x1]
    %v4243 = vlaneseq
    %v4244 = vshrl.u32 %v4243, 7
    %v4245 = vsub.s32 0, %v4244
    %v4246 = vrot.slane %v4242, %v4245
    %4248 = vrot.lane.b32.xlu0 %v4246, 32
    %v4249 = vpop.permute.xlu0 %4248
    %v4251 = vadd.f32 %v4241, %v4249
    %v4252 = vld [vmem:[%s11] sm:$0xff]
    %v4253 = vld [vmem:[%s11 + $0x8] sm:$0xff]
    %v4254 = vld [vmem:[%s11 + $0x10] sm:$0xff]
    %v4255 = vld [vmem:[%s11 + $0x18] sm:$0xff]
    %4257 = vrot.lane.b32.xlu0 %v4251, 96
    %v4258 = vpop.permute.xlu0 %4257
    %vm4259 = vcmask 261120
    %v4260 = vsel %vm4259, %v4258, 0
    %4262 = vmatprep.subr.mxu0 0.0
    %4263 = vmatpush1.msra.mxu0 %v4252
    %4264 = vmatprep.subr.mxu0 0.0
    %4265 = vmatpush1.msra.mxu0 %v4253
    %4266 = vmatprep.subr.mxu0 0.0
    %4267 = vmatpush1.msra.mxu0 %v4254
    %4268 = vmatprep.subr.mxu0 0.0
    %4269 = vmatpush1.msra.mxu0 %v4255
    %4270 = vmatprep.subr.mxu0 0.0
    %4271 = vmatpush1.msra.mxu0 0.0
    %4272 = vmatprep.subr.mxu0 0.0
    %4273 = vmatpush1.msra.mxu0 0.0
    %4274 = vmatprep.subr.mxu0 0.0
    %4275 = vmatpush1.msra.mxu0 0.0
    %4276 = vmatprep.subr.mxu0 0.0
    %4277 = vmatpush1.msra.mxu0 0.0
    %4278 = vmatprep.subr.mxu0 0.0
    %4279 = vmatpush1.msra.mxu0 0.0
    %4280 = vmatprep.subr.mxu0 0.0
    %4281 = vmatpush1.msra.mxu0 0.0
    %4282 = vmatprep.subr.mxu0 0.0
    %4283 = vmatpush1.msra.mxu0 0.0
    %4284 = vmatprep.subr.mxu0 0.0
    %4285 = vmatpush1.msra.mxu0 0.0
    %4286 = vmatprep.subr.mxu0 0.0
    %4287 = vmatpush1.msra.mxu0 0.0
    %4288 = vmatprep.subr.mxu0 0.0
    %4289 = vmatpush1.msra.mxu0 0.0
    %4290 = vmatprep.subr.mxu0 0.0
    %4291 = vmatpush1.msra.mxu0 0.0
    %4292 = vmatprep.subr.mxu0 0.0
    %4293 = vmatpush1.msra.mxu0 0.0
    %4294 = vmatprep.subr.mxu0 0.0
    %4295 = vmatpush1.msra.mxu0 0.0
    %4296 = vmatprep.subr.mxu0 0.0
    %4297 = vmatpush1.msra.mxu0 0.0
    %4298 = vmatprep.subr.mxu0 0.0
    %4299 = vmatpush1.msra.mxu0 0.0
    %4300 = vmatprep.subr.mxu0 0.0
    %4301 = vmatpush1.msra.mxu0 0.0
    %4302 = vmatprep.subr.mxu0 0.0
    %4303 = vmatpush1.msra.mxu0 0.0
    %4304 = vmatprep.subr.mxu0 0.0
    %4305 = vmatpush1.msra.mxu0 0.0
    %4306 = vmatprep.subr.mxu0 0.0
    %4307 = vmatpush1.msra.mxu0 0.0
    %4308 = vmatprep.subr.mxu0 0.0
    %4309 = vmatpush1.msra.mxu0 0.0
    %4310 = vmatprep.subr.mxu0 0.0
    %4311 = vmatpush1.msra.mxu0 0.0
    %4312 = vmatprep.subr.mxu0 0.0
    %4313 = vmatpush1.msra.mxu0 0.0
    %4314 = vmatprep.subr.mxu0 0.0
    %4315 = vmatpush1.msra.mxu0 0.0
    %4316 = vmatprep.subr.mxu0 0.0
    %4317 = vmatpush1.msra.mxu0 0.0
    %4318 = vmatprep.subr.mxu0 0.0
    %4319 = vmatpush1.msra.mxu0 0.0
    %4320 = vmatprep.subr.mxu0 0.0
    %4321 = vmatpush1.msra.mxu0 0.0
    %4322 = vmatprep.subr.mxu0 0.0
    %4323 = vmatpush1.msra.mxu0 0.0
    %4324 = vmatprep.subr.mxu0 0.0
    %4325 = vmatpush1.msra.mxu0 0.0
    %4326 = vmatprep.mubr.f32.mxu0 0.0
    %4327 = vmatmul.mubr.f32.gmra.mrb[0].mxu0 %v4260
    %v4328 = vpop.f32.mrb[0].mxu0
    %v4329 = vadd.f32 0.0, %v4328
    %v4330 = vpop.f32.mrb[0].mxu0
    %4331 = vdwg.mxu0
    %vm4332 = vcmask 517120
    %4333 = vst.msk [vmem:[#allocation4] sm:$0x3] %vm4332, %v4329
    // Predicated region
    $region46: #{text_encoder_forward.1} parent=1 // pred_check
      _
    $region47: #{text_encoder_forward.1} parent=1 // pred_check_branch
      %4335 = sbr.rel (0) target = $region49
    $region48: #{text_encoder_forward.1} parent=1 // pred_region
      %s4337 = ssub.s32 32, 32
      %4338 = vsyncadd [#allocation5], %s4337
      %s4340 = sshll.u32 [#allocation4], 4
      %s4341 = int_to_ptr.vmem [resolvable:$true] %s4340
      %4343 = dma.vmem_to_hbm [thread:$0]  %s4341, 32, %s12, [#allocation5]
    $region49: #{text_encoder_forward.1} parent=1 // pred_fallthru
      _
    // Predicated region
    $region50: #{text_encoder_forward.1} parent=1 // pred_check
      _
    $region51: #{text_encoder_forward.1} parent=1 // pred_check_branch
      %4345 = sbr.rel (0) target = $region53
    $region52: #{text_encoder_forward.1} parent=1 // pred_region
      %4346 = dma.done [#allocation5], 32
    $region53: #{text_encoder_forward.1} parent=1 // pred_fallthru
      _
    %4347 = vsyncpa [#allocation5], 1

</llo_original>
